<compile_context>
chip_gen: v5e
topology: v5e:2x2
jax: 0.10.0
libtpu: 0.0.40
codegen_flags: <defaults>
</compile_context>

<pallas_src>
import functools

import jax
import jax.numpy as jnp
import numpy as np
from jax.experimental import pallas as pl
from jax.experimental.pallas import tpu as pltpu


def _layernorm(x, gamma, beta, eps):
    # PyTorch LayerNorm: biased variance over the last dim (f32 throughout).
    mean = jnp.mean(x, axis=-1, keepdims=True)
    var = jnp.mean((x - mean) ** 2, axis=-1, keepdims=True)
    return (x - mean) * jax.lax.rsqrt(var + eps) * gamma + beta


def decoder_layer_kernel(
    tgt_ref, mem_ref,
    wq_ref, wk_ref, wv_ref, bq_ref, bk_ref, bv_ref,
    wo_ref, bo_ref,
    w1_ref, b1_ref, w2_ref, b2_ref,
    g1_ref, be1_ref, g2_ref, be2_ref, g3_ref, be3_ref,
    o_ref,
    ctx_sc,
    *, nhead, eps, f_chunk, approx_recip):
    NB, L, E = tgt_ref.shape          # block of NB batch elements
    S = mem_ref.shape[1]
    hd = E // nhead
    mm = wq_ref.dtype                 # matmul compute dtype (f32 or bf16)

    # tgt = tgt + dropout1(tgt)  (dropout == identity at inference) ; norm1
    x = tgt_ref[...].astype(jnp.float32)           # (NB, L, E)
    x = x + x
    x = _layernorm(x, g1_ref[...], be1_ref[...], eps)

    # Flatten to row-major slabs for the full-width projections.
    x2 = x.reshape(NB * L, E)                      # f32, also the attention residual
    x2_mm = x2.astype(mm)
    m2_mm = mem_ref[...].astype(jnp.float32).reshape(NB * S, E).astype(mm)

    # ---- fused, full-lane-width Q/K/V projections (scale folded into wq/bq) ----
    q = jnp.dot(x2_mm, wq_ref[...], preferred_element_type=jnp.float32) + bq_ref[...]
    k = jnp.dot(m2_mm, wk_ref[...], preferred_element_type=jnp.float32) + bk_ref[...]
    v = jnp.dot(m2_mm, wv_ref[...], preferred_element_type=jnp.float32) + bv_ref[...]
    q3 = q.reshape(NB, L, E).astype(mm)
    k3 = k.reshape(NB, S, E).astype(mm)
    v3 = v.reshape(NB, S, E).astype(mm)

    # ---- per-head attention, batched over the batch dim; contexts go to scratch ----
    # (static Python loop; each iteration's temporaries die at the scratch store)
    for h in range(nhead):
        lo = h * hd
        qh = q3[:, :, lo:lo + hd]                  # (NB, L, hd)
        kh = k3[:, :, lo:lo + hd]                  # (NB, S, hd)
        vh = v3[:, :, lo:lo + hd]
        s = jnp.einsum("bld,bsd->bls", qh, kh,
                       preferred_element_type=jnp.float32)       # (NB, L, S) f32
        s = s - jnp.max(s, axis=-1, keepdims=True)
        p = jnp.exp(s)
        p = p * pl.reciprocal(jnp.sum(p, axis=-1, keepdims=True), approx=approx_recip)
        oh = jnp.einsum("bls,bsd->bld", p.astype(mm), vh,
                        preferred_element_type=jnp.float32)      # (NB, L, hd)
        ctx_sc[h] = oh.astype(mm)                  # free leading-dim store

    # ---- out-projection: single batched matmul over heads, then sum over H ----
    ctx = ctx_sc[...].reshape(nhead, NB * L, hd)                 # one cheap merge
    per = jnp.einsum("hmd,hde->hme", ctx, wo_ref[...],
                     preferred_element_type=jnp.float32)         # (H, NB*L, E)
    attn = jnp.sum(per, axis=0) + bo_ref[...]                    # f32

    # tgt = tgt + dropout2(tgt2); norm2
    y = x2 + attn
    y = _layernorm(y, g2_ref[...], be2_ref[...], eps)
    y_mm = y.astype(mm)

    # feed-forward: linear2(dropout(relu(linear1(y)))), chunked over F
    F = w1_ref.shape[1]
    ff = jnp.zeros((NB * L, E), jnp.float32)
    for f0 in range(0, F, f_chunk):
        f1 = min(f0 + f_chunk, F)
        h1 = jnp.dot(y_mm, w1_ref[:, f0:f1],
                     preferred_element_type=jnp.float32) + b1_ref[:, f0:f1]
        h1 = jnp.maximum(h1, 0.0)
        ff = ff + jnp.dot(h1.astype(mm), w2_ref[f0:f1, :],
                          preferred_element_type=jnp.float32)
    ff = ff + b2_ref[...]

    # tgt = tgt + dropout3(tgt2); norm3
    z = y + ff
    z = _layernorm(z, g3_ref[...], be3_ref[...], eps)
    o_ref[...] = z.reshape(NB, L, E).astype(o_ref.dtype)


def prepare_decoder_params(params, *, nhead, matmul_dtype=jnp.bfloat16):
    """One-time host-side weight layout work (call at model init, not per forward)."""
    E = params["in_proj_weight"].shape[1]
    hd = E // nhead
    scale = 1.0 / float(np.sqrt(hd))
    mm = matmul_dtype
    w_in = params["in_proj_weight"]                # (3E, E), rows = output features
    b_in = params["in_proj_bias"]                  # (3E,)
    prep = dict(
        nhead=nhead,
        # softmax scale folded into BOTH wq and bq (PyTorch scales q after bias add)
        wq=(w_in[0:E].T * scale).astype(mm),       # (E, E), for x @ wq
        wk=w_in[E:2 * E].T.astype(mm),
        wv=w_in[2 * E:3 * E].T.astype(mm),
        bq=(b_in[0:E] * scale).reshape(1, E).astype(jnp.float32),
        bk=b_in[E:2 * E].reshape(1, E).astype(jnp.float32),
        bv=b_in[2 * E:3 * E].reshape(1, E).astype(jnp.float32),
        wo=params["out_proj_weight"].T.reshape(nhead, hd, E).astype(mm),   # (H, hd, E)
        bo=params["out_proj_bias"].reshape(1, E).astype(jnp.float32),
        w1=params["w1"].T.astype(mm),              # (E, F)
        b1=params["b1"].reshape(1, -1).astype(jnp.float32),
        w2=params["w2"].T.astype(mm),              # (F, E)
        b2=params["b2"].reshape(1, -1).astype(jnp.float32),
    )
    for k in ("g1", "be1", "g2", "be2", "g3", "be3"):
        prep[k] = params[k].reshape(1, E).astype(jnp.float32)
    return prep


def transformer_decoder_layer(tgt, memory, prep, *, eps=1e-5, block_b=None,
                              f_chunk=512, approx_recip=True,
                              single_buffer_weights=True):
    """tgt: (L, B, E), memory: (S, B, E) — PyTorch (seq, batch, embed) layout."""
    nhead = prep["nhead"]
    L, B, E = tgt.shape
    S = memory.shape[0]
    hd = E // nhead

    # Batch-major for the kernel (batch is the dot_general batch dim there).
    tgt_b = jnp.transpose(tgt, (1, 0, 2))     # (B, L, E)
    mem_b = jnp.transpose(memory, (1, 0, 2))  # (B, S, E)

    # Batch-group tiling: prefer >= 4 grid steps (DMA pipelining + megacore balance),
    # cap the group size at 4 to bound per-step VMEM (v7x: 64 MiB physical).
    if block_b is None:
        block_b = max(1, min(4, -(-B // 4)))
    Bp = -(-B // block_b) * block_b
    if Bp != B:
        pad = Bp - B
        tgt_b = jnp.pad(tgt_b, ((0, pad), (0, 0), (0, 0)))
        mem_b = jnp.pad(mem_b, ((0, pad), (0, 0), (0, 0)))

    mm_dtype = prep["wq"].dtype
    weight_args = (prep["wq"], prep["wk"], prep["wv"], prep["bq"], prep["bk"],
                   prep["bv"], prep["wo"], prep["bo"], prep["w1"], prep["b1"],
                   prep["w2"], prep["b2"], prep["g1"], prep["be1"], prep["g2"],
                   prep["be2"], prep["g3"], prep["be3"])

    fc = int(min(f_chunk, prep["w1"].shape[1]))
    kernel = functools.partial(decoder_layer_kernel, nhead=nhead, eps=eps,
                               f_chunk=fc, approx_recip=approx_recip)

    def run(weight_pipeline_mode):
        def whole(shape):
            n = len(shape)
            idx = lambda g, _n=n: (0,) * _n
            if weight_pipeline_mode is None:
                return pl.BlockSpec(shape, idx)
            return pl.BlockSpec(shape, idx, pipeline_mode=weight_pipeline_mode)

        in_specs = [
            pl.BlockSpec((block_b, L, E), lambda g: (g, 0, 0)),   # per-group tgt tile
            pl.BlockSpec((block_b, S, E), lambda g: (g, 0, 0)),   # per-group mem tile
        ] + [whole(a.shape) for a in weight_args]                 # resident parameters

        return pl.pallas_call(
            kernel,
            out_shape=jax.ShapeDtypeStruct((Bp, L, E), tgt.dtype),
            grid=(Bp // block_b,),
            in_specs=in_specs,
            out_specs=pl.BlockSpec((block_b, L, E), lambda g: (g, 0, 0)),
            scratch_shapes=[pltpu.VMEM((nhead, block_b, L, hd), mm_dtype)],
            compiler_params=pltpu.CompilerParams(
                dimension_semantics=("parallel",),
                vmem_limit_bytes=64 * 1024 * 1024),
        )(tgt_b, mem_b, *weight_args)

    if single_buffer_weights:
        try:
            # Constant-index weight blocks don't need double buffering (halves
            # weight VMEM — matters on v7x's 64 MiB).
            out = run(pl.Buffered(1))
        except Exception:
            out = run(None)   # fallback if pipeline_mode/Buffered(1) is unsupported
    else:
        out = run(None)

    out = out[:B]
    return jnp.transpose(out, (1, 0, 2))   # back to (L, B, E)


# ---------------- pure-JAX reference (mirrors PyTorch eval-mode forward) ----------------
def reference_forward(tgt, memory, params, *, nhead, eps=1e-5):
    E = tgt.shape[-1]
    hd = E // nhead

    def ln(x, g, b):
        m = jnp.mean(x, -1, keepdims=True)
        v = jnp.mean((x - m) ** 2, -1, keepdims=True)
        return (x - m) / jnp.sqrt(v + eps) * g + b

    x = tgt + tgt
    x = ln(x, params["g1"], params["be1"])

    wq, wk, wv = jnp.split(params["in_proj_weight"], 3, axis=0)
    bq, bk, bv = jnp.split(params["in_proj_bias"], 3, axis=0)
    q = x @ wq.T + bq                 # (L, B, E)
    k = memory @ wk.T + bk            # (S, B, E)
    v = memory @ wv.T + bv
    L, B, _ = q.shape
    S = k.shape[0]
    qh = q.reshape(L, B, nhead, hd).transpose(1, 2, 0, 3)   # (B, H, L, hd)
    kh = k.reshape(S, B, nhead, hd).transpose(1, 2, 0, 3)
    vh = v.reshape(S, B, nhead, hd).transpose(1, 2, 0, 3)
    scores = jnp.einsum("bhld,bhsd->bhls", qh, kh) / jnp.sqrt(hd).astype(q.dtype)
    p = jax.nn.softmax(scores, axis=-1)
    o = jnp.einsum("bhls,bhsd->bhld", p, vh)                # (B, H, L, hd)
    o = o.transpose(2, 0, 1, 3).reshape(L, B, E)
    attn = o @ params["out_proj_weight"].T + params["out_proj_bias"]

    x = x + attn
    x = ln(x, params["g2"], params["be2"])
    ff = jnp.maximum(x @ params["w1"].T + params["b1"], 0.0) @ params["w2"].T + params["b2"]
    x = x + ff
    x = ln(x, params["g3"], params["be3"])
    return x


if __name__ == "__main__":
    # Small shapes consistent with the module's decoder([K, bs, d], [S, bs, d]) usage.
    L, S, B = 8, 16, 4          # num queries, memory length, batch
    E, NHEAD, F = 32, 4, 64     # d_model, nhead, dim_feedforward

    key = jax.random.PRNGKey(0)
    ks = jax.random.split(key, 12)
    params = {
        "in_proj_weight": 0.05 * jax.random.normal(ks[0], (3 * E, E), jnp.float32),
        "in_proj_bias": 0.05 * jax.random.normal(ks[1], (3 * E,), jnp.float32),
        "out_proj_weight": 0.05 * jax.random.normal(ks[2], (E, E), jnp.float32),
        "out_proj_bias": 0.05 * jax.random.normal(ks[3], (E,), jnp.float32),
        "w1": 0.05 * jax.random.normal(ks[4], (F, E), jnp.float32),
        "b1": 0.05 * jax.random.normal(ks[5], (F,), jnp.float32),
        "w2": 0.05 * jax.random.normal(ks[6], (E, F), jnp.float32),
        "b2": 0.05 * jax.random.normal(ks[7], (E,), jnp.float32),
        "g1": jnp.ones((E,), jnp.float32) + 0.01 * jax.random.normal(ks[8], (E,), jnp.float32),
        "be1": 0.01 * jax.random.normal(ks[9], (E,), jnp.float32),
        "g2": jnp.ones((E,), jnp.float32),
        "be2": jnp.zeros((E,), jnp.float32),
        "g3": jnp.ones((E,), jnp.float32) + 0.01 * jax.random.normal(ks[10], (E,), jnp.float32),
        "be3": 0.01 * jax.random.normal(ks[11], (E,), jnp.float32),
    }

    kin = jax.random.split(jax.random.PRNGKey(1), 2)
    tgt = jax.random.normal(kin[0], (L, B, E), jnp.float32)
    memory = jax.random.normal(kin[1], (S, B, E), jnp.float32)

    ref = reference_forward(tgt, memory, params, nhead=NHEAD, eps=1e-5)

    # 1) f32 matmuls + exact reciprocal: tight numerical check against the reference.
    prep_f32 = prepare_decoder_params(params, nhead=NHEAD, matmul_dtype=jnp.float32)
    out_f32 = transformer_decoder_layer(tgt, memory, prep_f32, eps=1e-5,
                                        approx_recip=False)
    out_f32 = jax.block_until_ready(out_f32)
    np.testing.assert_allclose(np.asarray(out_f32), np.asarray(ref),
                               rtol=2e-4, atol=2e-4)

    # 2) production config: bf16 MXU matmuls + approx (EUP) reciprocal, f32 LN/softmax/
    #    accumulation — validated at a re-baselined bf16 tolerance.
    prep_bf16 = prepare_decoder_params(params, nhead=NHEAD, matmul_dtype=jnp.bfloat16)
    out_bf16 = transformer_decoder_layer(tgt, memory, prep_bf16, eps=1e-5,
                                         approx_recip=True)
    out_bf16 = jax.block_until_ready(out_bf16)
    np.testing.assert_allclose(np.asarray(out_bf16), np.asarray(ref),
                               rtol=5e-2, atol=5e-2)

    print("KERNEL_OK")
</pallas_src>

<mosaic_0001>
module attributes {stable_mosaic.version = 11 : i64} {
  func.func @decoder_layer_kernel(%arg0: i32, %arg1: memref<1x8x32xf32, #tpu.memory_space<vmem>>, %arg2: memref<1x16x32xf32, #tpu.memory_space<vmem>>, %arg3: memref<32x32xf32, #tpu.memory_space<vmem>>, %arg4: memref<32x32xf32, #tpu.memory_space<vmem>>, %arg5: memref<32x32xf32, #tpu.memory_space<vmem>>, %arg6: memref<1x32xf32, #tpu.memory_space<vmem>>, %arg7: memref<1x32xf32, #tpu.memory_space<vmem>>, %arg8: memref<1x32xf32, #tpu.memory_space<vmem>>, %arg9: memref<4x8x32xf32, #tpu.memory_space<vmem>>, %arg10: memref<1x32xf32, #tpu.memory_space<vmem>>, %arg11: memref<32x64xf32, #tpu.memory_space<vmem>>, %arg12: memref<1x64xf32, #tpu.memory_space<vmem>>, %arg13: memref<64x32xf32, #tpu.memory_space<vmem>>, %arg14: memref<1x32xf32, #tpu.memory_space<vmem>>, %arg15: memref<1x32xf32, #tpu.memory_space<vmem>>, %arg16: memref<1x32xf32, #tpu.memory_space<vmem>>, %arg17: memref<1x32xf32, #tpu.memory_space<vmem>>, %arg18: memref<1x32xf32, #tpu.memory_space<vmem>>, %arg19: memref<1x32xf32, #tpu.memory_space<vmem>>, %arg20: memref<1x32xf32, #tpu.memory_space<vmem>>, %arg21: memref<1x8x32xf32, #tpu.memory_space<vmem>>, %arg22: memref<4x1x8x8xf32, #tpu.memory_space<vmem>>) attributes {dimension_semantics = [#tpu.dimension_semantics<parallel>], iteration_bounds = array<i64: 4>, scalar_prefetch = 0 : i64, scratch_operands = 1 : i64, tpu.core_type = #tpu.core_type<tc>, window_params = [{transform_indices = @transform_0, window_bounds = array<i64: 1, 8, 32>}, {transform_indices = @transform_1, window_bounds = array<i64: 1, 16, 32>}, {pipeline_mode = #tpu.pipeline_mode<synchronous>, transform_indices = @transform_2, window_bounds = array<i64: 32, 32>}, {pipeline_mode = #tpu.pipeline_mode<synchronous>, transform_indices = @transform_3, window_bounds = array<i64: 32, 32>}, {pipeline_mode = #tpu.pipeline_mode<synchronous>, transform_indices = @transform_4, window_bounds = array<i64: 32, 32>}, {pipeline_mode = #tpu.pipeline_mode<synchronous>, transform_indices = @transform_5, window_bounds = array<i64: 1, 32>}, {pipeline_mode = #tpu.pipeline_mode<synchronous>, transform_indices = @transform_6, window_bounds = array<i64: 1, 32>}, {pipeline_mode = #tpu.pipeline_mode<synchronous>, transform_indices = @transform_7, window_bounds = array<i64: 1, 32>}, {pipeline_mode = #tpu.pipeline_mode<synchronous>, transform_indices = @transform_8, window_bounds = array<i64: 4, 8, 32>}, {pipeline_mode = #tpu.pipeline_mode<synchronous>, transform_indices = @transform_9, window_bounds = array<i64: 1, 32>}, {pipeline_mode = #tpu.pipeline_mode<synchronous>, transform_indices = @transform_10, window_bounds = array<i64: 32, 64>}, {pipeline_mode = #tpu.pipeline_mode<synchronous>, transform_indices = @transform_11, window_bounds = array<i64: 1, 64>}, {pipeline_mode = #tpu.pipeline_mode<synchronous>, transform_indices = @transform_12, window_bounds = array<i64: 64, 32>}, {pipeline_mode = #tpu.pipeline_mode<synchronous>, transform_indices = @transform_13, window_bounds = array<i64: 1, 32>}, {pipeline_mode = #tpu.pipeline_mode<synchronous>, transform_indices = @transform_14, window_bounds = array<i64: 1, 32>}, {pipeline_mode = #tpu.pipeline_mode<synchronous>, transform_indices = @transform_15, window_bounds = array<i64: 1, 32>}, {pipeline_mode = #tpu.pipeline_mode<synchronous>, transform_indices = @transform_16, window_bounds = array<i64: 1, 32>}, {pipeline_mode = #tpu.pipeline_mode<synchronous>, transform_indices = @transform_17, window_bounds = array<i64: 1, 32>}, {pipeline_mode = #tpu.pipeline_mode<synchronous>, transform_indices = @transform_18, window_bounds = array<i64: 1, 32>}, {pipeline_mode = #tpu.pipeline_mode<synchronous>, transform_indices = @transform_19, window_bounds = array<i64: 1, 32>}, {transform_indices = @transform_20, window_bounds = array<i64: 1, 8, 32>}]} {
    %c0 = arith.constant 0 : index
    %c0_0 = arith.constant 0 : index
    %c0_1 = arith.constant 0 : index
    %0 = vector.load %arg1[%c0, %c0_0, %c0_1] : memref<1x8x32xf32, #tpu.memory_space<vmem>>, vector<1x8x32xf32>
    %1 = arith.addf %0, %0 : vector<1x8x32xf32>
    %c0_2 = arith.constant 0 : index
    %c0_3 = arith.constant 0 : index
    %2 = vector.load %arg15[%c0_2, %c0_3] : memref<1x32xf32, #tpu.memory_space<vmem>>, vector<1x32xf32>
    %c0_4 = arith.constant 0 : index
    %c0_5 = arith.constant 0 : index
    %3 = vector.load %arg16[%c0_4, %c0_5] : memref<1x32xf32, #tpu.memory_space<vmem>>, vector<1x32xf32>
    %cst = arith.constant dense<0.000000e+00> : vector<1x8xf32>
    %4 = vector.multi_reduction <add>, %1, %cst [2] : vector<1x8x32xf32> to vector<1x8xf32>
    %5 = vector.shape_cast %4 : vector<1x8xf32> to vector<1x8x1xf32>
    %cst_6 = arith.constant 3.200000e+01 : f32
    %6 = vector.broadcast %cst_6 : f32 to vector<1x8x1xf32>
    %7 = arith.divf %5, %6 : vector<1x8x1xf32>
    %8 = vector.broadcast %7 : vector<1x8x1xf32> to vector<1x8x32xf32>
    %9 = arith.subf %1, %8 : vector<1x8x32xf32>
    %10 = arith.mulf %9, %9 : vector<1x8x32xf32>
    %cst_7 = arith.constant dense<0.000000e+00> : vector<1x8xf32>
    %11 = vector.multi_reduction <add>, %10, %cst_7 [2] : vector<1x8x32xf32> to vector<1x8xf32>
    %12 = vector.shape_cast %11 : vector<1x8xf32> to vector<1x8x1xf32>
    %cst_8 = arith.constant 3.200000e+01 : f32
    %13 = vector.broadcast %cst_8 : f32 to vector<1x8x1xf32>
    %14 = arith.divf %12, %13 : vector<1x8x1xf32>
    %15 = vector.broadcast %7 : vector<1x8x1xf32> to vector<1x8x32xf32>
    %16 = arith.subf %1, %15 : vector<1x8x32xf32>
    %cst_9 = arith.constant 9.99999974E-6 : f32
    %17 = vector.broadcast %cst_9 : f32 to vector<1x8x1xf32>
    %18 = arith.addf %14, %17 : vector<1x8x1xf32>
    %19 = math.rsqrt %18 : vector<1x8x1xf32>
    %20 = vector.broadcast %19 : vector<1x8x1xf32> to vector<1x8x32xf32>
    %21 = arith.mulf %16, %20 : vector<1x8x32xf32>
    %22 = vector.shape_cast %2 : vector<1x32xf32> to vector<1x1x32xf32>
    %23 = vector.broadcast %22 : vector<1x1x32xf32> to vector<1x8x32xf32>
    %24 = arith.mulf %21, %23 : vector<1x8x32xf32>
    %25 = vector.shape_cast %3 : vector<1x32xf32> to vector<1x1x32xf32>
    %26 = vector.broadcast %25 : vector<1x1x32xf32> to vector<1x8x32xf32>
    %27 = arith.addf %24, %26 : vector<1x8x32xf32>
    %28 = vector.shape_cast %27 : vector<1x8x32xf32> to vector<8x32xf32>
    %c0_10 = arith.constant 0 : index
    %c0_11 = arith.constant 0 : index
    %c0_12 = arith.constant 0 : index
    %29 = vector.load %arg2[%c0_10, %c0_11, %c0_12] : memref<1x16x32xf32, #tpu.memory_space<vmem>>, vector<1x16x32xf32>
    %30 = vector.shape_cast %29 : vector<1x16x32xf32> to vector<16x32xf32>
    %c0_13 = arith.constant 0 : index
    %c0_14 = arith.constant 0 : index
    %31 = vector.load %arg3[%c0_13, %c0_14] : memref<32x32xf32, #tpu.memory_space<vmem>>, vector<32x32xf32>
    %cst_15 = arith.constant dense<0.000000e+00> : vector<8x32xf32>
    %32 = tpu.matmul %28, %31, %cst_15 {dimension_numbers = #tpu.dot_dimension_numbers<[1], [0], [0], [1], [0, 0, 1, 1], [], []>} : vector<8x32xf32>, vector<32x32xf32>, vector<8x32xf32> -> vector<8x32xf32>
    %c0_16 = arith.constant 0 : index
    %c0_17 = arith.constant 0 : index
    %33 = vector.load %arg6[%c0_16, %c0_17] : memref<1x32xf32, #tpu.memory_space<vmem>>, vector<1x32xf32>
    %34 = vector.broadcast %33 : vector<1x32xf32> to vector<8x32xf32>
    %35 = arith.addf %32, %34 : vector<8x32xf32>
    %c0_18 = arith.constant 0 : index
    %c0_19 = arith.constant 0 : index
    %36 = vector.load %arg4[%c0_18, %c0_19] : memref<32x32xf32, #tpu.memory_space<vmem>>, vector<32x32xf32>
    %cst_20 = arith.constant dense<0.000000e+00> : vector<16x32xf32>
    %37 = tpu.matmul %30, %36, %cst_20 {dimension_numbers = #tpu.dot_dimension_numbers<[1], [0], [0], [1], [0, 0, 1, 1], [], []>} : vector<16x32xf32>, vector<32x32xf32>, vector<16x32xf32> -> vector<16x32xf32>
    %c0_21 = arith.constant 0 : index
    %c0_22 = arith.constant 0 : index
    %38 = vector.load %arg7[%c0_21, %c0_22] : memref<1x32xf32, #tpu.memory_space<vmem>>, vector<1x32xf32>
    %39 = vector.broadcast %38 : vector<1x32xf32> to vector<16x32xf32>
    %40 = arith.addf %37, %39 : vector<16x32xf32>
    %c0_23 = arith.constant 0 : index
    %c0_24 = arith.constant 0 : index
    %41 = vector.load %arg5[%c0_23, %c0_24] : memref<32x32xf32, #tpu.memory_space<vmem>>, vector<32x32xf32>
    %cst_25 = arith.constant dense<0.000000e+00> : vector<16x32xf32>
    %42 = tpu.matmul %30, %41, %cst_25 {dimension_numbers = #tpu.dot_dimension_numbers<[1], [0], [0], [1], [0, 0, 1, 1], [], []>} : vector<16x32xf32>, vector<32x32xf32>, vector<16x32xf32> -> vector<16x32xf32>
    %c0_26 = arith.constant 0 : index
    %c0_27 = arith.constant 0 : index
    %43 = vector.load %arg8[%c0_26, %c0_27] : memref<1x32xf32, #tpu.memory_space<vmem>>, vector<1x32xf32>
    %44 = vector.broadcast %43 : vector<1x32xf32> to vector<16x32xf32>
    %45 = arith.addf %42, %44 : vector<16x32xf32>
    %46 = vector.shape_cast %35 : vector<8x32xf32> to vector<1x8x32xf32>
    %47 = vector.shape_cast %40 : vector<16x32xf32> to vector<1x16x32xf32>
    %48 = vector.shape_cast %45 : vector<16x32xf32> to vector<1x16x32xf32>
    %49 = vector.extract_strided_slice %46 {offsets = [0, 0, 0], sizes = [1, 8, 8], strides = [1, 1, 1]} : vector<1x8x32xf32> to vector<1x8x8xf32>
    %50 = vector.extract_strided_slice %47 {offsets = [0, 0, 0], sizes = [1, 16, 8], strides = [1, 1, 1]} : vector<1x16x32xf32> to vector<1x16x8xf32>
    %51 = vector.extract_strided_slice %48 {offsets = [0, 0, 0], sizes = [1, 16, 8], strides = [1, 1, 1]} : vector<1x16x32xf32> to vector<1x16x8xf32>
    "tpu.trace_start"() <{level = 10 : i32, message = "bld,bsd->bls"}> : () -> ()
    %cst_28 = arith.constant dense<0.000000e+00> : vector<1x8x16xf32>
    %52 = tpu.matmul %49, %50, %cst_28 {dimension_numbers = #tpu.dot_dimension_numbers<[2], [2], [1], [1], [0, 0, 0, 1, 1, 1], [0], [0]>} : vector<1x8x8xf32>, vector<1x16x8xf32>, vector<1x8x16xf32> -> vector<1x8x16xf32>
    "tpu.trace_stop"() : () -> ()
    %cst_29 = arith.constant dense<0xFF800000> : vector<1x8xf32>
    %53 = vector.multi_reduction <maximumf>, %52, %cst_29 [2] : vector<1x8x16xf32> to vector<1x8xf32>
    %54 = vector.shape_cast %53 : vector<1x8xf32> to vector<1x8x1xf32>
    %55 = vector.broadcast %54 : vector<1x8x1xf32> to vector<1x8x16xf32>
    %56 = arith.subf %52, %55 : vector<1x8x16xf32>
    %57 = math.exp %56 : vector<1x8x16xf32>
    %cst_30 = arith.constant dense<0.000000e+00> : vector<1x8xf32>
    %58 = vector.multi_reduction <add>, %57, %cst_30 [2] : vector<1x8x16xf32> to vector<1x8xf32>
    %59 = vector.shape_cast %58 : vector<1x8xf32> to vector<1x8x1xf32>
    %60 = tpu.reciprocal %59 : vector<1x8x1xf32> -> vector<1x8x1xf32>
    %61 = vector.broadcast %60 : vector<1x8x1xf32> to vector<1x8x16xf32>
    %62 = arith.mulf %57, %61 : vector<1x8x16xf32>
    "tpu.trace_start"() <{level = 10 : i32, message = "bls,bsd->bld"}> : () -> ()
    %cst_31 = arith.constant dense<0.000000e+00> : vector<1x8x8xf32>
    %63 = tpu.matmul %62, %51, %cst_31 {dimension_numbers = #tpu.dot_dimension_numbers<[2], [1], [1], [2], [0, 0, 0, 1, 1, 2], [0], [0]>} : vector<1x8x16xf32>, vector<1x16x8xf32>, vector<1x8x8xf32> -> vector<1x8x8xf32>
    "tpu.trace_stop"() : () -> ()
    %c0_32 = arith.constant 0 : index
    %c0_33 = arith.constant 0 : index
    %c0_34 = arith.constant 0 : index
    %c0_35 = arith.constant 0 : index
    %64 = vector.load %arg22[%c0_32, %c0_33, %c0_34, %c0_35] : memref<4x1x8x8xf32, #tpu.memory_space<vmem>>, vector<1x1x8x8xf32>
    %65 = vector.shape_cast %64 : vector<1x1x8x8xf32> to vector<1x8x8xf32>
    %66 = vector.shape_cast %63 : vector<1x8x8xf32> to vector<1x1x8x8xf32>
    tpu.vector_store %arg22[%c0_32, %c0_33, %c0_34, %c0_35], %66 {strides = array<i32>} : memref<4x1x8x8xf32, #tpu.memory_space<vmem>>, vector<1x1x8x8xf32>,
    %67 = vector.extract_strided_slice %46 {offsets = [0, 0, 8], sizes = [1, 8, 8], strides = [1, 1, 1]} : vector<1x8x32xf32> to vector<1x8x8xf32>
    %68 = vector.extract_strided_slice %47 {offsets = [0, 0, 8], sizes = [1, 16, 8], strides = [1, 1, 1]} : vector<1x16x32xf32> to vector<1x16x8xf32>
    %69 = vector.extract_strided_slice %48 {offsets = [0, 0, 8], sizes = [1, 16, 8], strides = [1, 1, 1]} : vector<1x16x32xf32> to vector<1x16x8xf32>
    "tpu.trace_start"() <{level = 10 : i32, message = "bld,bsd->bls"}> : () -> ()
    %cst_36 = arith.constant dense<0.000000e+00> : vector<1x8x16xf32>
    %70 = tpu.matmul %67, %68, %cst_36 {dimension_numbers = #tpu.dot_dimension_numbers<[2], [2], [1], [1], [0, 0, 0, 1, 1, 1], [0], [0]>} : vector<1x8x8xf32>, vector<1x16x8xf32>, vector<1x8x16xf32> -> vector<1x8x16xf32>
    "tpu.trace_stop"() : () -> ()
    %cst_37 = arith.constant dense<0xFF800000> : vector<1x8xf32>
    %71 = vector.multi_reduction <maximumf>, %70, %cst_37 [2] : vector<1x8x16xf32> to vector<1x8xf32>
    %72 = vector.shape_cast %71 : vector<1x8xf32> to vector<1x8x1xf32>
    %73 = vector.broadcast %72 : vector<1x8x1xf32> to vector<1x8x16xf32>
    %74 = arith.subf %70, %73 : vector<1x8x16xf32>
    %75 = math.exp %74 : vector<1x8x16xf32>
    %cst_38 = arith.constant dense<0.000000e+00> : vector<1x8xf32>
    %76 = vector.multi_reduction <add>, %75, %cst_38 [2] : vector<1x8x16xf32> to vector<1x8xf32>
    %77 = vector.shape_cast %76 : vector<1x8xf32> to vector<1x8x1xf32>
    %78 = tpu.reciprocal %77 : vector<1x8x1xf32> -> vector<1x8x1xf32>
    %79 = vector.broadcast %78 : vector<1x8x1xf32> to vector<1x8x16xf32>
    %80 = arith.mulf %75, %79 : vector<1x8x16xf32>
    "tpu.trace_start"() <{level = 10 : i32, message = "bls,bsd->bld"}> : () -> ()
    %cst_39 = arith.constant dense<0.000000e+00> : vector<1x8x8xf32>
    %81 = tpu.matmul %80, %69, %cst_39 {dimension_numbers = #tpu.dot_dimension_numbers<[2], [1], [1], [2], [0, 0, 0, 1, 1, 2], [0], [0]>} : vector<1x8x16xf32>, vector<1x16x8xf32>, vector<1x8x8xf32> -> vector<1x8x8xf32>
    "tpu.trace_stop"() : () -> ()
    %c1 = arith.constant 1 : index
    %c0_40 = arith.constant 0 : index
    %c0_41 = arith.constant 0 : index
    %c0_42 = arith.constant 0 : index
    %82 = vector.load %arg22[%c1, %c0_40, %c0_41, %c0_42] : memref<4x1x8x8xf32, #tpu.memory_space<vmem>>, vector<1x1x8x8xf32>
    %83 = vector.shape_cast %82 : vector<1x1x8x8xf32> to vector<1x8x8xf32>
    %84 = vector.shape_cast %81 : vector<1x8x8xf32> to vector<1x1x8x8xf32>
    tpu.vector_store %arg22[%c1, %c0_40, %c0_41, %c0_42], %84 {strides = array<i32>} : memref<4x1x8x8xf32, #tpu.memory_space<vmem>>, vector<1x1x8x8xf32>,
    %85 = vector.extract_strided_slice %46 {offsets = [0, 0, 16], sizes = [1, 8, 8], strides = [1, 1, 1]} : vector<1x8x32xf32> to vector<1x8x8xf32>
    %86 = vector.extract_strided_slice %47 {offsets = [0, 0, 16], sizes = [1, 16, 8], strides = [1, 1, 1]} : vector<1x16x32xf32> to vector<1x16x8xf32>
    %87 = vector.extract_strided_slice %48 {offsets = [0, 0, 16], sizes = [1, 16, 8], strides = [1, 1, 1]} : vector<1x16x32xf32> to vector<1x16x8xf32>
    "tpu.trace_start"() <{level = 10 : i32, message = "bld,bsd->bls"}> : () -> ()
    %cst_43 = arith.constant dense<0.000000e+00> : vector<1x8x16xf32>
    %88 = tpu.matmul %85, %86, %cst_43 {dimension_numbers = #tpu.dot_dimension_numbers<[2], [2], [1], [1], [0, 0, 0, 1, 1, 1], [0], [0]>} : vector<1x8x8xf32>, vector<1x16x8xf32>, vector<1x8x16xf32> -> vector<1x8x16xf32>
    "tpu.trace_stop"() : () -> ()
    %cst_44 = arith.constant dense<0xFF800000> : vector<1x8xf32>
    %89 = vector.multi_reduction <maximumf>, %88, %cst_44 [2] : vector<1x8x16xf32> to vector<1x8xf32>
    %90 = vector.shape_cast %89 : vector<1x8xf32> to vector<1x8x1xf32>
    %91 = vector.broadcast %90 : vector<1x8x1xf32> to vector<1x8x16xf32>
    %92 = arith.subf %88, %91 : vector<1x8x16xf32>
    %93 = math.exp %92 : vector<1x8x16xf32>
    %cst_45 = arith.constant dense<0.000000e+00> : vector<1x8xf32>
    %94 = vector.multi_reduction <add>, %93, %cst_45 [2] : vector<1x8x16xf32> to vector<1x8xf32>
    %95 = vector.shape_cast %94 : vector<1x8xf32> to vector<1x8x1xf32>
    %96 = tpu.reciprocal %95 : vector<1x8x1xf32> -> vector<1x8x1xf32>
    %97 = vector.broadcast %96 : vector<1x8x1xf32> to vector<1x8x16xf32>
    %98 = arith.mulf %93, %97 : vector<1x8x16xf32>
    "tpu.trace_start"() <{level = 10 : i32, message = "bls,bsd->bld"}> : () -> ()
    %cst_46 = arith.constant dense<0.000000e+00> : vector<1x8x8xf32>
    %99 = tpu.matmul %98, %87, %cst_46 {dimension_numbers = #tpu.dot_dimension_numbers<[2], [1], [1], [2], [0, 0, 0, 1, 1, 2], [0], [0]>} : vector<1x8x16xf32>, vector<1x16x8xf32>, vector<1x8x8xf32> -> vector<1x8x8xf32>
    "tpu.trace_stop"() : () -> ()
    %c2 = arith.constant 2 : index
    %c0_47 = arith.constant 0 : index
    %c0_48 = arith.constant 0 : index
    %c0_49 = arith.constant 0 : index
    %100 = vector.load %arg22[%c2, %c0_47, %c0_48, %c0_49] : memref<4x1x8x8xf32, #tpu.memory_space<vmem>>, vector<1x1x8x8xf32>
    %101 = vector.shape_cast %100 : vector<1x1x8x8xf32> to vector<1x8x8xf32>
    %102 = vector.shape_cast %99 : vector<1x8x8xf32> to vector<1x1x8x8xf32>
    tpu.vector_store %arg22[%c2, %c0_47, %c0_48, %c0_49], %102 {strides = array<i32>} : memref<4x1x8x8xf32, #tpu.memory_space<vmem>>, vector<1x1x8x8xf32>,
    %103 = vector.extract_strided_slice %46 {offsets = [0, 0, 24], sizes = [1, 8, 8], strides = [1, 1, 1]} : vector<1x8x32xf32> to vector<1x8x8xf32>
    %104 = vector.extract_strided_slice %47 {offsets = [0, 0, 24], sizes = [1, 16, 8], strides = [1, 1, 1]} : vector<1x16x32xf32> to vector<1x16x8xf32>
    %105 = vector.extract_strided_slice %48 {offsets = [0, 0, 24], sizes = [1, 16, 8], strides = [1, 1, 1]} : vector<1x16x32xf32> to vector<1x16x8xf32>
    "tpu.trace_start"() <{level = 10 : i32, message = "bld,bsd->bls"}> : () -> ()
    %cst_50 = arith.constant dense<0.000000e+00> : vector<1x8x16xf32>
    %106 = tpu.matmul %103, %104, %cst_50 {dimension_numbers = #tpu.dot_dimension_numbers<[2], [2], [1], [1], [0, 0, 0, 1, 1, 1], [0], [0]>} : vector<1x8x8xf32>, vector<1x16x8xf32>, vector<1x8x16xf32> -> vector<1x8x16xf32>
    "tpu.trace_stop"() : () -> ()
    %cst_51 = arith.constant dense<0xFF800000> : vector<1x8xf32>
    %107 = vector.multi_reduction <maximumf>, %106, %cst_51 [2] : vector<1x8x16xf32> to vector<1x8xf32>
    %108 = vector.shape_cast %107 : vector<1x8xf32> to vector<1x8x1xf32>
    %109 = vector.broadcast %108 : vector<1x8x1xf32> to vector<1x8x16xf32>
    %110 = arith.subf %106, %109 : vector<1x8x16xf32>
    %111 = math.exp %110 : vector<1x8x16xf32>
    %cst_52 = arith.constant dense<0.000000e+00> : vector<1x8xf32>
    %112 = vector.multi_reduction <add>, %111, %cst_52 [2] : vector<1x8x16xf32> to vector<1x8xf32>
    %113 = vector.shape_cast %112 : vector<1x8xf32> to vector<1x8x1xf32>
    %114 = tpu.reciprocal %113 : vector<1x8x1xf32> -> vector<1x8x1xf32>
    %115 = vector.broadcast %114 : vector<1x8x1xf32> to vector<1x8x16xf32>
    %116 = arith.mulf %111, %115 : vector<1x8x16xf32>
    "tpu.trace_start"() <{level = 10 : i32, message = "bls,bsd->bld"}> : () -> ()
    %cst_53 = arith.constant dense<0.000000e+00> : vector<1x8x8xf32>
    %117 = tpu.matmul %116, %105, %cst_53 {dimension_numbers = #tpu.dot_dimension_numbers<[2], [1], [1], [2], [0, 0, 0, 1, 1, 2], [0], [0]>} : vector<1x8x16xf32>, vector<1x16x8xf32>, vector<1x8x8xf32> -> vector<1x8x8xf32>
    "tpu.trace_stop"() : () -> ()
    %c3 = arith.constant 3 : index
    %c0_54 = arith.constant 0 : index
    %c0_55 = arith.constant 0 : index
    %c0_56 = arith.constant 0 : index
    %118 = vector.load %arg22[%c3, %c0_54, %c0_55, %c0_56] : memref<4x1x8x8xf32, #tpu.memory_space<vmem>>, vector<1x1x8x8xf32>
    %119 = vector.shape_cast %118 : vector<1x1x8x8xf32> to vector<1x8x8xf32>
    %120 = vector.shape_cast %117 : vector<1x8x8xf32> to vector<1x1x8x8xf32>
    tpu.vector_store %arg22[%c3, %c0_54, %c0_55, %c0_56], %120 {strides = array<i32>} : memref<4x1x8x8xf32, #tpu.memory_space<vmem>>, vector<1x1x8x8xf32>,
    %c0_57 = arith.constant 0 : index
    %c0_58 = arith.constant 0 : index
    %c0_59 = arith.constant 0 : index
    %c0_60 = arith.constant 0 : index
    %121 = vector.load %arg22[%c0_57, %c0_58, %c0_59, %c0_60] : memref<4x1x8x8xf32, #tpu.memory_space<vmem>>, vector<4x1x8x8xf32>
    %122 = vector.shape_cast %121 : vector<4x1x8x8xf32> to vector<4x8x8xf32>
    %c0_61 = arith.constant 0 : index
    %c0_62 = arith.constant 0 : index
    %c0_63 = arith.constant 0 : index
    %123 = vector.load %arg9[%c0_61, %c0_62, %c0_63] : memref<4x8x32xf32, #tpu.memory_space<vmem>>, vector<4x8x32xf32>
    "tpu.trace_start"() <{level = 10 : i32, message = "hmd,hde->hme"}> : () -> ()
    %cst_64 = arith.constant dense<0.000000e+00> : vector<4x8x32xf32>
    %124 = tpu.matmul %122, %123, %cst_64 {dimension_numbers = #tpu.dot_dimension_numbers<[2], [1], [1], [2], [0, 0, 0, 1, 1, 2], [0], [0]>} : vector<4x8x8xf32>, vector<4x8x32xf32>, vector<4x8x32xf32> -> vector<4x8x32xf32>
    "tpu.trace_stop"() : () -> ()
    %cst_65 = arith.constant dense<0.000000e+00> : vector<8x32xf32>
    %125 = vector.multi_reduction <add>, %124, %cst_65 [0] : vector<4x8x32xf32> to vector<8x32xf32>
    %c0_66 = arith.constant 0 : index
    %c0_67 = arith.constant 0 : index
    %126 = vector.load %arg10[%c0_66, %c0_67] : memref<1x32xf32, #tpu.memory_space<vmem>>, vector<1x32xf32>
    %127 = vector.broadcast %126 : vector<1x32xf32> to vector<8x32xf32>
    %128 = arith.addf %125, %127 : vector<8x32xf32>
    %129 = arith.addf %28, %128 : vector<8x32xf32>
    %c0_68 = arith.constant 0 : index
    %c0_69 = arith.constant 0 : index
    %130 = vector.load %arg17[%c0_68, %c0_69] : memref<1x32xf32, #tpu.memory_space<vmem>>, vector<1x32xf32>
    %c0_70 = arith.constant 0 : index
    %c0_71 = arith.constant 0 : index
    %131 = vector.load %arg18[%c0_70, %c0_71] : memref<1x32xf32, #tpu.memory_space<vmem>>, vector<1x32xf32>
    %cst_72 = arith.constant dense<0.000000e+00> : vector<8xf32>
    %132 = vector.multi_reduction <add>, %129, %cst_72 [1] : vector<8x32xf32> to vector<8xf32>
    %133 = vector.shape_cast %132 : vector<8xf32> to vector<8x1xf32>
    %cst_73 = arith.constant 3.200000e+01 : f32
    %134 = vector.broadcast %cst_73 : f32 to vector<8x1xf32>
    %135 = arith.divf %133, %134 : vector<8x1xf32>
    %136 = vector.broadcast %135 : vector<8x1xf32> to vector<8x32xf32>
    %137 = arith.subf %129, %136 : vector<8x32xf32>
    %138 = arith.mulf %137, %137 : vector<8x32xf32>
    %cst_74 = arith.constant dense<0.000000e+00> : vector<8xf32>
    %139 = vector.multi_reduction <add>, %138, %cst_74 [1] : vector<8x32xf32> to vector<8xf32>
    %140 = vector.shape_cast %139 : vector<8xf32> to vector<8x1xf32>
    %cst_75 = arith.constant 3.200000e+01 : f32
    %141 = vector.broadcast %cst_75 : f32 to vector<8x1xf32>
    %142 = arith.divf %140, %141 : vector<8x1xf32>
    %143 = vector.broadcast %135 : vector<8x1xf32> to vector<8x32xf32>
    %144 = arith.subf %129, %143 : vector<8x32xf32>
    %cst_76 = arith.constant 9.99999974E-6 : f32
    %145 = vector.broadcast %cst_76 : f32 to vector<8x1xf32>
    %146 = arith.addf %142, %145 : vector<8x1xf32>
    %147 = math.rsqrt %146 : vector<8x1xf32>
    %148 = vector.broadcast %147 : vector<8x1xf32> to vector<8x32xf32>
    %149 = arith.mulf %144, %148 : vector<8x32xf32>
    %150 = vector.broadcast %130 : vector<1x32xf32> to vector<8x32xf32>
    %151 = arith.mulf %149, %150 : vector<8x32xf32>
    %152 = vector.broadcast %131 : vector<1x32xf32> to vector<8x32xf32>
    %153 = arith.addf %151, %152 : vector<8x32xf32>
    %cst_77 = arith.constant 0.000000e+00 : f32
    %154 = vector.broadcast %cst_77 : f32 to vector<8x32xf32>
    %c0_78 = arith.constant 0 : index
    %c0_79 = arith.constant 0 : index
    %155 = vector.load %arg11[%c0_78, %c0_79] : memref<32x64xf32, #tpu.memory_space<vmem>>, vector<32x64xf32>
    %cst_80 = arith.constant dense<0.000000e+00> : vector<8x64xf32>
    %156 = tpu.matmul %153, %155, %cst_80 {dimension_numbers = #tpu.dot_dimension_numbers<[1], [0], [0], [1], [0, 0, 1, 1], [], []>} : vector<8x32xf32>, vector<32x64xf32>, vector<8x64xf32> -> vector<8x64xf32>
    %c0_81 = arith.constant 0 : index
    %c0_82 = arith.constant 0 : index
    %157 = vector.load %arg12[%c0_81, %c0_82] : memref<1x64xf32, #tpu.memory_space<vmem>>, vector<1x64xf32>
    %158 = vector.broadcast %157 : vector<1x64xf32> to vector<8x64xf32>
    %159 = arith.addf %156, %158 : vector<8x64xf32>
    %cst_83 = arith.constant 0.000000e+00 : f32
    %160 = vector.broadcast %cst_83 : f32 to vector<8x64xf32>
    %161 = arith.maximumf %159, %160 : vector<8x64xf32>
    %c0_84 = arith.constant 0 : index
    %c0_85 = arith.constant 0 : index
    %162 = vector.load %arg13[%c0_84, %c0_85] : memref<64x32xf32, #tpu.memory_space<vmem>>, vector<64x32xf32>
    %cst_86 = arith.constant dense<0.000000e+00> : vector<8x32xf32>
    %163 = tpu.matmul %161, %162, %cst_86 {dimension_numbers = #tpu.dot_dimension_numbers<[1], [0], [0], [1], [0, 0, 1, 1], [], []>} : vector<8x64xf32>, vector<64x32xf32>, vector<8x32xf32> -> vector<8x32xf32>
    %164 = arith.addf %154, %163 : vector<8x32xf32>
    %c0_87 = arith.constant 0 : index
    %c0_88 = arith.constant 0 : index
    %165 = vector.load %arg14[%c0_87, %c0_88] : memref<1x32xf32, #tpu.memory_space<vmem>>, vector<1x32xf32>
    %166 = vector.broadcast %165 : vector<1x32xf32> to vector<8x32xf32>
    %167 = arith.addf %164, %166 : vector<8x32xf32>
    %168 = arith.addf %153, %167 : vector<8x32xf32>
    %c0_89 = arith.constant 0 : index
    %c0_90 = arith.constant 0 : index
    %169 = vector.load %arg19[%c0_89, %c0_90] : memref<1x32xf32, #tpu.memory_space<vmem>>, vector<1x32xf32>
    %c0_91 = arith.constant 0 : index
    %c0_92 = arith.constant 0 : index
    %170 = vector.load %arg20[%c0_91, %c0_92] : memref<1x32xf32, #tpu.memory_space<vmem>>, vector<1x32xf32>
    %cst_93 = arith.constant dense<0.000000e+00> : vector<8xf32>
    %171 = vector.multi_reduction <add>, %168, %cst_93 [1] : vector<8x32xf32> to vector<8xf32>
    %172 = vector.shape_cast %171 : vector<8xf32> to vector<8x1xf32>
    %cst_94 = arith.constant 3.200000e+01 : f32
    %173 = vector.broadcast %cst_94 : f32 to vector<8x1xf32>
    %174 = arith.divf %172, %173 : vector<8x1xf32>
    %175 = vector.broadcast %174 : vector<8x1xf32> to vector<8x32xf32>
    %176 = arith.subf %168, %175 : vector<8x32xf32>
    %177 = arith.mulf %176, %176 : vector<8x32xf32>
    %cst_95 = arith.constant dense<0.000000e+00> : vector<8xf32>
    %178 = vector.multi_reduction <add>, %177, %cst_95 [1] : vector<8x32xf32> to vector<8xf32>
    %179 = vector.shape_cast %178 : vector<8xf32> to vector<8x1xf32>
    %cst_96 = arith.constant 3.200000e+01 : f32
    %180 = vector.broadcast %cst_96 : f32 to vector<8x1xf32>
    %181 = arith.divf %179, %180 : vector<8x1xf32>
    %182 = vector.broadcast %174 : vector<8x1xf32> to vector<8x32xf32>
    %183 = arith.subf %168, %182 : vector<8x32xf32>
    %cst_97 = arith.constant 9.99999974E-6 : f32
    %184 = vector.broadcast %cst_97 : f32 to vector<8x1xf32>
    %185 = arith.addf %181, %184 : vector<8x1xf32>
    %186 = math.rsqrt %185 : vector<8x1xf32>
    %187 = vector.broadcast %186 : vector<8x1xf32> to vector<8x32xf32>
    %188 = arith.mulf %183, %187 : vector<8x32xf32>
    %189 = vector.broadcast %169 : vector<1x32xf32> to vector<8x32xf32>
    %190 = arith.mulf %188, %189 : vector<8x32xf32>
    %191 = vector.broadcast %170 : vector<1x32xf32> to vector<8x32xf32>
    %192 = arith.addf %190, %191 : vector<8x32xf32>
    %193 = vector.shape_cast %192 : vector<8x32xf32> to vector<1x8x32xf32>
    %c0_98 = arith.constant 0 : index
    %c0_99 = arith.constant 0 : index
    %c0_100 = arith.constant 0 : index
    %194 = vector.load %arg21[%c0_98, %c0_99, %c0_100] : memref<1x8x32xf32, #tpu.memory_space<vmem>>, vector<1x8x32xf32>
    tpu.vector_store %arg21[%c0_98, %c0_99, %c0_100], %193 {strides = array<i32>} : memref<1x8x32xf32, #tpu.memory_space<vmem>>, vector<1x8x32xf32>,
    return
  }
  func.func @transform_0(%arg0: i32) -> (i32, i32, i32) {
    %c0_i32 = arith.constant 0 : i32
    %c0_i32_0 = arith.constant 0 : i32
    %c0_i32_1 = arith.constant 0 : i32
    return %arg0, %c0_i32, %c0_i32_0 : i32, i32, i32
  }
  func.func @transform_1(%arg0: i32) -> (i32, i32, i32) {
    %c0_i32 = arith.constant 0 : i32
    %c0_i32_0 = arith.constant 0 : i32
    %c0_i32_1 = arith.constant 0 : i32
    return %arg0, %c0_i32, %c0_i32_0 : i32, i32, i32
  }
  func.func @transform_2(%arg0: i32) -> (i32, i32) {
    %c0_i32 = arith.constant 0 : i32
    %c0_i32_0 = arith.constant 0 : i32
    %c0_i32_1 = arith.constant 0 : i32
    return %c0_i32, %c0_i32_0 : i32, i32
  }
  func.func @transform_3(%arg0: i32) -> (i32, i32) {
    %c0_i32 = arith.constant 0 : i32
    %c0_i32_0 = arith.constant 0 : i32
    %c0_i32_1 = arith.constant 0 : i32
    return %c0_i32, %c0_i32_0 : i32, i32
  }
  func.func @transform_4(%arg0: i32) -> (i32, i32) {
    %c0_i32 = arith.constant 0 : i32
    %c0_i32_0 = arith.constant 0 : i32
    %c0_i32_1 = arith.constant 0 : i32
    return %c0_i32, %c0_i32_0 : i32, i32
  }
  func.func @transform_5(%arg0: i32) -> (i32, i32) {
    %c0_i32 = arith.constant 0 : i32
    %c0_i32_0 = arith.constant 0 : i32
    %c0_i32_1 = arith.constant 0 : i32
    return %c0_i32, %c0_i32_0 : i32, i32
  }
  func.func @transform_6(%arg0: i32) -> (i32, i32) {
    %c0_i32 = arith.constant 0 : i32
    %c0_i32_0 = arith.constant 0 : i32
    %c0_i32_1 = arith.constant 0 : i32
    return %c0_i32, %c0_i32_0 : i32, i32
  }
  func.func @transform_7(%arg0: i32) -> (i32, i32) {
    %c0_i32 = arith.constant 0 : i32
    %c0_i32_0 = arith.constant 0 : i32
    %c0_i32_1 = arith.constant 0 : i32
    return %c0_i32, %c0_i32_0 : i32, i32
  }
  func.func @transform_8(%arg0: i32) -> (i32, i32, i32) {
    %c0_i32 = arith.constant 0 : i32
    %c0_i32_0 = arith.constant 0 : i32
    %c0_i32_1 = arith.constant 0 : i32
    %c0_i32_2 = arith.constant 0 : i32
    return %c0_i32, %c0_i32_0, %c0_i32_1 : i32, i32, i32
  }
  func.func @transform_9(%arg0: i32) -> (i32, i32) {
    %c0_i32 = arith.constant 0 : i32
    %c0_i32_0 = arith.constant 0 : i32
    %c0_i32_1 = arith.constant 0 : i32
    return %c0_i32, %c0_i32_0 : i32, i32
  }
  func.func @transform_10(%arg0: i32) -> (i32, i32) {
    %c0_i32 = arith.constant 0 : i32
    %c0_i32_0 = arith.constant 0 : i32
    %c0_i32_1 = arith.constant 0 : i32
    return %c0_i32, %c0_i32_0 : i32, i32
  }
  func.func @transform_11(%arg0: i32) -> (i32, i32) {
    %c0_i32 = arith.constant 0 : i32
    %c0_i32_0 = arith.constant 0 : i32
    %c0_i32_1 = arith.constant 0 : i32
    return %c0_i32, %c0_i32_0 : i32, i32
  }
  func.func @transform_12(%arg0: i32) -> (i32, i32) {
    %c0_i32 = arith.constant 0 : i32
    %c0_i32_0 = arith.constant 0 : i32
    %c0_i32_1 = arith.constant 0 : i32
    return %c0_i32, %c0_i32_0 : i32, i32
  }
  func.func @transform_13(%arg0: i32) -> (i32, i32) {
    %c0_i32 = arith.constant 0 : i32
    %c0_i32_0 = arith.constant 0 : i32
    %c0_i32_1 = arith.constant 0 : i32
    return %c0_i32, %c0_i32_0 : i32, i32
  }
  func.func @transform_14(%arg0: i32) -> (i32, i32) {
    %c0_i32 = arith.constant 0 : i32
    %c0_i32_0 = arith.constant 0 : i32
    %c0_i32_1 = arith.constant 0 : i32
    return %c0_i32, %c0_i32_0 : i32, i32
  }
  func.func @transform_15(%arg0: i32) -> (i32, i32) {
    %c0_i32 = arith.constant 0 : i32
    %c0_i32_0 = arith.constant 0 : i32
    %c0_i32_1 = arith.constant 0 : i32
    return %c0_i32, %c0_i32_0 : i32, i32
  }
  func.func @transform_16(%arg0: i32) -> (i32, i32) {
    %c0_i32 = arith.constant 0 : i32
    %c0_i32_0 = arith.constant 0 : i32
    %c0_i32_1 = arith.constant 0 : i32
    return %c0_i32, %c0_i32_0 : i32, i32
  }
  func.func @transform_17(%arg0: i32) -> (i32, i32) {
    %c0_i32 = arith.constant 0 : i32
    %c0_i32_0 = arith.constant 0 : i32
    %c0_i32_1 = arith.constant 0 : i32
    return %c0_i32, %c0_i32_0 : i32, i32
  }
  func.func @transform_18(%arg0: i32) -> (i32, i32) {
    %c0_i32 = arith.constant 0 : i32
    %c0_i32_0 = arith.constant 0 : i32
    %c0_i32_1 = arith.constant 0 : i32
    return %c0_i32, %c0_i32_0 : i32, i32
  }
  func.func @transform_19(%arg0: i32) -> (i32, i32) {
    %c0_i32 = arith.constant 0 : i32
    %c0_i32_0 = arith.constant 0 : i32
    %c0_i32_1 = arith.constant 0 : i32
    return %c0_i32, %c0_i32_0 : i32, i32
  }
  func.func @transform_20(%arg0: i32) -> (i32, i32, i32) {
    %c0_i32 = arith.constant 0 : i32
    %c0_i32_0 = arith.constant 0 : i32
    %c0_i32_1 = arith.constant 0 : i32
    return %arg0, %c0_i32, %c0_i32_0 : i32, i32, i32
  }
}

module attributes {stable_mosaic.version = 11 : i64} {
  func.func @decoder_layer_kernel(%arg0: i32, %arg1: memref<1x8x32xf32, #tpu.memory_space<vmem>>, %arg2: memref<1x16x32xf32, #tpu.memory_space<vmem>>, %arg3: memref<32x32xf32, #tpu.memory_space<vmem>>, %arg4: memref<32x32xf32, #tpu.memory_space<vmem>>, %arg5: memref<32x32xf32, #tpu.memory_space<vmem>>, %arg6: memref<1x32xf32, #tpu.memory_space<vmem>>, %arg7: memref<1x32xf32, #tpu.memory_space<vmem>>, %arg8: memref<1x32xf32, #tpu.memory_space<vmem>>, %arg9: memref<4x8x32xf32, #tpu.memory_space<vmem>>, %arg10: memref<1x32xf32, #tpu.memory_space<vmem>>, %arg11: memref<32x64xf32, #tpu.memory_space<vmem>>, %arg12: memref<1x64xf32, #tpu.memory_space<vmem>>, %arg13: memref<64x32xf32, #tpu.memory_space<vmem>>, %arg14: memref<1x32xf32, #tpu.memory_space<vmem>>, %arg15: memref<1x32xf32, #tpu.memory_space<vmem>>, %arg16: memref<1x32xf32, #tpu.memory_space<vmem>>, %arg17: memref<1x32xf32, #tpu.memory_space<vmem>>, %arg18: memref<1x32xf32, #tpu.memory_space<vmem>>, %arg19: memref<1x32xf32, #tpu.memory_space<vmem>>, %arg20: memref<1x32xf32, #tpu.memory_space<vmem>>, %arg21: memref<1x8x32xf32, #tpu.memory_space<vmem>>, %arg22: memref<4x1x8x8xf32, #tpu.memory_space<vmem>>) attributes {dimension_semantics = [#tpu.dimension_semantics<parallel>], iteration_bounds = array<i64: 4>, scalar_prefetch = 0 : i64, scratch_operands = 1 : i64, tpu.core_type = #tpu.core_type<tc>, window_params = [{transform_indices = @transform_0, window_bounds = array<i64: 1, 8, 32>}, {transform_indices = @transform_1, window_bounds = array<i64: 1, 16, 32>}, {pipeline_mode = #tpu.pipeline_mode<synchronous>, transform_indices = @transform_2, window_bounds = array<i64: 32, 32>}, {pipeline_mode = #tpu.pipeline_mode<synchronous>, transform_indices = @transform_3, window_bounds = array<i64: 32, 32>}, {pipeline_mode = #tpu.pipeline_mode<synchronous>, transform_indices = @transform_4, window_bounds = array<i64: 32, 32>}, {pipeline_mode = #tpu.pipeline_mode<synchronous>, transform_indices = @transform_5, window_bounds = array<i64: 1, 32>}, {pipeline_mode = #tpu.pipeline_mode<synchronous>, transform_indices = @transform_6, window_bounds = array<i64: 1, 32>}, {pipeline_mode = #tpu.pipeline_mode<synchronous>, transform_indices = @transform_7, window_bounds = array<i64: 1, 32>}, {pipeline_mode = #tpu.pipeline_mode<synchronous>, transform_indices = @transform_8, window_bounds = array<i64: 4, 8, 32>}, {pipeline_mode = #tpu.pipeline_mode<synchronous>, transform_indices = @transform_9, window_bounds = array<i64: 1, 32>}, {pipeline_mode = #tpu.pipeline_mode<synchronous>, transform_indices = @transform_10, window_bounds = array<i64: 32, 64>}, {pipeline_mode = #tpu.pipeline_mode<synchronous>, transform_indices = @transform_11, window_bounds = array<i64: 1, 64>}, {pipeline_mode = #tpu.pipeline_mode<synchronous>, transform_indices = @transform_12, window_bounds = array<i64: 64, 32>}, {pipeline_mode = #tpu.pipeline_mode<synchronous>, transform_indices = @transform_13, window_bounds = array<i64: 1, 32>}, {pipeline_mode = #tpu.pipeline_mode<synchronous>, transform_indices = @transform_14, window_bounds = array<i64: 1, 32>}, {pipeline_mode = #tpu.pipeline_mode<synchronous>, transform_indices = @transform_15, window_bounds = array<i64: 1, 32>}, {pipeline_mode = #tpu.pipeline_mode<synchronous>, transform_indices = @transform_16, window_bounds = array<i64: 1, 32>}, {pipeline_mode = #tpu.pipeline_mode<synchronous>, transform_indices = @transform_17, window_bounds = array<i64: 1, 32>}, {pipeline_mode = #tpu.pipeline_mode<synchronous>, transform_indices = @transform_18, window_bounds = array<i64: 1, 32>}, {pipeline_mode = #tpu.pipeline_mode<synchronous>, transform_indices = @transform_19, window_bounds = array<i64: 1, 32>}, {transform_indices = @transform_20, window_bounds = array<i64: 1, 8, 32>}]} {
    %c0 = arith.constant 0 : index
    %c0_0 = arith.constant 0 : index
    %c0_1 = arith.constant 0 : index
    %0 = vector.load %arg1[%c0, %c0_0, %c0_1] : memref<1x8x32xf32, #tpu.memory_space<vmem>>, vector<1x8x32xf32>
    %1 = arith.addf %0, %0 : vector<1x8x32xf32>
    %c0_2 = arith.constant 0 : index
    %c0_3 = arith.constant 0 : index
    %2 = vector.load %arg15[%c0_2, %c0_3] : memref<1x32xf32, #tpu.memory_space<vmem>>, vector<1x32xf32>
    %c0_4 = arith.constant 0 : index
    %c0_5 = arith.constant 0 : index
    %3 = vector.load %arg16[%c0_4, %c0_5] : memref<1x32xf32, #tpu.memory_space<vmem>>, vector<1x32xf32>
    %cst = arith.constant dense<0.000000e+00> : vector<1x8xf32>
    %4 = vector.multi_reduction <add>, %1, %cst [2] : vector<1x8x32xf32> to vector<1x8xf32>
    %5 = vector.shape_cast %4 : vector<1x8xf32> to vector<1x8x1xf32>
    %cst_6 = arith.constant 3.200000e+01 : f32
    %6 = vector.broadcast %cst_6 : f32 to vector<1x8x1xf32>
    %7 = arith.divf %5, %6 : vector<1x8x1xf32>
    %8 = vector.broadcast %7 : vector<1x8x1xf32> to vector<1x8x32xf32>
    %9 = arith.subf %1, %8 : vector<1x8x32xf32>
    %10 = arith.mulf %9, %9 : vector<1x8x32xf32>
    %cst_7 = arith.constant dense<0.000000e+00> : vector<1x8xf32>
    %11 = vector.multi_reduction <add>, %10, %cst_7 [2] : vector<1x8x32xf32> to vector<1x8xf32>
    %12 = vector.shape_cast %11 : vector<1x8xf32> to vector<1x8x1xf32>
    %cst_8 = arith.constant 3.200000e+01 : f32
    %13 = vector.broadcast %cst_8 : f32 to vector<1x8x1xf32>
    %14 = arith.divf %12, %13 : vector<1x8x1xf32>
    %15 = vector.broadcast %7 : vector<1x8x1xf32> to vector<1x8x32xf32>
    %16 = arith.subf %1, %15 : vector<1x8x32xf32>
    %cst_9 = arith.constant 9.99999974E-6 : f32
    %17 = vector.broadcast %cst_9 : f32 to vector<1x8x1xf32>
    %18 = arith.addf %14, %17 : vector<1x8x1xf32>
    %19 = math.rsqrt %18 : vector<1x8x1xf32>
    %20 = vector.broadcast %19 : vector<1x8x1xf32> to vector<1x8x32xf32>
    %21 = arith.mulf %16, %20 : vector<1x8x32xf32>
    %22 = vector.shape_cast %2 : vector<1x32xf32> to vector<1x1x32xf32>
    %23 = vector.broadcast %22 : vector<1x1x32xf32> to vector<1x8x32xf32>
    %24 = arith.mulf %21, %23 : vector<1x8x32xf32>
    %25 = vector.shape_cast %3 : vector<1x32xf32> to vector<1x1x32xf32>
    %26 = vector.broadcast %25 : vector<1x1x32xf32> to vector<1x8x32xf32>
    %27 = arith.addf %24, %26 : vector<1x8x32xf32>
    %28 = vector.shape_cast %27 : vector<1x8x32xf32> to vector<8x32xf32>
    %c0_10 = arith.constant 0 : index
    %c0_11 = arith.constant 0 : index
    %c0_12 = arith.constant 0 : index
    %29 = vector.load %arg2[%c0_10, %c0_11, %c0_12] : memref<1x16x32xf32, #tpu.memory_space<vmem>>, vector<1x16x32xf32>
    %30 = vector.shape_cast %29 : vector<1x16x32xf32> to vector<16x32xf32>
    %c0_13 = arith.constant 0 : index
    %c0_14 = arith.constant 0 : index
    %31 = vector.load %arg3[%c0_13, %c0_14] : memref<32x32xf32, #tpu.memory_space<vmem>>, vector<32x32xf32>
    %cst_15 = arith.constant dense<0.000000e+00> : vector<8x32xf32>
    %32 = tpu.matmul %28, %31, %cst_15 {dimension_numbers = #tpu.dot_dimension_numbers<[1], [0], [0], [1], [0, 0, 1, 1], [], []>} : vector<8x32xf32>, vector<32x32xf32>, vector<8x32xf32> -> vector<8x32xf32>
    %c0_16 = arith.constant 0 : index
    %c0_17 = arith.constant 0 : index
    %33 = vector.load %arg6[%c0_16, %c0_17] : memref<1x32xf32, #tpu.memory_space<vmem>>, vector<1x32xf32>
    %34 = vector.broadcast %33 : vector<1x32xf32> to vector<8x32xf32>
    %35 = arith.addf %32, %34 : vector<8x32xf32>
    %c0_18 = arith.constant 0 : index
    %c0_19 = arith.constant 0 : index
    %36 = vector.load %arg4[%c0_18, %c0_19] : memref<32x32xf32, #tpu.memory_space<vmem>>, vector<32x32xf32>
    %cst_20 = arith.constant dense<0.000000e+00> : vector<16x32xf32>
    %37 = tpu.matmul %30, %36, %cst_20 {dimension_numbers = #tpu.dot_dimension_numbers<[1], [0], [0], [1], [0, 0, 1, 1], [], []>} : vector<16x32xf32>, vector<32x32xf32>, vector<16x32xf32> -> vector<16x32xf32>
    %c0_21 = arith.constant 0 : index
    %c0_22 = arith.constant 0 : index
    %38 = vector.load %arg7[%c0_21, %c0_22] : memref<1x32xf32, #tpu.memory_space<vmem>>, vector<1x32xf32>
    %39 = vector.broadcast %38 : vector<1x32xf32> to vector<16x32xf32>
    %40 = arith.addf %37, %39 : vector<16x32xf32>
    %c0_23 = arith.constant 0 : index
    %c0_24 = arith.constant 0 : index
    %41 = vector.load %arg5[%c0_23, %c0_24] : memref<32x32xf32, #tpu.memory_space<vmem>>, vector<32x32xf32>
    %cst_25 = arith.constant dense<0.000000e+00> : vector<16x32xf32>
    %42 = tpu.matmul %30, %41, %cst_25 {dimension_numbers = #tpu.dot_dimension_numbers<[1], [0], [0], [1], [0, 0, 1, 1], [], []>} : vector<16x32xf32>, vector<32x32xf32>, vector<16x32xf32> -> vector<16x32xf32>
    %c0_26 = arith.constant 0 : index
    %c0_27 = arith.constant 0 : index
    %43 = vector.load %arg8[%c0_26, %c0_27] : memref<1x32xf32, #tpu.memory_space<vmem>>, vector<1x32xf32>
    %44 = vector.broadcast %43 : vector<1x32xf32> to vector<16x32xf32>
    %45 = arith.addf %42, %44 : vector<16x32xf32>
    %46 = vector.shape_cast %35 : vector<8x32xf32> to vector<1x8x32xf32>
    %47 = vector.shape_cast %40 : vector<16x32xf32> to vector<1x16x32xf32>
    %48 = vector.shape_cast %45 : vector<16x32xf32> to vector<1x16x32xf32>
    %49 = vector.extract_strided_slice %46 {offsets = [0, 0, 0], sizes = [1, 8, 8], strides = [1, 1, 1]} : vector<1x8x32xf32> to vector<1x8x8xf32>
    %50 = vector.extract_strided_slice %47 {offsets = [0, 0, 0], sizes = [1, 16, 8], strides = [1, 1, 1]} : vector<1x16x32xf32> to vector<1x16x8xf32>
    %51 = vector.extract_strided_slice %48 {offsets = [0, 0, 0], sizes = [1, 16, 8], strides = [1, 1, 1]} : vector<1x16x32xf32> to vector<1x16x8xf32>
    "tpu.trace_start"() <{level = 10 : i32, message = "bld,bsd->bls"}> : () -> ()
    %cst_28 = arith.constant dense<0.000000e+00> : vector<1x8x16xf32>
    %52 = tpu.matmul %49, %50, %cst_28 {dimension_numbers = #tpu.dot_dimension_numbers<[2], [2], [1], [1], [0, 0, 0, 1, 1, 1], [0], [0]>} : vector<1x8x8xf32>, vector<1x16x8xf32>, vector<1x8x16xf32> -> vector<1x8x16xf32>
    "tpu.trace_stop"() : () -> ()
    %cst_29 = arith.constant dense<0xFF800000> : vector<1x8xf32>
    %53 = vector.multi_reduction <maximumf>, %52, %cst_29 [2] : vector<1x8x16xf32> to vector<1x8xf32>
    %54 = vector.shape_cast %53 : vector<1x8xf32> to vector<1x8x1xf32>
    %55 = vector.broadcast %54 : vector<1x8x1xf32> to vector<1x8x16xf32>
    %56 = arith.subf %52, %55 : vector<1x8x16xf32>
    %57 = math.exp %56 : vector<1x8x16xf32>
    %cst_30 = arith.constant dense<0.000000e+00> : vector<1x8xf32>
    %58 = vector.multi_reduction <add>, %57, %cst_30 [2] : vector<1x8x16xf32> to vector<1x8xf32>
    %59 = vector.shape_cast %58 : vector<1x8xf32> to vector<1x8x1xf32>
    %60 = tpu.reciprocal %59 : vector<1x8x1xf32> -> vector<1x8x1xf32>
    %61 = vector.broadcast %60 : vector<1x8x1xf32> to vector<1x8x16xf32>
    %62 = arith.mulf %57, %61 : vector<1x8x16xf32>
    "tpu.trace_start"() <{level = 10 : i32, message = "bls,bsd->bld"}> : () -> ()
    %cst_31 = arith.constant dense<0.000000e+00> : vector<1x8x8xf32>
    %63 = tpu.matmul %62, %51, %cst_31 {dimension_numbers = #tpu.dot_dimension_numbers<[2], [1], [1], [2], [0, 0, 0, 1, 1, 2], [0], [0]>} : vector<1x8x16xf32>, vector<1x16x8xf32>, vector<1x8x8xf32> -> vector<1x8x8xf32>
    "tpu.trace_stop"() : () -> ()
    %c0_32 = arith.constant 0 : index
    %c0_33 = arith.constant 0 : index
    %c0_34 = arith.constant 0 : index
    %c0_35 = arith.constant 0 : index
    %64 = vector.load %arg22[%c0_32, %c0_33, %c0_34, %c0_35] : memref<4x1x8x8xf32, #tpu.memory_space<vmem>>, vector<1x1x8x8xf32>
    %65 = vector.shape_cast %64 : vector<1x1x8x8xf32> to vector<1x8x8xf32>
    %66 = vector.shape_cast %63 : vector<1x8x8xf32> to vector<1x1x8x8xf32>
    tpu.vector_store %arg22[%c0_32, %c0_33, %c0_34, %c0_35], %66 {strides = array<i32>} : memref<4x1x8x8xf32, #tpu.memory_space<vmem>>, vector<1x1x8x8xf32>,
    %67 = vector.extract_strided_slice %46 {offsets = [0, 0, 8], sizes = [1, 8, 8], strides = [1, 1, 1]} : vector<1x8x32xf32> to vector<1x8x8xf32>
    %68 = vector.extract_strided_slice %47 {offsets = [0, 0, 8], sizes = [1, 16, 8], strides = [1, 1, 1]} : vector<1x16x32xf32> to vector<1x16x8xf32>
    %69 = vector.extract_strided_slice %48 {offsets = [0, 0, 8], sizes = [1, 16, 8], strides = [1, 1, 1]} : vector<1x16x32xf32> to vector<1x16x8xf32>
    "tpu.trace_start"() <{level = 10 : i32, message = "bld,bsd->bls"}> : () -> ()
    %cst_36 = arith.constant dense<0.000000e+00> : vector<1x8x16xf32>
    %70 = tpu.matmul %67, %68, %cst_36 {dimension_numbers = #tpu.dot_dimension_numbers<[2], [2], [1], [1], [0, 0, 0, 1, 1, 1], [0], [0]>} : vector<1x8x8xf32>, vector<1x16x8xf32>, vector<1x8x16xf32> -> vector<1x8x16xf32>
    "tpu.trace_stop"() : () -> ()
    %cst_37 = arith.constant dense<0xFF800000> : vector<1x8xf32>
    %71 = vector.multi_reduction <maximumf>, %70, %cst_37 [2] : vector<1x8x16xf32> to vector<1x8xf32>
    %72 = vector.shape_cast %71 : vector<1x8xf32> to vector<1x8x1xf32>
    %73 = vector.broadcast %72 : vector<1x8x1xf32> to vector<1x8x16xf32>
    %74 = arith.subf %70, %73 : vector<1x8x16xf32>
    %75 = math.exp %74 : vector<1x8x16xf32>
    %cst_38 = arith.constant dense<0.000000e+00> : vector<1x8xf32>
    %76 = vector.multi_reduction <add>, %75, %cst_38 [2] : vector<1x8x16xf32> to vector<1x8xf32>
    %77 = vector.shape_cast %76 : vector<1x8xf32> to vector<1x8x1xf32>
    %78 = tpu.reciprocal %77 : vector<1x8x1xf32> -> vector<1x8x1xf32>
    %79 = vector.broadcast %78 : vector<1x8x1xf32> to vector<1x8x16xf32>
    %80 = arith.mulf %75, %79 : vector<1x8x16xf32>
    "tpu.trace_start"() <{level = 10 : i32, message = "bls,bsd->bld"}> : () -> ()
    %cst_39 = arith.constant dense<0.000000e+00> : vector<1x8x8xf32>
    %81 = tpu.matmul %80, %69, %cst_39 {dimension_numbers = #tpu.dot_dimension_numbers<[2], [1], [1], [2], [0, 0, 0, 1, 1, 2], [0], [0]>} : vector<1x8x16xf32>, vector<1x16x8xf32>, vector<1x8x8xf32> -> vector<1x8x8xf32>
    "tpu.trace_stop"() : () -> ()
    %c1 = arith.constant 1 : index
    %c0_40 = arith.constant 0 : index
    %c0_41 = arith.constant 0 : index
    %c0_42 = arith.constant 0 : index
    %82 = vector.load %arg22[%c1, %c0_40, %c0_41, %c0_42] : memref<4x1x8x8xf32, #tpu.memory_space<vmem>>, vector<1x1x8x8xf32>
    %83 = vector.shape_cast %82 : vector<1x1x8x8xf32> to vector<1x8x8xf32>
    %84 = vector.shape_cast %81 : vector<1x8x8xf32> to vector<1x1x8x8xf32>
    tpu.vector_store %arg22[%c1, %c0_40, %c0_41, %c0_42], %84 {strides = array<i32>} : memref<4x1x8x8xf32, #tpu.memory_space<vmem>>, vector<1x1x8x8xf32>,
    %85 = vector.extract_strided_slice %46 {offsets = [0, 0, 16], sizes = [1, 8, 8], strides = [1, 1, 1]} : vector<1x8x32xf32> to vector<1x8x8xf32>
    %86 = vector.extract_strided_slice %47 {offsets = [0, 0, 16], sizes = [1, 16, 8], strides = [1, 1, 1]} : vector<1x16x32xf32> to vector<1x16x8xf32>
    %87 = vector.extract_strided_slice %48 {offsets = [0, 0, 16], sizes = [1, 16, 8], strides = [1, 1, 1]} : vector<1x16x32xf32> to vector<1x16x8xf32>
    "tpu.trace_start"() <{level = 10 : i32, message = "bld,bsd->bls"}> : () -> ()
    %cst_43 = arith.constant dense<0.000000e+00> : vector<1x8x16xf32>
    %88 = tpu.matmul %85, %86, %cst_43 {dimension_numbers = #tpu.dot_dimension_numbers<[2], [2], [1], [1], [0, 0, 0, 1, 1, 1], [0], [0]>} : vector<1x8x8xf32>, vector<1x16x8xf32>, vector<1x8x16xf32> -> vector<1x8x16xf32>
    "tpu.trace_stop"() : () -> ()
    %cst_44 = arith.constant dense<0xFF800000> : vector<1x8xf32>
    %89 = vector.multi_reduction <maximumf>, %88, %cst_44 [2] : vector<1x8x16xf32> to vector<1x8xf32>
    %90 = vector.shape_cast %89 : vector<1x8xf32> to vector<1x8x1xf32>
    %91 = vector.broadcast %90 : vector<1x8x1xf32> to vector<1x8x16xf32>
    %92 = arith.subf %88, %91 : vector<1x8x16xf32>
    %93 = math.exp %92 : vector<1x8x16xf32>
    %cst_45 = arith.constant dense<0.000000e+00> : vector<1x8xf32>
    %94 = vector.multi_reduction <add>, %93, %cst_45 [2] : vector<1x8x16xf32> to vector<1x8xf32>
    %95 = vector.shape_cast %94 : vector<1x8xf32> to vector<1x8x1xf32>
    %96 = tpu.reciprocal %95 : vector<1x8x1xf32> -> vector<1x8x1xf32>
    %97 = vector.broadcast %96 : vector<1x8x1xf32> to vector<1x8x16xf32>
    %98 = arith.mulf %93, %97 : vector<1x8x16xf32>
    "tpu.trace_start"() <{level = 10 : i32, message = "bls,bsd->bld"}> : () -> ()
    %cst_46 = arith.constant dense<0.000000e+00> : vector<1x8x8xf32>
    %99 = tpu.matmul %98, %87, %cst_46 {dimension_numbers = #tpu.dot_dimension_numbers<[2], [1], [1], [2], [0, 0, 0, 1, 1, 2], [0], [0]>} : vector<1x8x16xf32>, vector<1x16x8xf32>, vector<1x8x8xf32> -> vector<1x8x8xf32>
    "tpu.trace_stop"() : () -> ()
    %c2 = arith.constant 2 : index
    %c0_47 = arith.constant 0 : index
    %c0_48 = arith.constant 0 : index
    %c0_49 = arith.constant 0 : index
    %100 = vector.load %arg22[%c2, %c0_47, %c0_48, %c0_49] : memref<4x1x8x8xf32, #tpu.memory_space<vmem>>, vector<1x1x8x8xf32>
    %101 = vector.shape_cast %100 : vector<1x1x8x8xf32> to vector<1x8x8xf32>
    %102 = vector.shape_cast %99 : vector<1x8x8xf32> to vector<1x1x8x8xf32>
    tpu.vector_store %arg22[%c2, %c0_47, %c0_48, %c0_49], %102 {strides = array<i32>} : memref<4x1x8x8xf32, #tpu.memory_space<vmem>>, vector<1x1x8x8xf32>,
    %103 = vector.extract_strided_slice %46 {offsets = [0, 0, 24], sizes = [1, 8, 8], strides = [1, 1, 1]} : vector<1x8x32xf32> to vector<1x8x8xf32>
    %104 = vector.extract_strided_slice %47 {offsets = [0, 0, 24], sizes = [1, 16, 8], strides = [1, 1, 1]} : vector<1x16x32xf32> to vector<1x16x8xf32>
    %105 = vector.extract_strided_slice %48 {offsets = [0, 0, 24], sizes = [1, 16, 8], strides = [1, 1, 1]} : vector<1x16x32xf32> to vector<1x16x8xf32>
    "tpu.trace_start"() <{level = 10 : i32, message = "bld,bsd->bls"}> : () -> ()
    %cst_50 = arith.constant dense<0.000000e+00> : vector<1x8x16xf32>
    %106 = tpu.matmul %103, %104, %cst_50 {dimension_numbers = #tpu.dot_dimension_numbers<[2], [2], [1], [1], [0, 0, 0, 1, 1, 1], [0], [0]>} : vector<1x8x8xf32>, vector<1x16x8xf32>, vector<1x8x16xf32> -> vector<1x8x16xf32>
    "tpu.trace_stop"() : () -> ()
    %cst_51 = arith.constant dense<0xFF800000> : vector<1x8xf32>
    %107 = vector.multi_reduction <maximumf>, %106, %cst_51 [2] : vector<1x8x16xf32> to vector<1x8xf32>
    %108 = vector.shape_cast %107 : vector<1x8xf32> to vector<1x8x1xf32>
    %109 = vector.broadcast %108 : vector<1x8x1xf32> to vector<1x8x16xf32>
    %110 = arith.subf %106, %109 : vector<1x8x16xf32>
    %111 = math.exp %110 : vector<1x8x16xf32>
    %cst_52 = arith.constant dense<0.000000e+00> : vector<1x8xf32>
    %112 = vector.multi_reduction <add>, %111, %cst_52 [2] : vector<1x8x16xf32> to vector<1x8xf32>
    %113 = vector.shape_cast %112 : vector<1x8xf32> to vector<1x8x1xf32>
    %114 = tpu.reciprocal %113 : vector<1x8x1xf32> -> vector<1x8x1xf32>
    %115 = vector.broadcast %114 : vector<1x8x1xf32> to vector<1x8x16xf32>
    %116 = arith.mulf %111, %115 : vector<1x8x16xf32>
    "tpu.trace_start"() <{level = 10 : i32, message = "bls,bsd->bld"}> : () -> ()
    %cst_53 = arith.constant dense<0.000000e+00> : vector<1x8x8xf32>
    %117 = tpu.matmul %116, %105, %cst_53 {dimension_numbers = #tpu.dot_dimension_numbers<[2], [1], [1], [2], [0, 0, 0, 1, 1, 2], [0], [0]>} : vector<1x8x16xf32>, vector<1x16x8xf32>, vector<1x8x8xf32> -> vector<1x8x8xf32>
    "tpu.trace_stop"() : () -> ()
    %c3 = arith.constant 3 : index
    %c0_54 = arith.constant 0 : index
    %c0_55 = arith.constant 0 : index
    %c0_56 = arith.constant 0 : index
    %118 = vector.load %arg22[%c3, %c0_54, %c0_55, %c0_56] : memref<4x1x8x8xf32, #tpu.memory_space<vmem>>, vector<1x1x8x8xf32>
    %119 = vector.shape_cast %118 : vector<1x1x8x8xf32> to vector<1x8x8xf32>
    %120 = vector.shape_cast %117 : vector<1x8x8xf32> to vector<1x1x8x8xf32>
    tpu.vector_store %arg22[%c3, %c0_54, %c0_55, %c0_56], %120 {strides = array<i32>} : memref<4x1x8x8xf32, #tpu.memory_space<vmem>>, vector<1x1x8x8xf32>,
    %c0_57 = arith.constant 0 : index
    %c0_58 = arith.constant 0 : index
    %c0_59 = arith.constant 0 : index
    %c0_60 = arith.constant 0 : index
    %121 = vector.load %arg22[%c0_57, %c0_58, %c0_59, %c0_60] : memref<4x1x8x8xf32, #tpu.memory_space<vmem>>, vector<4x1x8x8xf32>
    %122 = vector.shape_cast %121 : vector<4x1x8x8xf32> to vector<4x8x8xf32>
    %c0_61 = arith.constant 0 : index
    %c0_62 = arith.constant 0 : index
    %c0_63 = arith.constant 0 : index
    %123 = vector.load %arg9[%c0_61, %c0_62, %c0_63] : memref<4x8x32xf32, #tpu.memory_space<vmem>>, vector<4x8x32xf32>
    "tpu.trace_start"() <{level = 10 : i32, message = "hmd,hde->hme"}> : () -> ()
    %cst_64 = arith.constant dense<0.000000e+00> : vector<4x8x32xf32>
    %124 = tpu.matmul %122, %123, %cst_64 {dimension_numbers = #tpu.dot_dimension_numbers<[2], [1], [1], [2], [0, 0, 0, 1, 1, 2], [0], [0]>} : vector<4x8x8xf32>, vector<4x8x32xf32>, vector<4x8x32xf32> -> vector<4x8x32xf32>
    "tpu.trace_stop"() : () -> ()
    %cst_65 = arith.constant dense<0.000000e+00> : vector<8x32xf32>
    %125 = vector.multi_reduction <add>, %124, %cst_65 [0] : vector<4x8x32xf32> to vector<8x32xf32>
    %c0_66 = arith.constant 0 : index
    %c0_67 = arith.constant 0 : index
    %126 = vector.load %arg10[%c0_66, %c0_67] : memref<1x32xf32, #tpu.memory_space<vmem>>, vector<1x32xf32>
    %127 = vector.broadcast %126 : vector<1x32xf32> to vector<8x32xf32>
    %128 = arith.addf %125, %127 : vector<8x32xf32>
    %129 = arith.addf %28, %128 : vector<8x32xf32>
    %c0_68 = arith.constant 0 : index
    %c0_69 = arith.constant 0 : index
    %130 = vector.load %arg17[%c0_68, %c0_69] : memref<1x32xf32, #tpu.memory_space<vmem>>, vector<1x32xf32>
    %c0_70 = arith.constant 0 : index
    %c0_71 = arith.constant 0 : index
    %131 = vector.load %arg18[%c0_70, %c0_71] : memref<1x32xf32, #tpu.memory_space<vmem>>, vector<1x32xf32>
    %cst_72 = arith.constant dense<0.000000e+00> : vector<8xf32>
    %132 = vector.multi_reduction <add>, %129, %cst_72 [1] : vector<8x32xf32> to vector<8xf32>
    %133 = vector.shape_cast %132 : vector<8xf32> to vector<8x1xf32>
    %cst_73 = arith.constant 3.200000e+01 : f32
    %134 = vector.broadcast %cst_73 : f32 to vector<8x1xf32>
    %135 = arith.divf %133, %134 : vector<8x1xf32>
    %136 = vector.broadcast %135 : vector<8x1xf32> to vector<8x32xf32>
    %137 = arith.subf %129, %136 : vector<8x32xf32>
    %138 = arith.mulf %137, %137 : vector<8x32xf32>
    %cst_74 = arith.constant dense<0.000000e+00> : vector<8xf32>
    %139 = vector.multi_reduction <add>, %138, %cst_74 [1] : vector<8x32xf32> to vector<8xf32>
    %140 = vector.shape_cast %139 : vector<8xf32> to vector<8x1xf32>
    %cst_75 = arith.constant 3.200000e+01 : f32
    %141 = vector.broadcast %cst_75 : f32 to vector<8x1xf32>
    %142 = arith.divf %140, %141 : vector<8x1xf32>
    %143 = vector.broadcast %135 : vector<8x1xf32> to vector<8x32xf32>
    %144 = arith.subf %129, %143 : vector<8x32xf32>
    %cst_76 = arith.constant 9.99999974E-6 : f32
    %145 = vector.broadcast %cst_76 : f32 to vector<8x1xf32>
    %146 = arith.addf %142, %145 : vector<8x1xf32>
    %147 = math.rsqrt %146 : vector<8x1xf32>
    %148 = vector.broadcast %147 : vector<8x1xf32> to vector<8x32xf32>
    %149 = arith.mulf %144, %148 : vector<8x32xf32>
    %150 = vector.broadcast %130 : vector<1x32xf32> to vector<8x32xf32>
    %151 = arith.mulf %149, %150 : vector<8x32xf32>
    %152 = vector.broadcast %131 : vector<1x32xf32> to vector<8x32xf32>
    %153 = arith.addf %151, %152 : vector<8x32xf32>
    %cst_77 = arith.constant 0.000000e+00 : f32
    %154 = vector.broadcast %cst_77 : f32 to vector<8x32xf32>
    %c0_78 = arith.constant 0 : index
    %c0_79 = arith.constant 0 : index
    %155 = vector.load %arg11[%c0_78, %c0_79] : memref<32x64xf32, #tpu.memory_space<vmem>>, vector<32x64xf32>
    %cst_80 = arith.constant dense<0.000000e+00> : vector<8x64xf32>
    %156 = tpu.matmul %153, %155, %cst_80 {dimension_numbers = #tpu.dot_dimension_numbers<[1], [0], [0], [1], [0, 0, 1, 1], [], []>} : vector<8x32xf32>, vector<32x64xf32>, vector<8x64xf32> -> vector<8x64xf32>
    %c0_81 = arith.constant 0 : index
    %c0_82 = arith.constant 0 : index
    %157 = vector.load %arg12[%c0_81, %c0_82] : memref<1x64xf32, #tpu.memory_space<vmem>>, vector<1x64xf32>
    %158 = vector.broadcast %157 : vector<1x64xf32> to vector<8x64xf32>
    %159 = arith.addf %156, %158 : vector<8x64xf32>
    %cst_83 = arith.constant 0.000000e+00 : f32
    %160 = vector.broadcast %cst_83 : f32 to vector<8x64xf32>
    %161 = arith.maximumf %159, %160 : vector<8x64xf32>
    %c0_84 = arith.constant 0 : index
    %c0_85 = arith.constant 0 : index
    %162 = vector.load %arg13[%c0_84, %c0_85] : memref<64x32xf32, #tpu.memory_space<vmem>>, vector<64x32xf32>
    %cst_86 = arith.constant dense<0.000000e+00> : vector<8x32xf32>
    %163 = tpu.matmul %161, %162, %cst_86 {dimension_numbers = #tpu.dot_dimension_numbers<[1], [0], [0], [1], [0, 0, 1, 1], [], []>} : vector<8x64xf32>, vector<64x32xf32>, vector<8x32xf32> -> vector<8x32xf32>
    %164 = arith.addf %154, %163 : vector<8x32xf32>
    %c0_87 = arith.constant 0 : index
    %c0_88 = arith.constant 0 : index
    %165 = vector.load %arg14[%c0_87, %c0_88] : memref<1x32xf32, #tpu.memory_space<vmem>>, vector<1x32xf32>
    %166 = vector.broadcast %165 : vector<1x32xf32> to vector<8x32xf32>
    %167 = arith.addf %164, %166 : vector<8x32xf32>
    %168 = arith.addf %153, %167 : vector<8x32xf32>
    %c0_89 = arith.constant 0 : index
    %c0_90 = arith.constant 0 : index
    %169 = vector.load %arg19[%c0_89, %c0_90] : memref<1x32xf32, #tpu.memory_space<vmem>>, vector<1x32xf32>
    %c0_91 = arith.constant 0 : index
    %c0_92 = arith.constant 0 : index
    %170 = vector.load %arg20[%c0_91, %c0_92] : memref<1x32xf32, #tpu.memory_space<vmem>>, vector<1x32xf32>
    %cst_93 = arith.constant dense<0.000000e+00> : vector<8xf32>
    %171 = vector.multi_reduction <add>, %168, %cst_93 [1] : vector<8x32xf32> to vector<8xf32>
    %172 = vector.shape_cast %171 : vector<8xf32> to vector<8x1xf32>
    %cst_94 = arith.constant 3.200000e+01 : f32
    %173 = vector.broadcast %cst_94 : f32 to vector<8x1xf32>
    %174 = arith.divf %172, %173 : vector<8x1xf32>
    %175 = vector.broadcast %174 : vector<8x1xf32> to vector<8x32xf32>
    %176 = arith.subf %168, %175 : vector<8x32xf32>
    %177 = arith.mulf %176, %176 : vector<8x32xf32>
    %cst_95 = arith.constant dense<0.000000e+00> : vector<8xf32>
    %178 = vector.multi_reduction <add>, %177, %cst_95 [1] : vector<8x32xf32> to vector<8xf32>
    %179 = vector.shape_cast %178 : vector<8xf32> to vector<8x1xf32>
    %cst_96 = arith.constant 3.200000e+01 : f32
    %180 = vector.broadcast %cst_96 : f32 to vector<8x1xf32>
    %181 = arith.divf %179, %180 : vector<8x1xf32>
    %182 = vector.broadcast %174 : vector<8x1xf32> to vector<8x32xf32>
    %183 = arith.subf %168, %182 : vector<8x32xf32>
    %cst_97 = arith.constant 9.99999974E-6 : f32
    %184 = vector.broadcast %cst_97 : f32 to vector<8x1xf32>
    %185 = arith.addf %181, %184 : vector<8x1xf32>
    %186 = math.rsqrt %185 : vector<8x1xf32>
    %187 = vector.broadcast %186 : vector<8x1xf32> to vector<8x32xf32>
    %188 = arith.mulf %183, %187 : vector<8x32xf32>
    %189 = vector.broadcast %169 : vector<1x32xf32> to vector<8x32xf32>
    %190 = arith.mulf %188, %189 : vector<8x32xf32>
    %191 = vector.broadcast %170 : vector<1x32xf32> to vector<8x32xf32>
    %192 = arith.addf %190, %191 : vector<8x32xf32>
    %193 = vector.shape_cast %192 : vector<8x32xf32> to vector<1x8x32xf32>
    %c0_98 = arith.constant 0 : index
    %c0_99 = arith.constant 0 : index
    %c0_100 = arith.constant 0 : index
    %194 = vector.load %arg21[%c0_98, %c0_99, %c0_100] : memref<1x8x32xf32, #tpu.memory_space<vmem>>, vector<1x8x32xf32>
    tpu.vector_store %arg21[%c0_98, %c0_99, %c0_100], %193 {strides = array<i32>} : memref<1x8x32xf32, #tpu.memory_space<vmem>>, vector<1x8x32xf32>,
    return
  }
  func.func @transform_0(%arg0: i32) -> (i32, i32, i32) {
    %c0_i32 = arith.constant 0 : i32
    %c0_i32_0 = arith.constant 0 : i32
    %c0_i32_1 = arith.constant 0 : i32
    return %arg0, %c0_i32, %c0_i32_0 : i32, i32, i32
  }
  func.func @transform_1(%arg0: i32) -> (i32, i32, i32) {
    %c0_i32 = arith.constant 0 : i32
    %c0_i32_0 = arith.constant 0 : i32
    %c0_i32_1 = arith.constant 0 : i32
    return %arg0, %c0_i32, %c0_i32_0 : i32, i32, i32
  }
  func.func @transform_2(%arg0: i32) -> (i32, i32) {
    %c0_i32 = arith.constant 0 : i32
    %c0_i32_0 = arith.constant 0 : i32
    %c0_i32_1 = arith.constant 0 : i32
    return %c0_i32, %c0_i32_0 : i32, i32
  }
  func.func @transform_3(%arg0: i32) -> (i32, i32) {
    %c0_i32 = arith.constant 0 : i32
    %c0_i32_0 = arith.constant 0 : i32
    %c0_i32_1 = arith.constant 0 : i32
    return %c0_i32, %c0_i32_0 : i32, i32
  }
  func.func @transform_4(%arg0: i32) -> (i32, i32) {
    %c0_i32 = arith.constant 0 : i32
    %c0_i32_0 = arith.constant 0 : i32
    %c0_i32_1 = arith.constant 0 : i32
    return %c0_i32, %c0_i32_0 : i32, i32
  }
  func.func @transform_5(%arg0: i32) -> (i32, i32) {
    %c0_i32 = arith.constant 0 : i32
    %c0_i32_0 = arith.constant 0 : i32
    %c0_i32_1 = arith.constant 0 : i32
    return %c0_i32, %c0_i32_0 : i32, i32
  }
  func.func @transform_6(%arg0: i32) -> (i32, i32) {
    %c0_i32 = arith.constant 0 : i32
    %c0_i32_0 = arith.constant 0 : i32
    %c0_i32_1 = arith.constant 0 : i32
    return %c0_i32, %c0_i32_0 : i32, i32
  }
  func.func @transform_7(%arg0: i32) -> (i32, i32) {
    %c0_i32 = arith.constant 0 : i32
    %c0_i32_0 = arith.constant 0 : i32
    %c0_i32_1 = arith.constant 0 : i32
    return %c0_i32, %c0_i32_0 : i32, i32
  }
  func.func @transform_8(%arg0: i32) -> (i32, i32, i32) {
    %c0_i32 = arith.constant 0 : i32
    %c0_i32_0 = arith.constant 0 : i32
    %c0_i32_1 = arith.constant 0 : i32
    %c0_i32_2 = arith.constant 0 : i32
    return %c0_i32, %c0_i32_0, %c0_i32_1 : i32, i32, i32
  }
  func.func @transform_9(%arg0: i32) -> (i32, i32) {
    %c0_i32 = arith.constant 0 : i32
    %c0_i32_0 = arith.constant 0 : i32
    %c0_i32_1 = arith.constant 0 : i32
    return %c0_i32, %c0_i32_0 : i32, i32
  }
  func.func @transform_10(%arg0: i32) -> (i32, i32) {
    %c0_i32 = arith.constant 0 : i32
    %c0_i32_0 = arith.constant 0 : i32
    %c0_i32_1 = arith.constant 0 : i32
    return %c0_i32, %c0_i32_0 : i32, i32
  }
  func.func @transform_11(%arg0: i32) -> (i32, i32) {
    %c0_i32 = arith.constant 0 : i32
    %c0_i32_0 = arith.constant 0 : i32
    %c0_i32_1 = arith.constant 0 : i32
    return %c0_i32, %c0_i32_0 : i32, i32
  }
  func.func @transform_12(%arg0: i32) -> (i32, i32) {
    %c0_i32 = arith.constant 0 : i32
    %c0_i32_0 = arith.constant 0 : i32
    %c0_i32_1 = arith.constant 0 : i32
    return %c0_i32, %c0_i32_0 : i32, i32
  }
  func.func @transform_13(%arg0: i32) -> (i32, i32) {
    %c0_i32 = arith.constant 0 : i32
    %c0_i32_0 = arith.constant 0 : i32
    %c0_i32_1 = arith.constant 0 : i32
    return %c0_i32, %c0_i32_0 : i32, i32
  }
  func.func @transform_14(%arg0: i32) -> (i32, i32) {
    %c0_i32 = arith.constant 0 : i32
    %c0_i32_0 = arith.constant 0 : i32
    %c0_i32_1 = arith.constant 0 : i32
    return %c0_i32, %c0_i32_0 : i32, i32
  }
  func.func @transform_15(%arg0: i32) -> (i32, i32) {
    %c0_i32 = arith.constant 0 : i32
    %c0_i32_0 = arith.constant 0 : i32
    %c0_i32_1 = arith.constant 0 : i32
    return %c0_i32, %c0_i32_0 : i32, i32
  }
  func.func @transform_16(%arg0: i32) -> (i32, i32) {
    %c0_i32 = arith.constant 0 : i32
    %c0_i32_0 = arith.constant 0 : i32
    %c0_i32_1 = arith.constant 0 : i32
    return %c0_i32, %c0_i32_0 : i32, i32
  }
  func.func @transform_17(%arg0: i32) -> (i32, i32) {
    %c0_i32 = arith.constant 0 : i32
    %c0_i32_0 = arith.constant 0 : i32
    %c0_i32_1 = arith.constant 0 : i32
    return %c0_i32, %c0_i32_0 : i32, i32
  }
  func.func @transform_18(%arg0: i32) -> (i32, i32) {
    %c0_i32 = arith.constant 0 : i32
    %c0_i32_0 = arith.constant 0 : i32
    %c0_i32_1 = arith.constant 0 : i32
    return %c0_i32, %c0_i32_0 : i32, i32
  }
  func.func @transform_19(%arg0: i32) -> (i32, i32) {
    %c0_i32 = arith.constant 0 : i32
    %c0_i32_0 = arith.constant 0 : i32
    %c0_i32_1 = arith.constant 0 : i32
    return %c0_i32, %c0_i32_0 : i32, i32
  }
  func.func @transform_20(%arg0: i32) -> (i32, i32, i32) {
    %c0_i32 = arith.constant 0 : i32
    %c0_i32_0 = arith.constant 0 : i32
    %c0_i32_1 = arith.constant 0 : i32
    return %arg0, %c0_i32, %c0_i32_0 : i32, i32, i32
  }
}

</mosaic_0001>

<llo_original>
// kernel: tpu_custom_call.1
$region0: #{tpu_custom_call.1}
  #allocation0 [shape = 'u32[]', space=smem, size = 0x4, offset = 0x4, fixed_abs, tag = 'smem constant byte address 0x4 - core index']
  #allocation1 [shape = 'u32[72,128]{1,0:T(1,128)}', space=vmem, size = 0x9000, scoped, tag = 'internal scratch']
  #allocation2 [shape = 'f32[4,1,8,8]{3,2,1,0:T(8,128)}', space=vmem, size = 0x4000, scoped, tag = 'scratch operand']
  %s0 = inlined_call_operand.vmem [shape: f32[4,8,32], index: 0, kind: input, shape index: {}]
  %s1 = inlined_call_operand.vmem [shape: f32[4,16,32], index: 1, kind: input, shape index: {}]
  %s2 = inlined_call_operand.hbm [shape: f32[32,32], index: 2, kind: input, shape index: {}]
  %s3 = inlined_call_operand.hbm [shape: f32[32,32], index: 3, kind: input, shape index: {}]
  %s4 = inlined_call_operand.hbm [shape: f32[32,32], index: 4, kind: input, shape index: {}]
  %s5 = inlined_call_operand.vmem [shape: f32[1,32], index: 5, kind: input, shape index: {}]
  %s6 = inlined_call_operand.vmem [shape: f32[1,32], index: 6, kind: input, shape index: {}]
  %s7 = inlined_call_operand.vmem [shape: f32[1,32], index: 7, kind: input, shape index: {}]
  %s8 = inlined_call_operand.hbm [shape: f32[4,8,32], index: 8, kind: input, shape index: {}]
  %s9 = inlined_call_operand.vmem [shape: f32[1,32], index: 9, kind: input, shape index: {}]
  %s10 = inlined_call_operand.hbm [shape: f32[32,64], index: 10, kind: input, shape index: {}]
  %s11 = inlined_call_operand.vmem [shape: f32[1,64], index: 11, kind: input, shape index: {}]
  %s12 = inlined_call_operand.vmem [shape: f32[64,32], index: 12, kind: input, shape index: {}]
  %s13 = inlined_call_operand.vmem [shape: f32[1,32], index: 13, kind: input, shape index: {}]
  %s14 = inlined_call_operand.vmem [shape: f32[1,32], index: 14, kind: input, shape index: {}]
  %s15 = inlined_call_operand.vmem [shape: f32[1,32], index: 15, kind: input, shape index: {}]
  %s16 = inlined_call_operand.vmem [shape: f32[1,32], index: 16, kind: input, shape index: {}]
  %s17 = inlined_call_operand.vmem [shape: f32[1,32], index: 17, kind: input, shape index: {}]
  %s18 = inlined_call_operand.vmem [shape: f32[1,32], index: 18, kind: input, shape index: {}]
  %s19 = inlined_call_operand.vmem [shape: f32[1,32], index: 19, kind: input, shape index: {}]
  %s20 = inlined_call_operand.hbm [shape: f32[4,8,32], index: 20, kind: output, shape index: {}]
  %s21 = sld [smem:[#allocation0]]
  $region133: #{tpu_custom_call.1} parent=0
    _
  %s23 = ssub.s32 1, %s21
  %s24 = scalar_select 0, %s23, %s21
  $region1: #{tpu_custom_call.1} parent=0
    #allocation3 [shape = 'u8[16384]{0}', space=vmem, size = 0x4000, scoped, tag = 'input window, operand 2, single buffered']
    #allocation4 [shape = 's32[2]{0}', space=sflag, size = 0x8, scoped, tag = 'scoped memory for tpu_custom_call.1']
    #allocation5 [shape = 's32[2]{0}', space=sflag, size = 0x8, scoped, tag = 'scoped memory for tpu_custom_call.1']
    #allocation6 [shape = 'u8[16384]{0}', space=vmem, size = 0x4000, scoped, tag = 'input window, operand 3, single buffered']
    #allocation7 [shape = 's32[1]{0}', space=sflag, size = 0x4, scoped, tag = 'scoped memory for tpu_custom_call.1']
    #allocation8 [shape = 'u8[16384]{0}', space=vmem, size = 0x4000, scoped, tag = 'input window, operand 4, single buffered']
    #allocation9 [shape = 'u8[16384]{0}', space=vmem, size = 0x4000, scoped, tag = 'input window, operand 8, single buffered']
    #allocation10 [shape = 's32[1]{0}', space=sflag, size = 0x4, scoped, tag = 'scoped memory for tpu_custom_call.1']
    #allocation11 [shape = 'u8[16384]{0}', space=vmem, size = 0x4000, scoped, tag = 'input window, operand 10, single buffered']
    #allocation12 [shape = 'u8[8192]{0}', space=vmem, size = 0x2000, scoped, tag = 'output window, operand 0']
    %25 = vsyncpa [#allocation4], 0
    %26 = vsyncpa [#allocation7], 0
    %27 = vsyncpa [#allocation10], 0
    %28 = vsyncpa [#allocation5], 0
    %s29 = scalar_lea.sflag [#allocation5], 1
    %30 = vsyncpa %s29, 0
    loop: start=0, step=1, limit=6
    $region2: #{tpu_custom_call.1} parent=1 // loop_pre_header
      _
    $region3: #{tpu_custom_call.1} parent=1 // loop_header
      %s32 = sphi 0, %s36
      %p33 = scmp.ge.s32.totalorder %s32, 6
      %s42 = sphi 0, %s44
      %s45 = sphi 0, %s42
      %s46 = sphi 0, %s45
      %s62 = sphi 0, %s46
      %s68 = sphi 0, %s70
      %s71 = sphi 0, %s68
      %s72 = sphi 0, %s71
      %s88 = sphi 0, %s72
      %s92 = sphi 0, %s92
      %s94 = sphi 0, %s92
      %s95 = sphi 0, %s94
      %s109 = sphi 0, %s95
      %s113 = sphi 0, %s113
      %s115 = sphi 0, %s113
      %s116 = sphi 0, %s115
      %s130 = sphi 0, %s116
      %s134 = sphi 0, %s134
      %s136 = sphi 0, %s134
      %s137 = sphi 0, %s136
      %s151 = sphi 0, %s137
      %s155 = sphi 0, %s155
      %s157 = sphi 0, %s155
      %s158 = sphi 0, %s157
      %s172 = sphi 0, %s158
      %s176 = sphi 0, %s176
      %s178 = sphi 0, %s176
      %s179 = sphi 0, %s178
      %s193 = sphi 0, %s179
      %s197 = sphi 0, %s197
      %s199 = sphi 0, %s197
      %s200 = sphi 0, %s199
      %s214 = sphi 0, %s200
      %s218 = sphi 0, %s218
      %s220 = sphi 0, %s218
      %s221 = sphi 0, %s220
      %s235 = sphi 0, %s221
      %s239 = sphi 0, %s239
      %s241 = sphi 0, %s239
      %s242 = sphi 0, %s241
      %s256 = sphi 0, %s242
      %s260 = sphi 0, %s260
      %s262 = sphi 0, %s260
      %s263 = sphi 0, %s262
      %s277 = sphi 0, %s263
      %s281 = sphi 0, %s281
      %s283 = sphi 0, %s281
      %s284 = sphi 0, %s283
      %s298 = sphi 0, %s284
      %s302 = sphi 0, %s302
      %s304 = sphi 0, %s302
      %s305 = sphi 0, %s304
      %s319 = sphi 0, %s305
      %s323 = sphi 0, %s323
      %s325 = sphi 0, %s323
      %s326 = sphi 0, %s325
      %s340 = sphi 0, %s326
      %s344 = sphi 0, %s344
      %s346 = sphi 0, %s344
      %s347 = sphi 0, %s346
      %s361 = sphi 0, %s347
      %s365 = sphi 0, %s365
      %s367 = sphi 0, %s365
      %s368 = sphi 0, %s367
      %s382 = sphi 0, %s368
      %s386 = sphi 0, %s386
      %s388 = sphi 0, %s386
      %s389 = sphi 0, %s388
      %s403 = sphi 0, %s389
      %s407 = sphi 0, %s407
      %s409 = sphi 0, %s407
      %s410 = sphi 0, %s409
      %s424 = sphi 0, %s410
      %s428 = sphi 0, %s428
      %s430 = sphi 0, %s428
      %s431 = sphi 0, %s430
      %s445 = sphi 0, %s431
      %s449 = sphi 0, %s449
      %s451 = sphi 0, %s449
      %s452 = sphi 0, %s451
      %s466 = sphi 0, %s452
      %s472 = sphi 0, %s474
      %s475 = sphi 0, %s472
      %s476 = sphi 0, %s475
      %s492 = sphi 0, %s476
    $region4: #{tpu_custom_call.1} parent=1 // loop_header_branch
      %35 = sbr.rel (%p33) target = $region8
    $region5: #{tpu_custom_call.1} parent=1 // loop_body
      %s37 = ssub.s32 %s32, 1
      %s38 = ssub.s32 %s32, 2
      %s39 = sadd.s32 %s32, 1
      %s40 = ssub.s32 %s32, %s39
      %p41 = scmp.eq.s32.totalorder %s40, 0
      %s43 = sadd.s32 %s42, 1
      %s44 = scalar_select %p41, %s42, %s43
      %p47 = pneg %p41
      %p48 = scmp.eq.s32.totalorder %s32, 3
      %p49 = por %p47, %p48
      %p50 = scmp.ne.s32.totalorder %s42, %s45
      %p51 = scmp.eq.s32.totalorder %s32, 0
      %p52 = por %p50, %p51
      %p53 = scmp.ne.s32.totalorder %s42, %s45
      %p54 = scmp.eq.s32.totalorder %s37, 3
      %p55 = por %p53, %p54
      %p56 = scmp.ne.s32.totalorder %s45, %s46
      %p57 = scmp.eq.s32.totalorder %s37, 0
      %p58 = por %p56, %p57
      %p59 = scmp.ne.s32.totalorder %s45, %s46
      %p60 = scmp.eq.s32.totalorder %s38, 3
      %p61 = por %p59, %p60
      %p63 = scmp.ne.s32.totalorder %s46, %s62
      %p64 = scmp.eq.s32.totalorder %s38, 0
      %p65 = por %p63, %p64
      %s66 = ssub.s32 %s32, %s39
      %p67 = scmp.eq.s32.totalorder %s66, 0
      %s69 = sadd.s32 %s68, 1
      %s70 = scalar_select %p67, %s68, %s69
      %p73 = pneg %p67
      %p74 = scmp.eq.s32.totalorder %s32, 3
      %p75 = por %p73, %p74
      %p76 = scmp.ne.s32.totalorder %s68, %s71
      %p77 = scmp.eq.s32.totalorder %s32, 0
      %p78 = por %p76, %p77
      %p79 = scmp.ne.s32.totalorder %s68, %s71
      %p80 = scmp.eq.s32.totalorder %s37, 3
      %p81 = por %p79, %p80
      %p82 = scmp.ne.s32.totalorder %s71, %s72
      %p83 = scmp.eq.s32.totalorder %s37, 0
      %p84 = por %p82, %p83
      %p85 = scmp.ne.s32.totalorder %s71, %s72
      %p86 = scmp.eq.s32.totalorder %s38, 3
      %p87 = por %p85, %p86
      %p89 = scmp.ne.s32.totalorder %s72, %s88
      %p90 = scmp.eq.s32.totalorder %s38, 0
      %p91 = por %p89, %p90
      %s93 = sadd.s32 %s92, 1
      %p96 = scmp.eq.s32.totalorder %s32, 3
      %p97 = scmp.ne.s32.totalorder %s92, %s94
      %p98 = scmp.eq.s32.totalorder %s32, 0
      %p99 = por %p97, %p98
      %p100 = scmp.ne.s32.totalorder %s92, %s94
      %p101 = scmp.eq.s32.totalorder %s37, 3
      %p102 = por %p100, %p101
      %p103 = scmp.ne.s32.totalorder %s94, %s95
      %p104 = scmp.eq.s32.totalorder %s37, 0
      %p105 = por %p103, %p104
      %p106 = scmp.ne.s32.totalorder %s94, %s95
      %p107 = scmp.eq.s32.totalorder %s38, 3
      %p108 = por %p106, %p107
      %p110 = scmp.ne.s32.totalorder %s95, %s109
      %p111 = scmp.eq.s32.totalorder %s38, 0
      %p112 = por %p110, %p111
      %s114 = sadd.s32 %s113, 1
      %p117 = scmp.eq.s32.totalorder %s32, 3
      %p118 = scmp.ne.s32.totalorder %s113, %s115
      %p119 = scmp.eq.s32.totalorder %s32, 0
      %p120 = por %p118, %p119
      %p121 = scmp.ne.s32.totalorder %s113, %s115
      %p122 = scmp.eq.s32.totalorder %s37, 3
      %p123 = por %p121, %p122
      %p124 = scmp.ne.s32.totalorder %s115, %s116
      %p125 = scmp.eq.s32.totalorder %s37, 0
      %p126 = por %p124, %p125
      %p127 = scmp.ne.s32.totalorder %s115, %s116
      %p128 = scmp.eq.s32.totalorder %s38, 3
      %p129 = por %p127, %p128
      %p131 = scmp.ne.s32.totalorder %s116, %s130
      %p132 = scmp.eq.s32.totalorder %s38, 0
      %p133 = por %p131, %p132
      %s135 = sadd.s32 %s134, 1
      %p138 = scmp.eq.s32.totalorder %s32, 3
      %p139 = scmp.ne.s32.totalorder %s134, %s136
      %p140 = scmp.eq.s32.totalorder %s32, 0
      %p141 = por %p139, %p140
      %p142 = scmp.ne.s32.totalorder %s134, %s136
      %p143 = scmp.eq.s32.totalorder %s37, 3
      %p144 = por %p142, %p143
      %p145 = scmp.ne.s32.totalorder %s136, %s137
      %p146 = scmp.eq.s32.totalorder %s37, 0
      %p147 = por %p145, %p146
      %p148 = scmp.ne.s32.totalorder %s136, %s137
      %p149 = scmp.eq.s32.totalorder %s38, 3
      %p150 = por %p148, %p149
      %p152 = scmp.ne.s32.totalorder %s137, %s151
      %p153 = scmp.eq.s32.totalorder %s38, 0
      %p154 = por %p152, %p153
      %s156 = sadd.s32 %s155, 1
      %p159 = scmp.eq.s32.totalorder %s32, 3
      %p160 = scmp.ne.s32.totalorder %s155, %s157
      %p161 = scmp.eq.s32.totalorder %s32, 0
      %p162 = por %p160, %p161
      %p163 = scmp.ne.s32.totalorder %s155, %s157
      %p164 = scmp.eq.s32.totalorder %s37, 3
      %p165 = por %p163, %p164
      %p166 = scmp.ne.s32.totalorder %s157, %s158
      %p167 = scmp.eq.s32.totalorder %s37, 0
      %p168 = por %p166, %p167
      %p169 = scmp.ne.s32.totalorder %s157, %s158
      %p170 = scmp.eq.s32.totalorder %s38, 3
      %p171 = por %p169, %p170
      %p173 = scmp.ne.s32.totalorder %s158, %s172
      %p174 = scmp.eq.s32.totalorder %s38, 0
      %p175 = por %p173, %p174
      %s177 = sadd.s32 %s176, 1
      %p180 = scmp.eq.s32.totalorder %s32, 3
      %p181 = scmp.ne.s32.totalorder %s176, %s178
      %p182 = scmp.eq.s32.totalorder %s32, 0
      %p183 = por %p181, %p182
      %p184 = scmp.ne.s32.totalorder %s176, %s178
      %p185 = scmp.eq.s32.totalorder %s37, 3
      %p186 = por %p184, %p185
      %p187 = scmp.ne.s32.totalorder %s178, %s179
      %p188 = scmp.eq.s32.totalorder %s37, 0
      %p189 = por %p187, %p188
      %p190 = scmp.ne.s32.totalorder %s178, %s179
      %p191 = scmp.eq.s32.totalorder %s38, 3
      %p192 = por %p190, %p191
      %p194 = scmp.ne.s32.totalorder %s179, %s193
      %p195 = scmp.eq.s32.totalorder %s38, 0
      %p196 = por %p194, %p195
      %s198 = sadd.s32 %s197, 1
      %p201 = scmp.eq.s32.totalorder %s32, 3
      %p202 = scmp.ne.s32.totalorder %s197, %s199
      %p203 = scmp.eq.s32.totalorder %s32, 0
      %p204 = por %p202, %p203
      %p205 = scmp.ne.s32.totalorder %s197, %s199
      %p206 = scmp.eq.s32.totalorder %s37, 3
      %p207 = por %p205, %p206
      %p208 = scmp.ne.s32.totalorder %s199, %s200
      %p209 = scmp.eq.s32.totalorder %s37, 0
      %p210 = por %p208, %p209
      %p211 = scmp.ne.s32.totalorder %s199, %s200
      %p212 = scmp.eq.s32.totalorder %s38, 3
      %p213 = por %p211, %p212
      %p215 = scmp.ne.s32.totalorder %s200, %s214
      %p216 = scmp.eq.s32.totalorder %s38, 0
      %p217 = por %p215, %p216
      %s219 = sadd.s32 %s218, 1
      %p222 = scmp.eq.s32.totalorder %s32, 3
      %p223 = scmp.ne.s32.totalorder %s218, %s220
      %p224 = scmp.eq.s32.totalorder %s32, 0
      %p225 = por %p223, %p224
      %p226 = scmp.ne.s32.totalorder %s218, %s220
      %p227 = scmp.eq.s32.totalorder %s37, 3
      %p228 = por %p226, %p227
      %p229 = scmp.ne.s32.totalorder %s220, %s221
      %p230 = scmp.eq.s32.totalorder %s37, 0
      %p231 = por %p229, %p230
      %p232 = scmp.ne.s32.totalorder %s220, %s221
      %p233 = scmp.eq.s32.totalorder %s38, 3
      %p234 = por %p232, %p233
      %p236 = scmp.ne.s32.totalorder %s221, %s235
      %p237 = scmp.eq.s32.totalorder %s38, 0
      %p238 = por %p236, %p237
      %s240 = sadd.s32 %s239, 1
      %p243 = scmp.eq.s32.totalorder %s32, 3
      %p244 = scmp.ne.s32.totalorder %s239, %s241
      %p245 = scmp.eq.s32.totalorder %s32, 0
      %p246 = por %p244, %p245
      %p247 = scmp.ne.s32.totalorder %s239, %s241
      %p248 = scmp.eq.s32.totalorder %s37, 3
      %p249 = por %p247, %p248
      %p250 = scmp.ne.s32.totalorder %s241, %s242
      %p251 = scmp.eq.s32.totalorder %s37, 0
      %p252 = por %p250, %p251
      %p253 = scmp.ne.s32.totalorder %s241, %s242
      %p254 = scmp.eq.s32.totalorder %s38, 3
      %p255 = por %p253, %p254
      %p257 = scmp.ne.s32.totalorder %s242, %s256
      %p258 = scmp.eq.s32.totalorder %s38, 0
      %p259 = por %p257, %p258
      %s261 = sadd.s32 %s260, 1
      %p264 = scmp.eq.s32.totalorder %s32, 3
      %p265 = scmp.ne.s32.totalorder %s260, %s262
      %p266 = scmp.eq.s32.totalorder %s32, 0
      %p267 = por %p265, %p266
      %p268 = scmp.ne.s32.totalorder %s260, %s262
      %p269 = scmp.eq.s32.totalorder %s37, 3
      %p270 = por %p268, %p269
      %p271 = scmp.ne.s32.totalorder %s262, %s263
      %p272 = scmp.eq.s32.totalorder %s37, 0
      %p273 = por %p271, %p272
      %p274 = scmp.ne.s32.totalorder %s262, %s263
      %p275 = scmp.eq.s32.totalorder %s38, 3
      %p276 = por %p274, %p275
      %p278 = scmp.ne.s32.totalorder %s263, %s277
      %p279 = scmp.eq.s32.totalorder %s38, 0
      %p280 = por %p278, %p279
      %s282 = sadd.s32 %s281, 1
      %p285 = scmp.eq.s32.totalorder %s32, 3
      %p286 = scmp.ne.s32.totalorder %s281, %s283
      %p287 = scmp.eq.s32.totalorder %s32, 0
      %p288 = por %p286, %p287
      %p289 = scmp.ne.s32.totalorder %s281, %s283
      %p290 = scmp.eq.s32.totalorder %s37, 3
      %p291 = por %p289, %p290
      %p292 = scmp.ne.s32.totalorder %s283, %s284
      %p293 = scmp.eq.s32.totalorder %s37, 0
      %p294 = por %p292, %p293
      %p295 = scmp.ne.s32.totalorder %s283, %s284
      %p296 = scmp.eq.s32.totalorder %s38, 3
      %p297 = por %p295, %p296
      %p299 = scmp.ne.s32.totalorder %s284, %s298
      %p300 = scmp.eq.s32.totalorder %s38, 0
      %p301 = por %p299, %p300
      %s303 = sadd.s32 %s302, 1
      %p306 = scmp.eq.s32.totalorder %s32, 3
      %p307 = scmp.ne.s32.totalorder %s302, %s304
      %p308 = scmp.eq.s32.totalorder %s32, 0
      %p309 = por %p307, %p308
      %p310 = scmp.ne.s32.totalorder %s302, %s304
      %p311 = scmp.eq.s32.totalorder %s37, 3
      %p312 = por %p310, %p311
      %p313 = scmp.ne.s32.totalorder %s304, %s305
      %p314 = scmp.eq.s32.totalorder %s37, 0
      %p315 = por %p313, %p314
      %p316 = scmp.ne.s32.totalorder %s304, %s305
      %p317 = scmp.eq.s32.totalorder %s38, 3
      %p318 = por %p316, %p317
      %p320 = scmp.ne.s32.totalorder %s305, %s319
      %p321 = scmp.eq.s32.totalorder %s38, 0
      %p322 = por %p320, %p321
      %s324 = sadd.s32 %s323, 1
      %p327 = scmp.eq.s32.totalorder %s32, 3
      %p328 = scmp.ne.s32.totalorder %s323, %s325
      %p329 = scmp.eq.s32.totalorder %s32, 0
      %p330 = por %p328, %p329
      %p331 = scmp.ne.s32.totalorder %s323, %s325
      %p332 = scmp.eq.s32.totalorder %s37, 3
      %p333 = por %p331, %p332
      %p334 = scmp.ne.s32.totalorder %s325, %s326
      %p335 = scmp.eq.s32.totalorder %s37, 0
      %p336 = por %p334, %p335
      %p337 = scmp.ne.s32.totalorder %s325, %s326
      %p338 = scmp.eq.s32.totalorder %s38, 3
      %p339 = por %p337, %p338
      %p341 = scmp.ne.s32.totalorder %s326, %s340
      %p342 = scmp.eq.s32.totalorder %s38, 0
      %p343 = por %p341, %p342
      %s345 = sadd.s32 %s344, 1
      %p348 = scmp.eq.s32.totalorder %s32, 3
      %p349 = scmp.ne.s32.totalorder %s344, %s346
      %p350 = scmp.eq.s32.totalorder %s32, 0
      %p351 = por %p349, %p350
      %p352 = scmp.ne.s32.totalorder %s344, %s346
      %p353 = scmp.eq.s32.totalorder %s37, 3
      %p354 = por %p352, %p353
      %p355 = scmp.ne.s32.totalorder %s346, %s347
      %p356 = scmp.eq.s32.totalorder %s37, 0
      %p357 = por %p355, %p356
      %p358 = scmp.ne.s32.totalorder %s346, %s347
      %p359 = scmp.eq.s32.totalorder %s38, 3
      %p360 = por %p358, %p359
      %p362 = scmp.ne.s32.totalorder %s347, %s361
      %p363 = scmp.eq.s32.totalorder %s38, 0
      %p364 = por %p362, %p363
      %s366 = sadd.s32 %s365, 1
      %p369 = scmp.eq.s32.totalorder %s32, 3
      %p370 = scmp.ne.s32.totalorder %s365, %s367
      %p371 = scmp.eq.s32.totalorder %s32, 0
      %p372 = por %p370, %p371
      %p373 = scmp.ne.s32.totalorder %s365, %s367
      %p374 = scmp.eq.s32.totalorder %s37, 3
      %p375 = por %p373, %p374
      %p376 = scmp.ne.s32.totalorder %s367, %s368
      %p377 = scmp.eq.s32.totalorder %s37, 0
      %p378 = por %p376, %p377
      %p379 = scmp.ne.s32.totalorder %s367, %s368
      %p380 = scmp.eq.s32.totalorder %s38, 3
      %p381 = por %p379, %p380
      %p383 = scmp.ne.s32.totalorder %s368, %s382
      %p384 = scmp.eq.s32.totalorder %s38, 0
      %p385 = por %p383, %p384
      %s387 = sadd.s32 %s386, 1
      %p390 = scmp.eq.s32.totalorder %s32, 3
      %p391 = scmp.ne.s32.totalorder %s386, %s388
      %p392 = scmp.eq.s32.totalorder %s32, 0
      %p393 = por %p391, %p392
      %p394 = scmp.ne.s32.totalorder %s386, %s388
      %p395 = scmp.eq.s32.totalorder %s37, 3
      %p396 = por %p394, %p395
      %p397 = scmp.ne.s32.totalorder %s388, %s389
      %p398 = scmp.eq.s32.totalorder %s37, 0
      %p399 = por %p397, %p398
      %p400 = scmp.ne.s32.totalorder %s388, %s389
      %p401 = scmp.eq.s32.totalorder %s38, 3
      %p402 = por %p400, %p401
      %p404 = scmp.ne.s32.totalorder %s389, %s403
      %p405 = scmp.eq.s32.totalorder %s38, 0
      %p406 = por %p404, %p405
      %s408 = sadd.s32 %s407, 1
      %p411 = scmp.eq.s32.totalorder %s32, 3
      %p412 = scmp.ne.s32.totalorder %s407, %s409
      %p413 = scmp.eq.s32.totalorder %s32, 0
      %p414 = por %p412, %p413
      %p415 = scmp.ne.s32.totalorder %s407, %s409
      %p416 = scmp.eq.s32.totalorder %s37, 3
      %p417 = por %p415, %p416
      %p418 = scmp.ne.s32.totalorder %s409, %s410
      %p419 = scmp.eq.s32.totalorder %s37, 0
      %p420 = por %p418, %p419
      %p421 = scmp.ne.s32.totalorder %s409, %s410
      %p422 = scmp.eq.s32.totalorder %s38, 3
      %p423 = por %p421, %p422
      %p425 = scmp.ne.s32.totalorder %s410, %s424
      %p426 = scmp.eq.s32.totalorder %s38, 0
      %p427 = por %p425, %p426
      %s429 = sadd.s32 %s428, 1
      %p432 = scmp.eq.s32.totalorder %s32, 3
      %p433 = scmp.ne.s32.totalorder %s428, %s430
      %p434 = scmp.eq.s32.totalorder %s32, 0
      %p435 = por %p433, %p434
      %p436 = scmp.ne.s32.totalorder %s428, %s430
      %p437 = scmp.eq.s32.totalorder %s37, 3
      %p438 = por %p436, %p437
      %p439 = scmp.ne.s32.totalorder %s430, %s431
      %p440 = scmp.eq.s32.totalorder %s37, 0
      %p441 = por %p439, %p440
      %p442 = scmp.ne.s32.totalorder %s430, %s431
      %p443 = scmp.eq.s32.totalorder %s38, 3
      %p444 = por %p442, %p443
      %p446 = scmp.ne.s32.totalorder %s431, %s445
      %p447 = scmp.eq.s32.totalorder %s38, 0
      %p448 = por %p446, %p447
      %s450 = sadd.s32 %s449, 1
      %p453 = scmp.eq.s32.totalorder %s32, 3
      %p454 = scmp.ne.s32.totalorder %s449, %s451
      %p455 = scmp.eq.s32.totalorder %s32, 0
      %p456 = por %p454, %p455
      %p457 = scmp.ne.s32.totalorder %s449, %s451
      %p458 = scmp.eq.s32.totalorder %s37, 3
      %p459 = por %p457, %p458
      %p460 = scmp.ne.s32.totalorder %s451, %s452
      %p461 = scmp.eq.s32.totalorder %s37, 0
      %p462 = por %p460, %p461
      %p463 = scmp.ne.s32.totalorder %s451, %s452
      %p464 = scmp.eq.s32.totalorder %s38, 3
      %p465 = por %p463, %p464
      %p467 = scmp.ne.s32.totalorder %s452, %s466
      %p468 = scmp.eq.s32.totalorder %s38, 0
      %p469 = por %p467, %p468
      %s470 = ssub.s32 %s32, %s39
      %p471 = scmp.eq.s32.totalorder %s470, 0
      %s473 = sadd.s32 %s472, 1
      %s474 = scalar_select %p471, %s472, %s473
      %p477 = pneg %p471
      %p478 = scmp.eq.s32.totalorder %s32, 3
      %p479 = por %p477, %p478
      %p480 = scmp.ne.s32.totalorder %s472, %s475
      %p481 = scmp.eq.s32.totalorder %s32, 0
      %p482 = por %p480, %p481
      %p483 = scmp.ne.s32.totalorder %s472, %s475
      %p484 = scmp.eq.s32.totalorder %s37, 3
      %p485 = por %p483, %p484
      %p486 = scmp.ne.s32.totalorder %s475, %s476
      %p487 = scmp.eq.s32.totalorder %s37, 0
      %p488 = por %p486, %p487
      %p489 = scmp.ne.s32.totalorder %s475, %s476
      %p490 = scmp.eq.s32.totalorder %s38, 3
      %p491 = por %p489, %p490
      %p493 = scmp.ne.s32.totalorder %s476, %s492
      %p494 = scmp.eq.s32.totalorder %s38, 0
      %p495 = por %p493, %p494
      %p496 = scmp.le.s32.totalorder 1, %s32
      %p497 = scmp.lt.s32.totalorder %s32, 5
      %p498 = pnand %p496, %p497
      %p499 = pneg %p498
      // Predicated region
      $region9: #{tpu_custom_call.1} parent=5 // pred_check
        _
      $region10: #{tpu_custom_call.1} parent=5 // pred_check_branch
        %501 = sbr.rel (%p498) target = $region12
      $region11: #{tpu_custom_call.1} parent=5 // pred_region
        %s502 = ssub.s32 %s32, 1
        // Predicated region
        $region13: #{tpu_custom_call.1} parent=11 // pred_check
          %p503 = pneg %p105
        $region14: #{tpu_custom_call.1} parent=11 // pred_check_branch
          %505 = sbr.rel (%p503) target = $region16
        $region15: #{tpu_custom_call.1} parent=11 // pred_region
          %507 = vsyncadd [#allocation4], 0
          %s508 = sshll.u32 %s2, 4
          %s509 = int_to_ptr.hbm [resolvable:$true] %s508
          %s510 = sshll.u32 [#allocation3], 4
          %s511 = int_to_ptr.vmem [resolvable:$true] %s510
          %516 = dma.hbm_to_vmem [thread:$0]  %s509, 512, %s511, [#allocation4], 128, 128, 8
        $region16: #{tpu_custom_call.1} parent=11 // pred_fallthru
          _
        // Predicated region
        $region17: #{tpu_custom_call.1} parent=11 // pred_check
          %p517 = pneg %p126
        $region18: #{tpu_custom_call.1} parent=11 // pred_check_branch
          %519 = sbr.rel (%p517) target = $region20
        $region19: #{tpu_custom_call.1} parent=11 // pred_region
          %521 = vsyncadd [#allocation7], 0
          %s522 = sshll.u32 %s3, 4
          %s523 = int_to_ptr.hbm [resolvable:$true] %s522
          %s524 = sshll.u32 [#allocation6], 4
          %s525 = int_to_ptr.vmem [resolvable:$true] %s524
          %530 = dma.hbm_to_vmem [thread:$0]  %s523, 512, %s525, [#allocation7], 128, 128, 8
        $region20: #{tpu_custom_call.1} parent=11 // pred_fallthru
          _
        // Predicated region
        $region21: #{tpu_custom_call.1} parent=11 // pred_check
          %p531 = pneg %p147
        $region22: #{tpu_custom_call.1} parent=11 // pred_check_branch
          %533 = sbr.rel (%p531) target = $region24
        $region23: #{tpu_custom_call.1} parent=11 // pred_region
          %535 = vsyncadd [#allocation7], 0
          %s536 = sshll.u32 %s4, 4
          %s537 = int_to_ptr.hbm [resolvable:$true] %s536
          %s538 = sshll.u32 [#allocation8], 4
          %s539 = int_to_ptr.vmem [resolvable:$true] %s538
          %544 = dma.hbm_to_vmem [thread:$0]  %s537, 512, %s539, [#allocation7], 128, 128, 8
        $region24: #{tpu_custom_call.1} parent=11 // pred_fallthru
          _
        // Predicated region
        $region25: #{tpu_custom_call.1} parent=11 // pred_check
          %p545 = pneg %p168
        $region26: #{tpu_custom_call.1} parent=11 // pred_check_branch
          %547 = sbr.rel (%p545) target = $region28
        $region27: #{tpu_custom_call.1} parent=11 // pred_region
          _
        $region28: #{tpu_custom_call.1} parent=11 // pred_fallthru
          _
        // Predicated region
        $region29: #{tpu_custom_call.1} parent=11 // pred_check
          %p548 = pneg %p189
        $region30: #{tpu_custom_call.1} parent=11 // pred_check_branch
          %550 = sbr.rel (%p548) target = $region32
        $region31: #{tpu_custom_call.1} parent=11 // pred_region
          _
        $region32: #{tpu_custom_call.1} parent=11 // pred_fallthru
          _
        // Predicated region
        $region33: #{tpu_custom_call.1} parent=11 // pred_check
          %p551 = pneg %p210
        $region34: #{tpu_custom_call.1} parent=11 // pred_check_branch
          %553 = sbr.rel (%p551) target = $region36
        $region35: #{tpu_custom_call.1} parent=11 // pred_region
          _
        $region36: #{tpu_custom_call.1} parent=11 // pred_fallthru
          _
        // Predicated region
        $region37: #{tpu_custom_call.1} parent=11 // pred_check
          %p554 = pneg %p231
        $region38: #{tpu_custom_call.1} parent=11 // pred_check_branch
          %556 = sbr.rel (%p554) target = $region40
        $region39: #{tpu_custom_call.1} parent=11 // pred_region
          %558 = vsyncadd [#allocation10], 0
          %s559 = sshll.u32 %s8, 4
          %s560 = int_to_ptr.hbm [resolvable:$true] %s559
          %s561 = sshll.u32 [#allocation9], 4
          %s562 = int_to_ptr.vmem [resolvable:$true] %s561
          %567 = dma.hbm_to_vmem [thread:$0]  %s560, 512, %s562, [#allocation10], 128, 128, 8
        $region40: #{tpu_custom_call.1} parent=11 // pred_fallthru
          _
        // Predicated region
        $region41: #{tpu_custom_call.1} parent=11 // pred_check
          %p568 = pneg %p252
        $region42: #{tpu_custom_call.1} parent=11 // pred_check_branch
          %570 = sbr.rel (%p568) target = $region44
        $region43: #{tpu_custom_call.1} parent=11 // pred_region
          _
        $region44: #{tpu_custom_call.1} parent=11 // pred_fallthru
          _
        // Predicated region
        $region45: #{tpu_custom_call.1} parent=11 // pred_check
          %p571 = pneg %p273
        $region46: #{tpu_custom_call.1} parent=11 // pred_check_branch
          %573 = sbr.rel (%p571) target = $region48
        $region47: #{tpu_custom_call.1} parent=11 // pred_region
          %575 = vsyncadd [#allocation10], 0
          %s576 = sshll.u32 %s10, 4
          %s577 = int_to_ptr.hbm [resolvable:$true] %s576
          %s578 = sshll.u32 [#allocation11], 4
          %s579 = int_to_ptr.vmem [resolvable:$true] %s578
          %584 = dma.hbm_to_vmem [thread:$0]  %s577, 512, %s579, [#allocation10], 128, 128, 8
        $region48: #{tpu_custom_call.1} parent=11 // pred_fallthru
          _
        // Predicated region
        $region49: #{tpu_custom_call.1} parent=11 // pred_check
          %p585 = pneg %p294
        $region50: #{tpu_custom_call.1} parent=11 // pred_check_branch
          %587 = sbr.rel (%p585) target = $region52
        $region51: #{tpu_custom_call.1} parent=11 // pred_region
          _
        $region52: #{tpu_custom_call.1} parent=11 // pred_fallthru
          _
        // Predicated region
        $region53: #{tpu_custom_call.1} parent=11 // pred_check
          %p588 = pneg %p315
        $region54: #{tpu_custom_call.1} parent=11 // pred_check_branch
          %590 = sbr.rel (%p588) target = $region56
        $region55: #{tpu_custom_call.1} parent=11 // pred_region
          _
        $region56: #{tpu_custom_call.1} parent=11 // pred_fallthru
          _
        // Predicated region
        $region57: #{tpu_custom_call.1} parent=11 // pred_check
          %p591 = pneg %p336
        $region58: #{tpu_custom_call.1} parent=11 // pred_check_branch
          %593 = sbr.rel (%p591) target = $region60
        $region59: #{tpu_custom_call.1} parent=11 // pred_region
          _
        $region60: #{tpu_custom_call.1} parent=11 // pred_fallthru
          _
        // Predicated region
        $region61: #{tpu_custom_call.1} parent=11 // pred_check
          %p594 = pneg %p357
        $region62: #{tpu_custom_call.1} parent=11 // pred_check_branch
          %596 = sbr.rel (%p594) target = $region64
        $region63: #{tpu_custom_call.1} parent=11 // pred_region
          _
        $region64: #{tpu_custom_call.1} parent=11 // pred_fallthru
          _
        // Predicated region
        $region65: #{tpu_custom_call.1} parent=11 // pred_check
          %p597 = pneg %p378
        $region66: #{tpu_custom_call.1} parent=11 // pred_check_branch
          %599 = sbr.rel (%p597) target = $region68
        $region67: #{tpu_custom_call.1} parent=11 // pred_region
          _
        $region68: #{tpu_custom_call.1} parent=11 // pred_fallthru
          _
        // Predicated region
        $region69: #{tpu_custom_call.1} parent=11 // pred_check
          %p600 = pneg %p399
        $region70: #{tpu_custom_call.1} parent=11 // pred_check_branch
          %602 = sbr.rel (%p600) target = $region72
        $region71: #{tpu_custom_call.1} parent=11 // pred_region
          _
        $region72: #{tpu_custom_call.1} parent=11 // pred_fallthru
          _
        // Predicated region
        $region73: #{tpu_custom_call.1} parent=11 // pred_check
          %p603 = pneg %p420
        $region74: #{tpu_custom_call.1} parent=11 // pred_check_branch
          %605 = sbr.rel (%p603) target = $region76
        $region75: #{tpu_custom_call.1} parent=11 // pred_region
          _
        $region76: #{tpu_custom_call.1} parent=11 // pred_fallthru
          _
        // Predicated region
        $region77: #{tpu_custom_call.1} parent=11 // pred_check
          %p606 = pneg %p441
        $region78: #{tpu_custom_call.1} parent=11 // pred_check_branch
          %608 = sbr.rel (%p606) target = $region80
        $region79: #{tpu_custom_call.1} parent=11 // pred_region
          _
        $region80: #{tpu_custom_call.1} parent=11 // pred_fallthru
          _
        // Predicated region
        $region81: #{tpu_custom_call.1} parent=11 // pred_check
          %p609 = pneg %p462
        $region82: #{tpu_custom_call.1} parent=11 // pred_check_branch
          %611 = sbr.rel (%p609) target = $region84
        $region83: #{tpu_custom_call.1} parent=11 // pred_region
          _
        $region84: #{tpu_custom_call.1} parent=11 // pred_fallthru
          _
      $region12: #{tpu_custom_call.1} parent=5 // pred_fallthru
        _
      %p612 = scmp.lt.s32.totalorder %s32, 4
      // Predicated region
      $region85: #{tpu_custom_call.1} parent=5 // pred_check
        %p613 = pneg %p612
      $region86: #{tpu_custom_call.1} parent=5 // pred_check_branch
        %615 = sbr.rel (%p613) target = $region88
      $region87: #{tpu_custom_call.1} parent=5 // pred_region
        // Predicated region
        $region89: #{tpu_custom_call.1} parent=87 // pred_check
          %p616 = pneg %p52
        $region90: #{tpu_custom_call.1} parent=87 // pred_check_branch
          %618 = sbr.rel (%p616) target = $region92
        $region91: #{tpu_custom_call.1} parent=87 // pred_region
          %p619 = scmp.lt.s32.totalorder %s32, 3
          %s620 = scalar_select %p619, %s32, 3
          %s621 = smul.addr %s620, 8
          %s622 = scalar_lea.vmem %s0, %s621
        $region92: #{tpu_custom_call.1} parent=87 // pred_fallthru
          _
        // Predicated region
        $region93: #{tpu_custom_call.1} parent=87 // pred_check
          %p623 = pneg %p78
        $region94: #{tpu_custom_call.1} parent=87 // pred_check_branch
          %625 = sbr.rel (%p623) target = $region96
        $region95: #{tpu_custom_call.1} parent=87 // pred_region
          %p626 = scmp.lt.s32.totalorder %s32, 3
          %s627 = scalar_select %p626, %s32, 3
          %s628 = smul.addr %s627, 2
          %s629 = smul.addr %s628, 8
          %s630 = scalar_lea.vmem %s1, %s629
        $region96: #{tpu_custom_call.1} parent=87 // pred_fallthru
          _
      $region88: #{tpu_custom_call.1} parent=5 // pred_fallthru
        _
      %p631 = scmp.le.s32.totalorder 1, %s32
      %p632 = scmp.lt.s32.totalorder %s32, 5
      %p633 = pnand %p631, %p632
      %p634 = pneg %p633
      // Predicated region
      $region97: #{tpu_custom_call.1} parent=5 // pred_check
        _
      $region98: #{tpu_custom_call.1} parent=5 // pred_check_branch
        %636 = sbr.rel (%p633) target = $region100
      $region99: #{tpu_custom_call.1} parent=5 // pred_region
        %s637 = ssub.s32 %s32, 1
        // Predicated region
        $region101: #{tpu_custom_call.1} parent=99 // pred_check
          %p638 = pneg %p105
        $region102: #{tpu_custom_call.1} parent=99 // pred_check_branch
          %640 = sbr.rel (%p638) target = $region104
        $region103: #{tpu_custom_call.1} parent=99 // pred_region
          %642 = dma.done [#allocation4], 512
        $region104: #{tpu_custom_call.1} parent=99 // pred_fallthru
          _
        // Predicated region
        $region105: #{tpu_custom_call.1} parent=99 // pred_check
          %p643 = pneg %p126
        $region106: #{tpu_custom_call.1} parent=99 // pred_check_branch
          %645 = sbr.rel (%p643) target = $region108
        $region107: #{tpu_custom_call.1} parent=99 // pred_region
          %647 = dma.done [#allocation7], 512
        $region108: #{tpu_custom_call.1} parent=99 // pred_fallthru
          _
        // Predicated region
        $region109: #{tpu_custom_call.1} parent=99 // pred_check
          %p648 = pneg %p147
        $region110: #{tpu_custom_call.1} parent=99 // pred_check_branch
          %650 = sbr.rel (%p648) target = $region112
        $region111: #{tpu_custom_call.1} parent=99 // pred_region
          %652 = dma.done [#allocation7], 512
        $region112: #{tpu_custom_call.1} parent=99 // pred_fallthru
          _
        // Predicated region
        $region113: #{tpu_custom_call.1} parent=99 // pred_check
          %p653 = pneg %p231
        $region114: #{tpu_custom_call.1} parent=99 // pred_check_branch
          %655 = sbr.rel (%p653) target = $region116
        $region115: #{tpu_custom_call.1} parent=99 // pred_region
          %657 = dma.done [#allocation10], 512
        $region116: #{tpu_custom_call.1} parent=99 // pred_fallthru
          _
        // Predicated region
        $region117: #{tpu_custom_call.1} parent=99 // pred_check
          %p658 = pneg %p273
        $region118: #{tpu_custom_call.1} parent=99 // pred_check_branch
          %660 = sbr.rel (%p658) target = $region120
        $region119: #{tpu_custom_call.1} parent=99 // pred_region
          %662 = dma.done [#allocation10], 512
        $region120: #{tpu_custom_call.1} parent=99 // pred_fallthru
          _
        %p663 = scmp.lt.s32.totalorder %s37, 3
        %s664 = scalar_select %p663, %s37, 3
        %s665 = smul.addr %s664, 8
        %s666 = scalar_lea.vmem %s0, %s665
        %p667 = pneg %p58
        %p668 = pneg %p55
        %p669 = scmp.lt.s32.totalorder %s37, 3
        %s670 = scalar_select %p669, %s37, 3
        %s671 = smul.addr %s670, 2
        %s672 = smul.addr %s671, 8
        %s673 = scalar_lea.vmem %s1, %s672
        %p674 = pneg %p84
        %p675 = pneg %p81
        %p676 = pneg %p105
        %p677 = pneg %p102
        %p678 = pneg %p126
        %p679 = pneg %p123
        %p680 = pneg %p147
        %p681 = pneg %p144
        %p682 = pneg %p168
        %p683 = pneg %p165
        %p684 = pneg %p189
        %p685 = pneg %p186
        %p686 = pneg %p210
        %p687 = pneg %p207
        %p688 = pneg %p231
        %p689 = pneg %p228
        %p690 = pneg %p252
        %p691 = pneg %p249
        %p692 = pneg %p273
        %p693 = pneg %p270
        %p694 = pneg %p294
        %p695 = pneg %p291
        %p696 = pneg %p315
        %p697 = pneg %p312
        %p698 = pneg %p336
        %p699 = pneg %p333
        %p700 = pneg %p357
        %p701 = pneg %p354
        %p702 = pneg %p378
        %p703 = pneg %p375
        %p704 = pneg %p399
        %p705 = pneg %p396
        %p706 = pneg %p420
        %p707 = pneg %p417
        %p708 = pneg %p441
        %p709 = pneg %p438
        %p710 = pneg %p462
        %p711 = pneg %p459
        %p712 = pneg %p488
        %p713 = pneg %p485
        %s714 = sand.u32 %s475, 1
        %s715 = scalar_lea.sflag [#allocation5], %s714
        %s716 = sand.u32 %s475, 1
        %s717 = smul.addr %s716, 8
        %s718 = scalar_lea.vmem [#allocation12], %s717
        %p719 = scmp.lt.s32.totalorder %s37, 3
        %s720 = scalar_select %p719, %s37, 3
        %s721 = smul.addr %s720, 8
        %s722 = scalar_lea.vmem %s0, %s721
        %p723 = scmp.lt.s32.totalorder %s37, 3
        %s724 = scalar_select %p723, %s37, 3
        %s725 = smul.addr %s724, 2
        %s726 = smul.addr %s725, 8
        %s727 = scalar_lea.vmem %s1, %s726
        %v728 = vld [vmem:[%s722] sm:$0xff]
        %v729 = vadd.f32 %v728, %v728
        %v730 = vld [vmem:[%s14] sm:$0x1]
        %v731 = vld [vmem:[%s15] sm:$0x1]
        %vm732 = vcmask 261120
        %v733 = vsel %vm732, %v729, 0.0
        %734 = vadd.xlane.f32.xlu0 %v733
        %v735 = vpop.xlane.xlu0 %734
        %v736 = vrcp.pop 32.0
        %v737 = vmul.f32 32.0, %v736
        %v738 = vsub.f32 1.0, %v737
        %v739 = vmul.f32 %v736, %v738
        %v740 = vadd.f32 %v736, %v739
        %vm741 = vweird.f32 %v736
        %v742 = vsel %vm741, %v736, %v740
        %v743 = vmul.f32 %v735, %v742
        %v744 = vsub.f32 %v729, %v743
        %v745 = vmul.f32 %v744, %v744
        %v746 = vsel %vm732, %v745, 0.0
        %747 = vadd.xlane.f32.xlu0 %v746
        %v748 = vpop.xlane.xlu0 %747
        %v749 = vmul.f32 %v748, %v742
        %v750 = vadd.f32 %v749, 1e-05
        %v751 = vrsqrt.pop %v750
        %v752 = vmul.f32 %v751, %v750
        %v753 = vmul.f32 %v752, %v751
        %v754 = vmul.f32 0.5, %v753
        %v755 = vsub.f32 1.5, %v754
        %v756 = vmul.f32 %v751, %v755
        %vm757 = vweird.f32 %v750
        %vm758 = vweird.f32 %v751
        %vm759 = vmor %vm757, %vm758
        %v760 = vsel %vm759, %v751, %v756
        %v761 = vmul.f32 %v744, %v760
        %v763 = vperm.slane %v730, 0
        %v765 = vmul.f32 %v761, %v763
        %v767 = vperm.slane %v731, 0
        %v769 = vadd.f32 %v765, %v767
        %v770 = vld [vmem:[%s727] sm:$0xff]
        %v771 = vld [vmem:[%s727 + $0x8] sm:$0xff]
        %v772 = vld [vmem:[#allocation3] sm:$0xff]
        %v773 = vld [vmem:[#allocation3 + $0x8] sm:$0xff]
        %v774 = vld [vmem:[#allocation3 + $0x10] sm:$0xff]
        %v775 = vld [vmem:[#allocation3 + $0x18] sm:$0xff]
        %v776 = vld [vmem:[%s5] sm:$0x1]
        %v778 = vperm.slane %v776, 0
        %v781 = vsel %vm732, %v769, 0
        %783 = vmatpush.msra.mxu0 0.0
        %784 = vmatpush.msra.mxu0 0.0
        %785 = vmatpush.msra.mxu0 0.0
        %786 = vmatpush.msra.mxu0 0.0
        %787 = vmatpush.msra.mxu0 0.0
        %788 = vmatpush.msra.mxu0 0.0
        %789 = vmatpush.msra.mxu0 0.0
        %790 = vmatpush.msra.mxu0 0.0
        %791 = vmatpush.msra.mxu0 0.0
        %792 = vmatpush.msra.mxu0 0.0
        %793 = vmatpush.msra.mxu0 0.0
        %794 = vmatpush.msra.mxu0 0.0
        %795 = vmatpush.msra.mxu0 %v775
        %796 = vmatpush.msra.mxu0 %v774
        %797 = vmatpush.msra.mxu0 %v773
        %798 = vmatpush.msra.mxu0 %v772
        %799 = vmatmul.f32.gmra.mxu0 %v781
        %v800 = vpop.f32.mrf.mxu0
        %v801 = vadd.f32 %v778, %v800
        %802 = vdwg.mxu0
        %v803 = vld [vmem:[#allocation6] sm:$0xff]
        %v804 = vld [vmem:[#allocation6 + $0x8] sm:$0xff]
        %v805 = vld [vmem:[#allocation6 + $0x10] sm:$0xff]
        %v806 = vld [vmem:[#allocation6 + $0x18] sm:$0xff]
        %v807 = vld [vmem:[%s6] sm:$0x1]
        %v809 = vperm.slane %v807, 0
        %v812 = vsel %vm732, %v770, 0
        %v815 = vsel %vm732, %v771, 0
        %817 = vmatpush.msra.mxu0 0.0
        %818 = vmatpush.msra.mxu0 0.0
        %819 = vmatpush.msra.mxu0 0.0
        %820 = vmatpush.msra.mxu0 0.0
        %821 = vmatpush.msra.mxu0 0.0
        %822 = vmatpush.msra.mxu0 0.0
        %823 = vmatpush.msra.mxu0 0.0
        %824 = vmatpush.msra.mxu0 0.0
        %825 = vmatpush.msra.mxu0 0.0
        %826 = vmatpush.msra.mxu0 0.0
        %827 = vmatpush.msra.mxu0 0.0
        %828 = vmatpush.msra.mxu0 0.0
        %829 = vmatpush.msra.mxu0 %v806
        %830 = vmatpush.msra.mxu0 %v805
        %831 = vmatpush.msra.mxu0 %v804
        %832 = vmatpush.msra.mxu0 %v803
        %833 = vmatmul.f32.gmra.mxu0 %v812
        %v834 = vpop.f32.mrf.mxu0
        %v835 = vadd.f32 %v809, %v834
        %836 = vmatmul.f32.gmra.mxu0 %v815
        %v837 = vpop.f32.mrf.mxu0
        %v838 = vadd.f32 %v809, %v837
        %839 = vdwg.mxu0
        %v840 = vld [vmem:[#allocation8] sm:$0xff]
        %v841 = vld [vmem:[#allocation8 + $0x8] sm:$0xff]
        %v842 = vld [vmem:[#allocation8 + $0x10] sm:$0xff]
        %v843 = vld [vmem:[#allocation8 + $0x18] sm:$0xff]
        %v844 = vld [vmem:[%s7] sm:$0x1]
        %v846 = vperm.slane %v844, 0
        %848 = vmatpush.msra.mxu0 0.0
        %849 = vmatpush.msra.mxu0 0.0
        %850 = vmatpush.msra.mxu0 0.0
        %851 = vmatpush.msra.mxu0 0.0
        %852 = vmatpush.msra.mxu0 0.0
        %853 = vmatpush.msra.mxu0 0.0
        %854 = vmatpush.msra.mxu0 0.0
        %855 = vmatpush.msra.mxu0 0.0
        %856 = vmatpush.msra.mxu0 0.0
        %857 = vmatpush.msra.mxu0 0.0
        %858 = vmatpush.msra.mxu0 0.0
        %859 = vmatpush.msra.mxu0 0.0
        %860 = vmatpush.msra.mxu0 %v843
        %861 = vmatpush.msra.mxu0 %v842
        %862 = vmatpush.msra.mxu0 %v841
        %863 = vmatpush.msra.mxu0 %v840
        %864 = vmatmul.f32.gmra.mxu0 %v812
        %v865 = vpop.f32.mrf.mxu0
        %v866 = vadd.f32 %v846, %v865
        %867 = vmatmul.f32.gmra.mxu0 %v815
        %v868 = vpop.f32.mrf.mxu0
        %v869 = vadd.f32 %v846, %v868
        %870 = vdwg.mxu0
        %vm871 = vcmask 64512
        %v873 = vsel %vm871, %v801, 0
        %v876 = vsel %vm871, %v835, 0
        %v879 = vsel %vm871, %v838, 0
        %881 = vmatpush.xpose.msra.mxu0 0.0
        %882 = vmatpush.xpose.msra.mxu0 0.0
        %883 = vmatpush.xpose.msra.mxu0 0.0
        %884 = vmatpush.xpose.msra.mxu0 0.0
        %885 = vmatpush.xpose.msra.mxu0 0.0
        %886 = vmatpush.xpose.msra.mxu0 0.0
        %887 = vmatpush.xpose.msra.mxu0 0.0
        %888 = vmatpush.xpose.msra.mxu0 0.0
        %889 = vmatpush.xpose.msra.mxu0 0.0
        %890 = vmatpush.xpose.msra.mxu0 0.0
        %891 = vmatpush.xpose.msra.mxu0 0.0
        %892 = vmatpush.xpose.msra.mxu0 0.0
        %893 = vmatpush.xpose.msra.mxu0 0.0
        %894 = vmatpush.xpose.msra.mxu0 0.0
        %895 = vmatpush.xpose.msra.mxu0 %v879
        %896 = vmatpush.xpose.msra.mxu0 %v876
        %897 = vmatmul.f32.gmra.mxu0 %v873
        %v898 = vpop.f32.mrf.mxu0
        %v899 = vadd.f32 0.0, %v898
        %900 = vdwg.mxu0
        %vm901 = vcmask 130048
        %v902 = vsel %vm901, %v899, -inf
        %903 = vmax.xlane.f32.xlu0 %v902
        %v904 = vpop.xlane.xlu0 %903
        %v905 = vsub.f32 %v899, %v904
        %v906 = vmul.f32 %v905, 1.442695
        %v907 = vpow.pop %v906
        %v908 = vsel %vm901, %v907, 0.0
        %909 = vadd.xlane.f32.xlu0 %v908
        %v910 = vpop.xlane.xlu0 %909
        %v911 = vrcp.pop %v910
        %v912 = vmul.f32 %v910, %v911
        %v913 = vsub.f32 1.0, %v912
        %v914 = vmul.f32 %v911, %v913
        %v915 = vadd.f32 %v911, %v914
        %vm916 = vweird.f32 %v910
        %vm917 = vweird.f32 %v911
        %vm918 = vmor %vm916, %vm917
        %v919 = vsel %vm918, %v911, %v915
        %v920 = vand.u32 2147483647, %v910
        %vm921 = vcmp.eq.f32.partialorder %v920, 8.507059e+37
        %v922 = vand.u32 %v910, 2147483648
        %v923 = vor.u32 1.1754944e-38, %v922
        %v924 = vsel %vm921, %v923, %v919
        %v925 = vmul.f32 %v907, %v924
        %v927 = vsel %vm901, %v925, 0
        %929 = vmatpush.msra.mxu0 0.0
        %930 = vmatpush.msra.mxu0 0.0
        %931 = vmatpush.msra.mxu0 0.0
        %932 = vmatpush.msra.mxu0 0.0
        %933 = vmatpush.msra.mxu0 0.0
        %934 = vmatpush.msra.mxu0 0.0
        %935 = vmatpush.msra.mxu0 0.0
        %936 = vmatpush.msra.mxu0 0.0
        %937 = vmatpush.msra.mxu0 0.0
        %938 = vmatpush.msra.mxu0 0.0
        %939 = vmatpush.msra.mxu0 0.0
        %940 = vmatpush.msra.mxu0 0.0
        %941 = vmatpush.msra.mxu0 0.0
        %942 = vmatpush.msra.mxu0 0.0
        %943 = vmatpush.msra.mxu0 %v869
        %944 = vmatpush.msra.mxu0 %v866
        %945 = vmatmul.f32.gmra.mxu0 %v927
        %v946 = vpop.f32.mrf.mxu0
        %v947 = vadd.f32 0.0, %v946
        %948 = vdwg.mxu0
        %949 = vst.msk [vmem:[#allocation2] sm:$0xff] %vm871, %v947
        %950 = vrot.lane.b32.xlu0 %v801, 120
        %v951 = vpop.permute.xlu0 %950
        %952 = vrot.lane.b32.xlu0 %v835, 120
        %v953 = vpop.permute.xlu0 %952
        %954 = vrot.lane.b32.xlu0 %v838, 120
        %v955 = vpop.permute.xlu0 %954
        %v956 = vsel %vm871, %v951, 0
        %v958 = vsel %vm871, %v953, 0
        %v960 = vsel %vm871, %v955, 0
        %962 = vmatpush.xpose.msra.mxu0 0.0
        %963 = vmatpush.xpose.msra.mxu0 0.0
        %964 = vmatpush.xpose.msra.mxu0 0.0
        %965 = vmatpush.xpose.msra.mxu0 0.0
        %966 = vmatpush.xpose.msra.mxu0 0.0
        %967 = vmatpush.xpose.msra.mxu0 0.0
        %968 = vmatpush.xpose.msra.mxu0 0.0
        %969 = vmatpush.xpose.msra.mxu0 0.0
        %970 = vmatpush.xpose.msra.mxu0 0.0
        %971 = vmatpush.xpose.msra.mxu0 0.0
        %972 = vmatpush.xpose.msra.mxu0 0.0
        %973 = vmatpush.xpose.msra.mxu0 0.0
        %974 = vmatpush.xpose.msra.mxu0 0.0
        %975 = vmatpush.xpose.msra.mxu0 0.0
        %976 = vmatpush.xpose.msra.mxu0 %v960
        %977 = vmatpush.xpose.msra.mxu0 %v958
        %978 = vmatmul.f32.gmra.mxu0 %v956
        %v979 = vpop.f32.mrf.mxu0
        %v980 = vadd.f32 0.0, %v979
        %981 = vdwg.mxu0
        %v982 = vsel %vm901, %v980, -inf
        %983 = vmax.xlane.f32.xlu0 %v982
        %v984 = vpop.xlane.xlu0 %983
        %v985 = vsub.f32 %v980, %v984
        %v986 = vmul.f32 %v985, 1.442695
        %v987 = vpow.pop %v986
        %v988 = vsel %vm901, %v987, 0.0
        %989 = vadd.xlane.f32.xlu0 %v988
        %v990 = vpop.xlane.xlu0 %989
        %v991 = vrcp.pop %v990
        %v992 = vmul.f32 %v990, %v991
        %v993 = vsub.f32 1.0, %v992
        %v994 = vmul.f32 %v991, %v993
        %v995 = vadd.f32 %v991, %v994
        %vm996 = vweird.f32 %v990
        %vm997 = vweird.f32 %v991
        %vm998 = vmor %vm996, %vm997
        %v999 = vsel %vm998, %v991, %v995
        %v1000 = vand.u32 2147483647, %v990
        %vm1001 = vcmp.eq.f32.partialorder %v1000, 8.507059e+37
        %v1002 = vand.u32 %v990, 2147483648
        %v1003 = vor.u32 1.1754944e-38, %v1002
        %v1004 = vsel %vm1001, %v1003, %v999
        %v1005 = vmul.f32 %v987, %v1004
        %1008 = vrot.lane.b32.xlu0 %v866, 120
        %v1009 = vpop.permute.xlu0 %1008
        %1010 = vrot.lane.b32.xlu0 %v869, 120
        %v1011 = vpop.permute.xlu0 %1010
        %v1015 = vsel %vm901, %v1005, 0
        %1017 = vmatpush.msra.mxu0 0.0
        %1018 = vmatpush.msra.mxu0 0.0
        %1019 = vmatpush.msra.mxu0 0.0
        %1020 = vmatpush.msra.mxu0 0.0
        %1021 = vmatpush.msra.mxu0 0.0
        %1022 = vmatpush.msra.mxu0 0.0
        %1023 = vmatpush.msra.mxu0 0.0
        %1024 = vmatpush.msra.mxu0 0.0
        %1025 = vmatpush.msra.mxu0 0.0
        %1026 = vmatpush.msra.mxu0 0.0
        %1027 = vmatpush.msra.mxu0 0.0
        %1028 = vmatpush.msra.mxu0 0.0
        %1029 = vmatpush.msra.mxu0 0.0
        %1030 = vmatpush.msra.mxu0 0.0
        %1031 = vmatpush.msra.mxu0 %v1011
        %1032 = vmatpush.msra.mxu0 %v1009
        %1033 = vmatmul.f32.gmra.mxu0 %v1015
        %v1034 = vpop.f32.mrf.mxu0
        %v1035 = vadd.f32 0.0, %v1034
        %1036 = vdwg.mxu0
        %s1037 = scalar_lea.vmem [#allocation2], 8
        %1038 = vst.msk [vmem:[%s1037] sm:$0xff] %vm871, %v1035
        %1039 = vrot.lane.b32.xlu0 %v801, 112
        %v1040 = vpop.permute.xlu0 %1039
        %1041 = vrot.lane.b32.xlu0 %v835, 112
        %v1042 = vpop.permute.xlu0 %1041
        %1043 = vrot.lane.b32.xlu0 %v838, 112
        %v1044 = vpop.permute.xlu0 %1043
        %v1045 = vsel %vm871, %v1040, 0
        %v1047 = vsel %vm871, %v1042, 0
        %v1049 = vsel %vm871, %v1044, 0
        %1051 = vmatpush.xpose.msra.mxu0 0.0
        %1052 = vmatpush.xpose.msra.mxu0 0.0
        %1053 = vmatpush.xpose.msra.mxu0 0.0
        %1054 = vmatpush.xpose.msra.mxu0 0.0
        %1055 = vmatpush.xpose.msra.mxu0 0.0
        %1056 = vmatpush.xpose.msra.mxu0 0.0
        %1057 = vmatpush.xpose.msra.mxu0 0.0
        %1058 = vmatpush.xpose.msra.mxu0 0.0
        %1059 = vmatpush.xpose.msra.mxu0 0.0
        %1060 = vmatpush.xpose.msra.mxu0 0.0
        %1061 = vmatpush.xpose.msra.mxu0 0.0
        %1062 = vmatpush.xpose.msra.mxu0 0.0
        %1063 = vmatpush.xpose.msra.mxu0 0.0
        %1064 = vmatpush.xpose.msra.mxu0 0.0
        %1065 = vmatpush.xpose.msra.mxu0 %v1049
        %1066 = vmatpush.xpose.msra.mxu0 %v1047
        %1067 = vmatmul.f32.gmra.mxu0 %v1045
        %v1068 = vpop.f32.mrf.mxu0
        %v1069 = vadd.f32 0.0, %v1068
        %1070 = vdwg.mxu0
        %v1071 = vsel %vm901, %v1069, -inf
        %1072 = vmax.xlane.f32.xlu0 %v1071
        %v1073 = vpop.xlane.xlu0 %1072
        %v1074 = vsub.f32 %v1069, %v1073
        %v1075 = vmul.f32 %v1074, 1.442695
        %v1076 = vpow.pop %v1075
        %v1077 = vsel %vm901, %v1076, 0.0
        %1078 = vadd.xlane.f32.xlu0 %v1077
        %v1079 = vpop.xlane.xlu0 %1078
        %v1080 = vrcp.pop %v1079
        %v1081 = vmul.f32 %v1079, %v1080
        %v1082 = vsub.f32 1.0, %v1081
        %v1083 = vmul.f32 %v1080, %v1082
        %v1084 = vadd.f32 %v1080, %v1083
        %vm1085 = vweird.f32 %v1079
        %vm1086 = vweird.f32 %v1080
        %vm1087 = vmor %vm1085, %vm1086
        %v1088 = vsel %vm1087, %v1080, %v1084
        %v1089 = vand.u32 2147483647, %v1079
        %vm1090 = vcmp.eq.f32.partialorder %v1089, 8.507059e+37
        %v1091 = vand.u32 %v1079, 2147483648
        %v1092 = vor.u32 1.1754944e-38, %v1091
        %v1093 = vsel %vm1090, %v1092, %v1088
        %v1094 = vmul.f32 %v1076, %v1093
        %1095 = vrot.lane.b32.xlu0 %v866, 112
        %v1096 = vpop.permute.xlu0 %1095
        %1097 = vrot.lane.b32.xlu0 %v869, 112
        %v1098 = vpop.permute.xlu0 %1097
        %v1102 = vsel %vm901, %v1094, 0
        %1104 = vmatpush.msra.mxu0 0.0
        %1105 = vmatpush.msra.mxu0 0.0
        %1106 = vmatpush.msra.mxu0 0.0
        %1107 = vmatpush.msra.mxu0 0.0
        %1108 = vmatpush.msra.mxu0 0.0
        %1109 = vmatpush.msra.mxu0 0.0
        %1110 = vmatpush.msra.mxu0 0.0
        %1111 = vmatpush.msra.mxu0 0.0
        %1112 = vmatpush.msra.mxu0 0.0
        %1113 = vmatpush.msra.mxu0 0.0
        %1114 = vmatpush.msra.mxu0 0.0
        %1115 = vmatpush.msra.mxu0 0.0
        %1116 = vmatpush.msra.mxu0 0.0
        %1117 = vmatpush.msra.mxu0 0.0
        %1118 = vmatpush.msra.mxu0 %v1098
        %1119 = vmatpush.msra.mxu0 %v1096
        %1120 = vmatmul.f32.gmra.mxu0 %v1102
        %v1121 = vpop.f32.mrf.mxu0
        %v1122 = vadd.f32 0.0, %v1121
        %1123 = vdwg.mxu0
        %s1124 = scalar_lea.vmem [#allocation2], 16
        %1125 = vst.msk [vmem:[%s1124] sm:$0xff] %vm871, %v1122
        %1126 = vrot.lane.b32.xlu0 %v801, 104
        %v1127 = vpop.permute.xlu0 %1126
        %1128 = vrot.lane.b32.xlu0 %v835, 104
        %v1129 = vpop.permute.xlu0 %1128
        %1130 = vrot.lane.b32.xlu0 %v838, 104
        %v1131 = vpop.permute.xlu0 %1130
        %v1132 = vsel %vm871, %v1127, 0
        %v1134 = vsel %vm871, %v1129, 0
        %v1136 = vsel %vm871, %v1131, 0
        %1138 = vmatpush.xpose.msra.mxu0 0.0
        %1139 = vmatpush.xpose.msra.mxu0 0.0
        %1140 = vmatpush.xpose.msra.mxu0 0.0
        %1141 = vmatpush.xpose.msra.mxu0 0.0
        %1142 = vmatpush.xpose.msra.mxu0 0.0
        %1143 = vmatpush.xpose.msra.mxu0 0.0
        %1144 = vmatpush.xpose.msra.mxu0 0.0
        %1145 = vmatpush.xpose.msra.mxu0 0.0
        %1146 = vmatpush.xpose.msra.mxu0 0.0
        %1147 = vmatpush.xpose.msra.mxu0 0.0
        %1148 = vmatpush.xpose.msra.mxu0 0.0
        %1149 = vmatpush.xpose.msra.mxu0 0.0
        %1150 = vmatpush.xpose.msra.mxu0 0.0
        %1151 = vmatpush.xpose.msra.mxu0 0.0
        %1152 = vmatpush.xpose.msra.mxu0 %v1136
        %1153 = vmatpush.xpose.msra.mxu0 %v1134
        %1154 = vmatmul.f32.gmra.mxu0 %v1132
        %v1155 = vpop.f32.mrf.mxu0
        %v1156 = vadd.f32 0.0, %v1155
        %1157 = vdwg.mxu0
        %v1158 = vsel %vm901, %v1156, -inf
        %1159 = vmax.xlane.f32.xlu0 %v1158
        %v1160 = vpop.xlane.xlu0 %1159
        %v1161 = vsub.f32 %v1156, %v1160
        %v1162 = vmul.f32 %v1161, 1.442695
        %v1163 = vpow.pop %v1162
        %v1164 = vsel %vm901, %v1163, 0.0
        %1165 = vadd.xlane.f32.xlu0 %v1164
        %v1166 = vpop.xlane.xlu0 %1165
        %v1167 = vrcp.pop %v1166
        %v1168 = vmul.f32 %v1166, %v1167
        %v1169 = vsub.f32 1.0, %v1168
        %v1170 = vmul.f32 %v1167, %v1169
        %v1171 = vadd.f32 %v1167, %v1170
        %vm1172 = vweird.f32 %v1166
        %vm1173 = vweird.f32 %v1167
        %vm1174 = vmor %vm1172, %vm1173
        %v1175 = vsel %vm1174, %v1167, %v1171
        %v1176 = vand.u32 2147483647, %v1166
        %vm1177 = vcmp.eq.f32.partialorder %v1176, 8.507059e+37
        %v1178 = vand.u32 %v1166, 2147483648
        %v1179 = vor.u32 1.1754944e-38, %v1178
        %v1180 = vsel %vm1177, %v1179, %v1175
        %v1181 = vmul.f32 %v1163, %v1180
        %1182 = vrot.lane.b32.xlu0 %v866, 104
        %v1183 = vpop.permute.xlu0 %1182
        %1184 = vrot.lane.b32.xlu0 %v869, 104
        %v1185 = vpop.permute.xlu0 %1184
        %v1189 = vsel %vm901, %v1181, 0
        %1191 = vmatpush.msra.mxu0 0.0
        %1192 = vmatpush.msra.mxu0 0.0
        %1193 = vmatpush.msra.mxu0 0.0
        %1194 = vmatpush.msra.mxu0 0.0
        %1195 = vmatpush.msra.mxu0 0.0
        %1196 = vmatpush.msra.mxu0 0.0
        %1197 = vmatpush.msra.mxu0 0.0
        %1198 = vmatpush.msra.mxu0 0.0
        %1199 = vmatpush.msra.mxu0 0.0
        %1200 = vmatpush.msra.mxu0 0.0
        %1201 = vmatpush.msra.mxu0 0.0
        %1202 = vmatpush.msra.mxu0 0.0
        %1203 = vmatpush.msra.mxu0 0.0
        %1204 = vmatpush.msra.mxu0 0.0
        %1205 = vmatpush.msra.mxu0 %v1185
        %1206 = vmatpush.msra.mxu0 %v1183
        %1207 = vmatmul.f32.gmra.mxu0 %v1189
        %v1208 = vpop.f32.mrf.mxu0
        %v1209 = vadd.f32 0.0, %v1208
        %1210 = vdwg.mxu0
        %s1211 = scalar_lea.vmem [#allocation2], 24
        %1212 = vst.msk [vmem:[%s1211] sm:$0xff] %vm871, %v1209
        %v1213 = vld [vmem:[#allocation2] sm:$0xff]
        %v1214 = vld [vmem:[#allocation2 + $0x8] sm:$0xff]
        %v1215 = vld [vmem:[#allocation2 + $0x10] sm:$0xff]
        %v1216 = vld [vmem:[#allocation2 + $0x18] sm:$0xff]
        %v1217 = vld [vmem:[#allocation9] sm:$0xff]
        %v1218 = vld [vmem:[#allocation9 + $0x8] sm:$0xff]
        %v1219 = vld [vmem:[#allocation9 + $0x10] sm:$0xff]
        %v1220 = vld [vmem:[#allocation9 + $0x18] sm:$0xff]
        %v1222 = vsel %vm871, %v1213, 0
        %1224 = vmatpush.msra.mxu0 0.0
        %1225 = vmatpush.msra.mxu0 0.0
        %1226 = vmatpush.msra.mxu0 0.0
        %1227 = vmatpush.msra.mxu0 0.0
        %1228 = vmatpush.msra.mxu0 0.0
        %1229 = vmatpush.msra.mxu0 0.0
        %1230 = vmatpush.msra.mxu0 0.0
        %1231 = vmatpush.msra.mxu0 0.0
        %1232 = vmatpush.msra.mxu0 0.0
        %1233 = vmatpush.msra.mxu0 0.0
        %1234 = vmatpush.msra.mxu0 0.0
        %1235 = vmatpush.msra.mxu0 0.0
        %1236 = vmatpush.msra.mxu0 0.0
        %1237 = vmatpush.msra.mxu0 0.0
        %1238 = vmatpush.msra.mxu0 0.0
        %1239 = vmatpush.msra.mxu0 %v1217
        %1240 = vmatmul.f32.gmra.mxu0 %v1222
        %v1241 = vpop.f32.mrf.mxu0
        %v1242 = vadd.f32 0.0, %v1241
        %1243 = vdwg.mxu0
        %v1245 = vsel %vm871, %v1214, 0
        %1247 = vmatpush.msra.mxu0 0.0
        %1248 = vmatpush.msra.mxu0 0.0
        %1249 = vmatpush.msra.mxu0 0.0
        %1250 = vmatpush.msra.mxu0 0.0
        %1251 = vmatpush.msra.mxu0 0.0
        %1252 = vmatpush.msra.mxu0 0.0
        %1253 = vmatpush.msra.mxu0 0.0
        %1254 = vmatpush.msra.mxu0 0.0
        %1255 = vmatpush.msra.mxu0 0.0
        %1256 = vmatpush.msra.mxu0 0.0
        %1257 = vmatpush.msra.mxu0 0.0
        %1258 = vmatpush.msra.mxu0 0.0
        %1259 = vmatpush.msra.mxu0 0.0
        %1260 = vmatpush.msra.mxu0 0.0
        %1261 = vmatpush.msra.mxu0 0.0
        %1262 = vmatpush.msra.mxu0 %v1218
        %1263 = vmatmul.f32.gmra.mxu0 %v1245
        %v1264 = vpop.f32.mrf.mxu0
        %v1265 = vadd.f32 0.0, %v1264
        %1266 = vdwg.mxu0
        %v1268 = vsel %vm871, %v1215, 0
        %1270 = vmatpush.msra.mxu0 0.0
        %1271 = vmatpush.msra.mxu0 0.0
        %1272 = vmatpush.msra.mxu0 0.0
        %1273 = vmatpush.msra.mxu0 0.0
        %1274 = vmatpush.msra.mxu0 0.0
        %1275 = vmatpush.msra.mxu0 0.0
        %1276 = vmatpush.msra.mxu0 0.0
        %1277 = vmatpush.msra.mxu0 0.0
        %1278 = vmatpush.msra.mxu0 0.0
        %1279 = vmatpush.msra.mxu0 0.0
        %1280 = vmatpush.msra.mxu0 0.0
        %1281 = vmatpush.msra.mxu0 0.0
        %1282 = vmatpush.msra.mxu0 0.0
        %1283 = vmatpush.msra.mxu0 0.0
        %1284 = vmatpush.msra.mxu0 0.0
        %1285 = vmatpush.msra.mxu0 %v1219
        %1286 = vmatmul.f32.gmra.mxu0 %v1268
        %v1287 = vpop.f32.mrf.mxu0
        %v1288 = vadd.f32 0.0, %v1287
        %1289 = vdwg.mxu0
        %v1291 = vsel %vm871, %v1216, 0
        %1293 = vmatpush.msra.mxu0 0.0
        %1294 = vmatpush.msra.mxu0 0.0
        %1295 = vmatpush.msra.mxu0 0.0
        %1296 = vmatpush.msra.mxu0 0.0
        %1297 = vmatpush.msra.mxu0 0.0
        %1298 = vmatpush.msra.mxu0 0.0
        %1299 = vmatpush.msra.mxu0 0.0
        %1300 = vmatpush.msra.mxu0 0.0
        %1301 = vmatpush.msra.mxu0 0.0
        %1302 = vmatpush.msra.mxu0 0.0
        %1303 = vmatpush.msra.mxu0 0.0
        %1304 = vmatpush.msra.mxu0 0.0
        %1305 = vmatpush.msra.mxu0 0.0
        %1306 = vmatpush.msra.mxu0 0.0
        %1307 = vmatpush.msra.mxu0 0.0
        %1308 = vmatpush.msra.mxu0 %v1220
        %1309 = vmatmul.f32.gmra.mxu0 %v1291
        %v1310 = vpop.f32.mrf.mxu0
        %v1311 = vadd.f32 0.0, %v1310
        %1312 = vdwg.mxu0
        %v1313 = vsel %vm732, %v1242, 0.0
        %v1314 = vsel %vm732, %v1265, 0.0
        %v1315 = vadd.f32 %v1313, %v1314
        %v1316 = vsel %vm732, %v1288, 0.0
        %v1317 = vadd.f32 %v1315, %v1316
        %v1318 = vsel %vm732, %v1311, 0.0
        %v1319 = vadd.f32 %v1317, %v1318
        %v1320 = vld [vmem:[%s9] sm:$0x1]
        %v1322 = vperm.slane %v1320, 0
        %v1324 = vadd.f32 %v1319, %v1322
        %v1325 = vadd.f32 %v769, %v1324
        %v1326 = vld [vmem:[%s16] sm:$0x1]
        %v1327 = vld [vmem:[%s17] sm:$0x1]
        %v1328 = vsel %vm732, %v1325, 0.0
        %1329 = vadd.xlane.f32.xlu0 %v1328
        %v1330 = vpop.xlane.xlu0 %1329
        %v1331 = vmul.f32 %v1330, %v742
        %v1332 = vsub.f32 %v1325, %v1331
        %v1333 = vmul.f32 %v1332, %v1332
        %v1334 = vsel %vm732, %v1333, 0.0
        %1335 = vadd.xlane.f32.xlu0 %v1334
        %v1336 = vpop.xlane.xlu0 %1335
        %v1337 = vmul.f32 %v1336, %v742
        %v1338 = vadd.f32 %v1337, 1e-05
        %v1339 = vrsqrt.pop %v1338
        %v1340 = vmul.f32 %v1339, %v1338
        %v1341 = vmul.f32 %v1340, %v1339
        %v1342 = vmul.f32 0.5, %v1341
        %v1343 = vsub.f32 1.5, %v1342
        %v1344 = vmul.f32 %v1339, %v1343
        %vm1345 = vweird.f32 %v1338
        %vm1346 = vweird.f32 %v1339
        %vm1347 = vmor %vm1345, %vm1346
        %v1348 = vsel %vm1347, %v1339, %v1344
        %v1349 = vmul.f32 %v1332, %v1348
        %v1351 = vperm.slane %v1326, 0
        %v1353 = vmul.f32 %v1349, %v1351
        %v1355 = vperm.slane %v1327, 0
        %v1357 = vadd.f32 %v1353, %v1355
        %v1358 = vld [vmem:[#allocation11] sm:$0xff]
        %v1359 = vld [vmem:[#allocation11 + $0x8] sm:$0xff]
        %v1360 = vld [vmem:[#allocation11 + $0x10] sm:$0xff]
        %v1361 = vld [vmem:[#allocation11 + $0x18] sm:$0xff]
        %v1362 = vld [vmem:[%s11] sm:$0x1]
        %v1364 = vperm.slane %v1362, 0
        %v1367 = vsel %vm732, %v1357, 0
        %1369 = vmatpush.msra.mxu0 0.0
        %1370 = vmatpush.msra.mxu0 0.0
        %1371 = vmatpush.msra.mxu0 0.0
        %1372 = vmatpush.msra.mxu0 0.0
        %1373 = vmatpush.msra.mxu0 0.0
        %1374 = vmatpush.msra.mxu0 0.0
        %1375 = vmatpush.msra.mxu0 0.0
        %1376 = vmatpush.msra.mxu0 0.0
        %1377 = vmatpush.msra.mxu0 0.0
        %1378 = vmatpush.msra.mxu0 0.0
        %1379 = vmatpush.msra.mxu0 0.0
        %1380 = vmatpush.msra.mxu0 0.0
        %1381 = vmatpush.msra.mxu0 %v1361
        %1382 = vmatpush.msra.mxu0 %v1360
        %1383 = vmatpush.msra.mxu0 %v1359
        %1384 = vmatpush.msra.mxu0 %v1358
        %1385 = vmatmul.f32.gmra.mxu0 %v1367
        %v1386 = vpop.f32.mrf.mxu0
        %v1387 = vadd.f32 %v1364, %v1386
        %1388 = vdwg.mxu0
        %v1389 = vmax.f32 %v1387, 0.0
        %v1390 = vld [vmem:[%s12] sm:$0xff]
        %v1391 = vld [vmem:[%s12 + $0x8] sm:$0xff]
        %v1392 = vld [vmem:[%s12 + $0x10] sm:$0xff]
        %v1393 = vld [vmem:[%s12 + $0x18] sm:$0xff]
        %v1394 = vld [vmem:[%s12 + $0x20] sm:$0xff]
        %v1395 = vld [vmem:[%s12 + $0x28] sm:$0xff]
        %v1396 = vld [vmem:[%s12 + $0x30] sm:$0xff]
        %v1397 = vld [vmem:[%s12 + $0x38] sm:$0xff]
        %v1398 = vld [vmem:[%s13] sm:$0x1]
        %v1400 = vperm.slane %v1398, 0
        %vm1402 = vcmask 523264
        %v1404 = vsel %vm1402, %v1389, 0
        %1406 = vmatpush.msra.mxu0 0.0
        %1407 = vmatpush.msra.mxu0 0.0
        %1408 = vmatpush.msra.mxu0 0.0
        %1409 = vmatpush.msra.mxu0 0.0
        %1410 = vmatpush.msra.mxu0 0.0
        %1411 = vmatpush.msra.mxu0 0.0
        %1412 = vmatpush.msra.mxu0 0.0
        %1413 = vmatpush.msra.mxu0 0.0
        %1414 = vmatpush.msra.mxu0 %v1397
        %1415 = vmatpush.msra.mxu0 %v1396
        %1416 = vmatpush.msra.mxu0 %v1395
        %1417 = vmatpush.msra.mxu0 %v1394
        %1418 = vmatpush.msra.mxu0 %v1393
        %1419 = vmatpush.msra.mxu0 %v1392
        %1420 = vmatpush.msra.mxu0 %v1391
        %1421 = vmatpush.msra.mxu0 %v1390
        %1422 = vmatmul.f32.gmra.mxu0 %v1404
        %v1423 = vpop.f32.mrf.mxu0
        %v1424 = vadd.f32 %v1400, %v1423
        %1425 = vdwg.mxu0
        %v1426 = vadd.f32 %v1357, %v1424
        %v1427 = vld [vmem:[%s18] sm:$0x1]
        %v1428 = vld [vmem:[%s19] sm:$0x1]
        %v1429 = vsel %vm732, %v1426, 0.0
        %1430 = vadd.xlane.f32.xlu0 %v1429
        %v1431 = vpop.xlane.xlu0 %1430
        %v1432 = vmul.f32 %v1431, %v742
        %v1433 = vsub.f32 %v1426, %v1432
        %v1434 = vmul.f32 %v1433, %v1433
        %v1435 = vsel %vm732, %v1434, 0.0
        %1436 = vadd.xlane.f32.xlu0 %v1435
        %v1437 = vpop.xlane.xlu0 %1436
        %v1438 = vmul.f32 %v1437, %v742
        %v1439 = vadd.f32 %v1438, 1e-05
        %v1440 = vrsqrt.pop %v1439
        %v1441 = vmul.f32 %v1440, %v1439
        %v1442 = vmul.f32 %v1441, %v1440
        %v1443 = vmul.f32 0.5, %v1442
        %v1444 = vsub.f32 1.5, %v1443
        %v1445 = vmul.f32 %v1440, %v1444
        %vm1446 = vweird.f32 %v1439
        %vm1447 = vweird.f32 %v1440
        %vm1448 = vmor %vm1446, %vm1447
        %v1449 = vsel %vm1448, %v1440, %v1445
        %v1450 = vmul.f32 %v1433, %v1449
        %v1452 = vperm.slane %v1427, 0
        %v1454 = vmul.f32 %v1450, %v1452
        %v1456 = vperm.slane %v1428, 0
        %v1458 = vadd.f32 %v1454, %v1456
        %1459 = vst.msk [vmem:[%s718] sm:$0xff] %vm732, %v1458
        %s1460 = sand.u32 %s475, 1
        %s1461 = scalar_lea.sflag [#allocation5], %s1460
        %s1462 = sand.u32 %s475, 1
        %s1463 = smul.addr %s1462, 8
        %s1464 = scalar_lea.vmem [#allocation12], %s1463
        // Predicated region
        $region121: #{tpu_custom_call.1} parent=99 // pred_check
          %p1465 = pneg %p485
        $region122: #{tpu_custom_call.1} parent=99 // pred_check_branch
          %1467 = sbr.rel (%p1465) target = $region124
        $region123: #{tpu_custom_call.1} parent=99 // pred_region
          %1469 = vsyncadd %s1461, 0
          %s1470 = smul.addr %s37, 8
          %s1471 = scalar_lea.hbm %s20, %s1470
          %s1473 = sshll.u32 %s1464, 4
          %s1474 = int_to_ptr.vmem [resolvable:$true] %s1473
          %s1475 = sshll.u32 %s1471, 4
          %s1476 = int_to_ptr.hbm [resolvable:$true] %s1475
          %1478 = dma.vmem_to_hbm [thread:$0]  %s1474, 128, %s1476, %s1461
        $region124: #{tpu_custom_call.1} parent=99 // pred_fallthru
          _
      $region100: #{tpu_custom_call.1} parent=5 // pred_fallthru
        _
      %p1479 = scmp.le.s32.totalorder 2, %s32
      // Predicated region
      $region125: #{tpu_custom_call.1} parent=5 // pred_check
        %p1480 = pneg %p1479
      $region126: #{tpu_custom_call.1} parent=5 // pred_check_branch
        %1482 = sbr.rel (%p1480) target = $region128
      $region127: #{tpu_custom_call.1} parent=5 // pred_region
        %s1483 = ssub.s32 %s32, 2
        // Predicated region
        $region129: #{tpu_custom_call.1} parent=127 // pred_check
          %p1484 = pneg %p491
        $region130: #{tpu_custom_call.1} parent=127 // pred_check_branch
          %1486 = sbr.rel (%p1484) target = $region132
        $region131: #{tpu_custom_call.1} parent=127 // pred_region
          %s1487 = sand.u32 %s476, 1
          %s1488 = scalar_lea.sflag [#allocation5], %s1487
          %s1489 = sand.u32 %s476, 1
          %s1490 = smul.addr %s1489, 8
          %s1491 = scalar_lea.vmem [#allocation12], %s1490
          %1493 = dma.done %s1488, 128
        $region132: #{tpu_custom_call.1} parent=127 // pred_fallthru
          _
      $region128: #{tpu_custom_call.1} parent=5 // pred_fallthru
        _
    $region6: #{tpu_custom_call.1} parent=1 // loop_footer
      %s36 = sadd.s32 1, %s32
    $region7: #{tpu_custom_call.1} parent=1 // loop_footer_branch
      %31 = sbr.rel target = $region3
    $region8: #{tpu_custom_call.1} parent=1 // loop_exit
      _
    %1494 = vsyncpa [#allocation4], 1
    %s1495 = scalar_lea.sflag [#allocation4], 1
    %1496 = vsyncpa %s1495, 1
    %1497 = vsyncpa [#allocation7], 1
    %1498 = vsyncpa [#allocation10], 1
    %1499 = vsyncpa [#allocation5], 1
    %s1500 = scalar_lea.sflag [#allocation5], 1
    %1501 = vsyncpa %s1500, 1

// kernel: tpu_custom_call.1
$region0: #{tpu_custom_call.1}
  #allocation0 [shape = 'u32[]', space=smem, size = 0x4, offset = 0x4, fixed_abs, tag = 'smem constant byte address 0x4 - core index']
  #allocation1 [shape = 'u32[72,128]{1,0:T(1,128)}', space=vmem, size = 0x9000, scoped, tag = 'internal scratch']
  #allocation2 [shape = 'f32[4,1,8,8]{3,2,1,0:T(8,128)}', space=vmem, size = 0x4000, scoped, tag = 'scratch operand']
  %s0 = inlined_call_operand.vmem [shape: f32[4,8,32], index: 0, kind: input, shape index: {}]
  %s1 = inlined_call_operand.vmem [shape: f32[4,16,32], index: 1, kind: input, shape index: {}]
  %s2 = inlined_call_operand.hbm [shape: f32[32,32], index: 2, kind: input, shape index: {}]
  %s3 = inlined_call_operand.hbm [shape: f32[32,32], index: 3, kind: input, shape index: {}]
  %s4 = inlined_call_operand.hbm [shape: f32[32,32], index: 4, kind: input, shape index: {}]
  %s5 = inlined_call_operand.vmem [shape: f32[1,32], index: 5, kind: input, shape index: {}]
  %s6 = inlined_call_operand.vmem [shape: f32[1,32], index: 6, kind: input, shape index: {}]
  %s7 = inlined_call_operand.vmem [shape: f32[1,32], index: 7, kind: input, shape index: {}]
  %s8 = inlined_call_operand.hbm [shape: f32[4,8,32], index: 8, kind: input, shape index: {}]
  %s9 = inlined_call_operand.vmem [shape: f32[1,32], index: 9, kind: input, shape index: {}]
  %s10 = inlined_call_operand.hbm [shape: f32[32,64], index: 10, kind: input, shape index: {}]
  %s11 = inlined_call_operand.vmem [shape: f32[1,64], index: 11, kind: input, shape index: {}]
  %s12 = inlined_call_operand.vmem [shape: f32[64,32], index: 12, kind: input, shape index: {}]
  %s13 = inlined_call_operand.vmem [shape: f32[1,32], index: 13, kind: input, shape index: {}]
  %s14 = inlined_call_operand.vmem [shape: f32[1,32], index: 14, kind: input, shape index: {}]
  %s15 = inlined_call_operand.vmem [shape: f32[1,32], index: 15, kind: input, shape index: {}]
  %s16 = inlined_call_operand.vmem [shape: f32[1,32], index: 16, kind: input, shape index: {}]
  %s17 = inlined_call_operand.vmem [shape: f32[1,32], index: 17, kind: input, shape index: {}]
  %s18 = inlined_call_operand.vmem [shape: f32[1,32], index: 18, kind: input, shape index: {}]
  %s19 = inlined_call_operand.vmem [shape: f32[1,32], index: 19, kind: input, shape index: {}]
  %s20 = inlined_call_operand.hbm [shape: f32[4,8,32], index: 20, kind: output, shape index: {}]
  %s21 = sld [smem:[#allocation0]]
  $region133: #{tpu_custom_call.1} parent=0
    _
  %s23 = ssub.s32 1, %s21
  %s24 = scalar_select 0, %s23, %s21
  $region1: #{tpu_custom_call.1} parent=0
    #allocation3 [shape = 'u8[16384]{0}', space=vmem, size = 0x4000, scoped, tag = 'input window, operand 2, single buffered']
    #allocation4 [shape = 's32[2]{0}', space=sflag, size = 0x8, scoped, tag = 'scoped memory for tpu_custom_call.1']
    #allocation5 [shape = 's32[2]{0}', space=sflag, size = 0x8, scoped, tag = 'scoped memory for tpu_custom_call.1']
    #allocation6 [shape = 'u8[16384]{0}', space=vmem, size = 0x4000, scoped, tag = 'input window, operand 3, single buffered']
    #allocation7 [shape = 's32[1]{0}', space=sflag, size = 0x4, scoped, tag = 'scoped memory for tpu_custom_call.1']
    #allocation8 [shape = 'u8[16384]{0}', space=vmem, size = 0x4000, scoped, tag = 'input window, operand 4, single buffered']
    #allocation9 [shape = 'u8[16384]{0}', space=vmem, size = 0x4000, scoped, tag = 'input window, operand 8, single buffered']
    #allocation10 [shape = 's32[1]{0}', space=sflag, size = 0x4, scoped, tag = 'scoped memory for tpu_custom_call.1']
    #allocation11 [shape = 'u8[16384]{0}', space=vmem, size = 0x4000, scoped, tag = 'input window, operand 10, single buffered']
    #allocation12 [shape = 'u8[8192]{0}', space=vmem, size = 0x2000, scoped, tag = 'output window, operand 0']
    %25 = vsyncpa [#allocation4], 0
    %26 = vsyncpa [#allocation7], 0
    %27 = vsyncpa [#allocation10], 0
    %28 = vsyncpa [#allocation5], 0
    %s29 = scalar_lea.sflag [#allocation5], 1
    %30 = vsyncpa %s29, 0
    loop: start=0, step=1, limit=6
    $region2: #{tpu_custom_call.1} parent=1 // loop_pre_header
      _
    $region3: #{tpu_custom_call.1} parent=1 // loop_header
      %s32 = sphi 0, %s36
      %p33 = scmp.ge.s32.totalorder %s32, 6
      %s42 = sphi 0, %s44
      %s45 = sphi 0, %s42
      %s46 = sphi 0, %s45
      %s62 = sphi 0, %s46
      %s68 = sphi 0, %s70
      %s71 = sphi 0, %s68
      %s72 = sphi 0, %s71
      %s88 = sphi 0, %s72
      %s92 = sphi 0, %s92
      %s94 = sphi 0, %s92
      %s95 = sphi 0, %s94
      %s109 = sphi 0, %s95
      %s113 = sphi 0, %s113
      %s115 = sphi 0, %s113
      %s116 = sphi 0, %s115
      %s130 = sphi 0, %s116
      %s134 = sphi 0, %s134
      %s136 = sphi 0, %s134
      %s137 = sphi 0, %s136
      %s151 = sphi 0, %s137
      %s155 = sphi 0, %s155
      %s157 = sphi 0, %s155
      %s158 = sphi 0, %s157
      %s172 = sphi 0, %s158
      %s176 = sphi 0, %s176
      %s178 = sphi 0, %s176
      %s179 = sphi 0, %s178
      %s193 = sphi 0, %s179
      %s197 = sphi 0, %s197
      %s199 = sphi 0, %s197
      %s200 = sphi 0, %s199
      %s214 = sphi 0, %s200
      %s218 = sphi 0, %s218
      %s220 = sphi 0, %s218
      %s221 = sphi 0, %s220
      %s235 = sphi 0, %s221
      %s239 = sphi 0, %s239
      %s241 = sphi 0, %s239
      %s242 = sphi 0, %s241
      %s256 = sphi 0, %s242
      %s260 = sphi 0, %s260
      %s262 = sphi 0, %s260
      %s263 = sphi 0, %s262
      %s277 = sphi 0, %s263
      %s281 = sphi 0, %s281
      %s283 = sphi 0, %s281
      %s284 = sphi 0, %s283
      %s298 = sphi 0, %s284
      %s302 = sphi 0, %s302
      %s304 = sphi 0, %s302
      %s305 = sphi 0, %s304
      %s319 = sphi 0, %s305
      %s323 = sphi 0, %s323
      %s325 = sphi 0, %s323
      %s326 = sphi 0, %s325
      %s340 = sphi 0, %s326
      %s344 = sphi 0, %s344
      %s346 = sphi 0, %s344
      %s347 = sphi 0, %s346
      %s361 = sphi 0, %s347
      %s365 = sphi 0, %s365
      %s367 = sphi 0, %s365
      %s368 = sphi 0, %s367
      %s382 = sphi 0, %s368
      %s386 = sphi 0, %s386
      %s388 = sphi 0, %s386
      %s389 = sphi 0, %s388
      %s403 = sphi 0, %s389
      %s407 = sphi 0, %s407
      %s409 = sphi 0, %s407
      %s410 = sphi 0, %s409
      %s424 = sphi 0, %s410
      %s428 = sphi 0, %s428
      %s430 = sphi 0, %s428
      %s431 = sphi 0, %s430
      %s445 = sphi 0, %s431
      %s449 = sphi 0, %s449
      %s451 = sphi 0, %s449
      %s452 = sphi 0, %s451
      %s466 = sphi 0, %s452
      %s472 = sphi 0, %s474
      %s475 = sphi 0, %s472
      %s476 = sphi 0, %s475
      %s492 = sphi 0, %s476
    $region4: #{tpu_custom_call.1} parent=1 // loop_header_branch
      %35 = sbr.rel (%p33) target = $region8
    $region5: #{tpu_custom_call.1} parent=1 // loop_body
      %s37 = ssub.s32 %s32, 1
      %s38 = ssub.s32 %s32, 2
      %s39 = sadd.s32 %s32, 1
      %s40 = ssub.s32 %s32, %s39
      %p41 = scmp.eq.s32.totalorder %s40, 0
      %s43 = sadd.s32 %s42, 1
      %s44 = scalar_select %p41, %s42, %s43
      %p47 = pneg %p41
      %p48 = scmp.eq.s32.totalorder %s32, 3
      %p49 = por %p47, %p48
      %p50 = scmp.ne.s32.totalorder %s42, %s45
      %p51 = scmp.eq.s32.totalorder %s32, 0
      %p52 = por %p50, %p51
      %p53 = scmp.ne.s32.totalorder %s42, %s45
      %p54 = scmp.eq.s32.totalorder %s37, 3
      %p55 = por %p53, %p54
      %p56 = scmp.ne.s32.totalorder %s45, %s46
      %p57 = scmp.eq.s32.totalorder %s37, 0
      %p58 = por %p56, %p57
      %p59 = scmp.ne.s32.totalorder %s45, %s46
      %p60 = scmp.eq.s32.totalorder %s38, 3
      %p61 = por %p59, %p60
      %p63 = scmp.ne.s32.totalorder %s46, %s62
      %p64 = scmp.eq.s32.totalorder %s38, 0
      %p65 = por %p63, %p64
      %s66 = ssub.s32 %s32, %s39
      %p67 = scmp.eq.s32.totalorder %s66, 0
      %s69 = sadd.s32 %s68, 1
      %s70 = scalar_select %p67, %s68, %s69
      %p73 = pneg %p67
      %p74 = scmp.eq.s32.totalorder %s32, 3
      %p75 = por %p73, %p74
      %p76 = scmp.ne.s32.totalorder %s68, %s71
      %p77 = scmp.eq.s32.totalorder %s32, 0
      %p78 = por %p76, %p77
      %p79 = scmp.ne.s32.totalorder %s68, %s71
      %p80 = scmp.eq.s32.totalorder %s37, 3
      %p81 = por %p79, %p80
      %p82 = scmp.ne.s32.totalorder %s71, %s72
      %p83 = scmp.eq.s32.totalorder %s37, 0
      %p84 = por %p82, %p83
      %p85 = scmp.ne.s32.totalorder %s71, %s72
      %p86 = scmp.eq.s32.totalorder %s38, 3
      %p87 = por %p85, %p86
      %p89 = scmp.ne.s32.totalorder %s72, %s88
      %p90 = scmp.eq.s32.totalorder %s38, 0
      %p91 = por %p89, %p90
      %s93 = sadd.s32 %s92, 1
      %p96 = scmp.eq.s32.totalorder %s32, 3
      %p97 = scmp.ne.s32.totalorder %s92, %s94
      %p98 = scmp.eq.s32.totalorder %s32, 0
      %p99 = por %p97, %p98
      %p100 = scmp.ne.s32.totalorder %s92, %s94
      %p101 = scmp.eq.s32.totalorder %s37, 3
      %p102 = por %p100, %p101
      %p103 = scmp.ne.s32.totalorder %s94, %s95
      %p104 = scmp.eq.s32.totalorder %s37, 0
      %p105 = por %p103, %p104
      %p106 = scmp.ne.s32.totalorder %s94, %s95
      %p107 = scmp.eq.s32.totalorder %s38, 3
      %p108 = por %p106, %p107
      %p110 = scmp.ne.s32.totalorder %s95, %s109
      %p111 = scmp.eq.s32.totalorder %s38, 0
      %p112 = por %p110, %p111
      %s114 = sadd.s32 %s113, 1
      %p117 = scmp.eq.s32.totalorder %s32, 3
      %p118 = scmp.ne.s32.totalorder %s113, %s115
      %p119 = scmp.eq.s32.totalorder %s32, 0
      %p120 = por %p118, %p119
      %p121 = scmp.ne.s32.totalorder %s113, %s115
      %p122 = scmp.eq.s32.totalorder %s37, 3
      %p123 = por %p121, %p122
      %p124 = scmp.ne.s32.totalorder %s115, %s116
      %p125 = scmp.eq.s32.totalorder %s37, 0
      %p126 = por %p124, %p125
      %p127 = scmp.ne.s32.totalorder %s115, %s116
      %p128 = scmp.eq.s32.totalorder %s38, 3
      %p129 = por %p127, %p128
      %p131 = scmp.ne.s32.totalorder %s116, %s130
      %p132 = scmp.eq.s32.totalorder %s38, 0
      %p133 = por %p131, %p132
      %s135 = sadd.s32 %s134, 1
      %p138 = scmp.eq.s32.totalorder %s32, 3
      %p139 = scmp.ne.s32.totalorder %s134, %s136
      %p140 = scmp.eq.s32.totalorder %s32, 0
      %p141 = por %p139, %p140
      %p142 = scmp.ne.s32.totalorder %s134, %s136
      %p143 = scmp.eq.s32.totalorder %s37, 3
      %p144 = por %p142, %p143
      %p145 = scmp.ne.s32.totalorder %s136, %s137
      %p146 = scmp.eq.s32.totalorder %s37, 0
      %p147 = por %p145, %p146
      %p148 = scmp.ne.s32.totalorder %s136, %s137
      %p149 = scmp.eq.s32.totalorder %s38, 3
      %p150 = por %p148, %p149
      %p152 = scmp.ne.s32.totalorder %s137, %s151
      %p153 = scmp.eq.s32.totalorder %s38, 0
      %p154 = por %p152, %p153
      %s156 = sadd.s32 %s155, 1
      %p159 = scmp.eq.s32.totalorder %s32, 3
      %p160 = scmp.ne.s32.totalorder %s155, %s157
      %p161 = scmp.eq.s32.totalorder %s32, 0
      %p162 = por %p160, %p161
      %p163 = scmp.ne.s32.totalorder %s155, %s157
      %p164 = scmp.eq.s32.totalorder %s37, 3
      %p165 = por %p163, %p164
      %p166 = scmp.ne.s32.totalorder %s157, %s158
      %p167 = scmp.eq.s32.totalorder %s37, 0
      %p168 = por %p166, %p167
      %p169 = scmp.ne.s32.totalorder %s157, %s158
      %p170 = scmp.eq.s32.totalorder %s38, 3
      %p171 = por %p169, %p170
      %p173 = scmp.ne.s32.totalorder %s158, %s172
      %p174 = scmp.eq.s32.totalorder %s38, 0
      %p175 = por %p173, %p174
      %s177 = sadd.s32 %s176, 1
      %p180 = scmp.eq.s32.totalorder %s32, 3
      %p181 = scmp.ne.s32.totalorder %s176, %s178
      %p182 = scmp.eq.s32.totalorder %s32, 0
      %p183 = por %p181, %p182
      %p184 = scmp.ne.s32.totalorder %s176, %s178
      %p185 = scmp.eq.s32.totalorder %s37, 3
      %p186 = por %p184, %p185
      %p187 = scmp.ne.s32.totalorder %s178, %s179
      %p188 = scmp.eq.s32.totalorder %s37, 0
      %p189 = por %p187, %p188
      %p190 = scmp.ne.s32.totalorder %s178, %s179
      %p191 = scmp.eq.s32.totalorder %s38, 3
      %p192 = por %p190, %p191
      %p194 = scmp.ne.s32.totalorder %s179, %s193
      %p195 = scmp.eq.s32.totalorder %s38, 0
      %p196 = por %p194, %p195
      %s198 = sadd.s32 %s197, 1
      %p201 = scmp.eq.s32.totalorder %s32, 3
      %p202 = scmp.ne.s32.totalorder %s197, %s199
      %p203 = scmp.eq.s32.totalorder %s32, 0
      %p204 = por %p202, %p203
      %p205 = scmp.ne.s32.totalorder %s197, %s199
      %p206 = scmp.eq.s32.totalorder %s37, 3
      %p207 = por %p205, %p206
      %p208 = scmp.ne.s32.totalorder %s199, %s200
      %p209 = scmp.eq.s32.totalorder %s37, 0
      %p210 = por %p208, %p209
      %p211 = scmp.ne.s32.totalorder %s199, %s200
      %p212 = scmp.eq.s32.totalorder %s38, 3
      %p213 = por %p211, %p212
      %p215 = scmp.ne.s32.totalorder %s200, %s214
      %p216 = scmp.eq.s32.totalorder %s38, 0
      %p217 = por %p215, %p216
      %s219 = sadd.s32 %s218, 1
      %p222 = scmp.eq.s32.totalorder %s32, 3
      %p223 = scmp.ne.s32.totalorder %s218, %s220
      %p224 = scmp.eq.s32.totalorder %s32, 0
      %p225 = por %p223, %p224
      %p226 = scmp.ne.s32.totalorder %s218, %s220
      %p227 = scmp.eq.s32.totalorder %s37, 3
      %p228 = por %p226, %p227
      %p229 = scmp.ne.s32.totalorder %s220, %s221
      %p230 = scmp.eq.s32.totalorder %s37, 0
      %p231 = por %p229, %p230
      %p232 = scmp.ne.s32.totalorder %s220, %s221
      %p233 = scmp.eq.s32.totalorder %s38, 3
      %p234 = por %p232, %p233
      %p236 = scmp.ne.s32.totalorder %s221, %s235
      %p237 = scmp.eq.s32.totalorder %s38, 0
      %p238 = por %p236, %p237
      %s240 = sadd.s32 %s239, 1
      %p243 = scmp.eq.s32.totalorder %s32, 3
      %p244 = scmp.ne.s32.totalorder %s239, %s241
      %p245 = scmp.eq.s32.totalorder %s32, 0
      %p246 = por %p244, %p245
      %p247 = scmp.ne.s32.totalorder %s239, %s241
      %p248 = scmp.eq.s32.totalorder %s37, 3
      %p249 = por %p247, %p248
      %p250 = scmp.ne.s32.totalorder %s241, %s242
      %p251 = scmp.eq.s32.totalorder %s37, 0
      %p252 = por %p250, %p251
      %p253 = scmp.ne.s32.totalorder %s241, %s242
      %p254 = scmp.eq.s32.totalorder %s38, 3
      %p255 = por %p253, %p254
      %p257 = scmp.ne.s32.totalorder %s242, %s256
      %p258 = scmp.eq.s32.totalorder %s38, 0
      %p259 = por %p257, %p258
      %s261 = sadd.s32 %s260, 1
      %p264 = scmp.eq.s32.totalorder %s32, 3
      %p265 = scmp.ne.s32.totalorder %s260, %s262
      %p266 = scmp.eq.s32.totalorder %s32, 0
      %p267 = por %p265, %p266
      %p268 = scmp.ne.s32.totalorder %s260, %s262
      %p269 = scmp.eq.s32.totalorder %s37, 3
      %p270 = por %p268, %p269
      %p271 = scmp.ne.s32.totalorder %s262, %s263
      %p272 = scmp.eq.s32.totalorder %s37, 0
      %p273 = por %p271, %p272
      %p274 = scmp.ne.s32.totalorder %s262, %s263
      %p275 = scmp.eq.s32.totalorder %s38, 3
      %p276 = por %p274, %p275
      %p278 = scmp.ne.s32.totalorder %s263, %s277
      %p279 = scmp.eq.s32.totalorder %s38, 0
      %p280 = por %p278, %p279
      %s282 = sadd.s32 %s281, 1
      %p285 = scmp.eq.s32.totalorder %s32, 3
      %p286 = scmp.ne.s32.totalorder %s281, %s283
      %p287 = scmp.eq.s32.totalorder %s32, 0
      %p288 = por %p286, %p287
      %p289 = scmp.ne.s32.totalorder %s281, %s283
      %p290 = scmp.eq.s32.totalorder %s37, 3
      %p291 = por %p289, %p290
      %p292 = scmp.ne.s32.totalorder %s283, %s284
      %p293 = scmp.eq.s32.totalorder %s37, 0
      %p294 = por %p292, %p293
      %p295 = scmp.ne.s32.totalorder %s283, %s284
      %p296 = scmp.eq.s32.totalorder %s38, 3
      %p297 = por %p295, %p296
      %p299 = scmp.ne.s32.totalorder %s284, %s298
      %p300 = scmp.eq.s32.totalorder %s38, 0
      %p301 = por %p299, %p300
      %s303 = sadd.s32 %s302, 1
      %p306 = scmp.eq.s32.totalorder %s32, 3
      %p307 = scmp.ne.s32.totalorder %s302, %s304
      %p308 = scmp.eq.s32.totalorder %s32, 0
      %p309 = por %p307, %p308
      %p310 = scmp.ne.s32.totalorder %s302, %s304
      %p311 = scmp.eq.s32.totalorder %s37, 3
      %p312 = por %p310, %p311
      %p313 = scmp.ne.s32.totalorder %s304, %s305
      %p314 = scmp.eq.s32.totalorder %s37, 0
      %p315 = por %p313, %p314
      %p316 = scmp.ne.s32.totalorder %s304, %s305
      %p317 = scmp.eq.s32.totalorder %s38, 3
      %p318 = por %p316, %p317
      %p320 = scmp.ne.s32.totalorder %s305, %s319
      %p321 = scmp.eq.s32.totalorder %s38, 0
      %p322 = por %p320, %p321
      %s324 = sadd.s32 %s323, 1
      %p327 = scmp.eq.s32.totalorder %s32, 3
      %p328 = scmp.ne.s32.totalorder %s323, %s325
      %p329 = scmp.eq.s32.totalorder %s32, 0
      %p330 = por %p328, %p329
      %p331 = scmp.ne.s32.totalorder %s323, %s325
      %p332 = scmp.eq.s32.totalorder %s37, 3
      %p333 = por %p331, %p332
      %p334 = scmp.ne.s32.totalorder %s325, %s326
      %p335 = scmp.eq.s32.totalorder %s37, 0
      %p336 = por %p334, %p335
      %p337 = scmp.ne.s32.totalorder %s325, %s326
      %p338 = scmp.eq.s32.totalorder %s38, 3
      %p339 = por %p337, %p338
      %p341 = scmp.ne.s32.totalorder %s326, %s340
      %p342 = scmp.eq.s32.totalorder %s38, 0
      %p343 = por %p341, %p342
      %s345 = sadd.s32 %s344, 1
      %p348 = scmp.eq.s32.totalorder %s32, 3
      %p349 = scmp.ne.s32.totalorder %s344, %s346
      %p350 = scmp.eq.s32.totalorder %s32, 0
      %p351 = por %p349, %p350
      %p352 = scmp.ne.s32.totalorder %s344, %s346
      %p353 = scmp.eq.s32.totalorder %s37, 3
      %p354 = por %p352, %p353
      %p355 = scmp.ne.s32.totalorder %s346, %s347
      %p356 = scmp.eq.s32.totalorder %s37, 0
      %p357 = por %p355, %p356
      %p358 = scmp.ne.s32.totalorder %s346, %s347
      %p359 = scmp.eq.s32.totalorder %s38, 3
      %p360 = por %p358, %p359
      %p362 = scmp.ne.s32.totalorder %s347, %s361
      %p363 = scmp.eq.s32.totalorder %s38, 0
      %p364 = por %p362, %p363
      %s366 = sadd.s32 %s365, 1
      %p369 = scmp.eq.s32.totalorder %s32, 3
      %p370 = scmp.ne.s32.totalorder %s365, %s367
      %p371 = scmp.eq.s32.totalorder %s32, 0
      %p372 = por %p370, %p371
      %p373 = scmp.ne.s32.totalorder %s365, %s367
      %p374 = scmp.eq.s32.totalorder %s37, 3
      %p375 = por %p373, %p374
      %p376 = scmp.ne.s32.totalorder %s367, %s368
      %p377 = scmp.eq.s32.totalorder %s37, 0
      %p378 = por %p376, %p377
      %p379 = scmp.ne.s32.totalorder %s367, %s368
      %p380 = scmp.eq.s32.totalorder %s38, 3
      %p381 = por %p379, %p380
      %p383 = scmp.ne.s32.totalorder %s368, %s382
      %p384 = scmp.eq.s32.totalorder %s38, 0
      %p385 = por %p383, %p384
      %s387 = sadd.s32 %s386, 1
      %p390 = scmp.eq.s32.totalorder %s32, 3
      %p391 = scmp.ne.s32.totalorder %s386, %s388
      %p392 = scmp.eq.s32.totalorder %s32, 0
      %p393 = por %p391, %p392
      %p394 = scmp.ne.s32.totalorder %s386, %s388
      %p395 = scmp.eq.s32.totalorder %s37, 3
      %p396 = por %p394, %p395
      %p397 = scmp.ne.s32.totalorder %s388, %s389
      %p398 = scmp.eq.s32.totalorder %s37, 0
      %p399 = por %p397, %p398
      %p400 = scmp.ne.s32.totalorder %s388, %s389
      %p401 = scmp.eq.s32.totalorder %s38, 3
      %p402 = por %p400, %p401
      %p404 = scmp.ne.s32.totalorder %s389, %s403
      %p405 = scmp.eq.s32.totalorder %s38, 0
      %p406 = por %p404, %p405
      %s408 = sadd.s32 %s407, 1
      %p411 = scmp.eq.s32.totalorder %s32, 3
      %p412 = scmp.ne.s32.totalorder %s407, %s409
      %p413 = scmp.eq.s32.totalorder %s32, 0
      %p414 = por %p412, %p413
      %p415 = scmp.ne.s32.totalorder %s407, %s409
      %p416 = scmp.eq.s32.totalorder %s37, 3
      %p417 = por %p415, %p416
      %p418 = scmp.ne.s32.totalorder %s409, %s410
      %p419 = scmp.eq.s32.totalorder %s37, 0
      %p420 = por %p418, %p419
      %p421 = scmp.ne.s32.totalorder %s409, %s410
      %p422 = scmp.eq.s32.totalorder %s38, 3
      %p423 = por %p421, %p422
      %p425 = scmp.ne.s32.totalorder %s410, %s424
      %p426 = scmp.eq.s32.totalorder %s38, 0
      %p427 = por %p425, %p426
      %s429 = sadd.s32 %s428, 1
      %p432 = scmp.eq.s32.totalorder %s32, 3
      %p433 = scmp.ne.s32.totalorder %s428, %s430
      %p434 = scmp.eq.s32.totalorder %s32, 0
      %p435 = por %p433, %p434
      %p436 = scmp.ne.s32.totalorder %s428, %s430
      %p437 = scmp.eq.s32.totalorder %s37, 3
      %p438 = por %p436, %p437
      %p439 = scmp.ne.s32.totalorder %s430, %s431
      %p440 = scmp.eq.s32.totalorder %s37, 0
      %p441 = por %p439, %p440
      %p442 = scmp.ne.s32.totalorder %s430, %s431
      %p443 = scmp.eq.s32.totalorder %s38, 3
      %p444 = por %p442, %p443
      %p446 = scmp.ne.s32.totalorder %s431, %s445
      %p447 = scmp.eq.s32.totalorder %s38, 0
      %p448 = por %p446, %p447
      %s450 = sadd.s32 %s449, 1
      %p453 = scmp.eq.s32.totalorder %s32, 3
      %p454 = scmp.ne.s32.totalorder %s449, %s451
      %p455 = scmp.eq.s32.totalorder %s32, 0
      %p456 = por %p454, %p455
      %p457 = scmp.ne.s32.totalorder %s449, %s451
      %p458 = scmp.eq.s32.totalorder %s37, 3
      %p459 = por %p457, %p458
      %p460 = scmp.ne.s32.totalorder %s451, %s452
      %p461 = scmp.eq.s32.totalorder %s37, 0
      %p462 = por %p460, %p461
      %p463 = scmp.ne.s32.totalorder %s451, %s452
      %p464 = scmp.eq.s32.totalorder %s38, 3
      %p465 = por %p463, %p464
      %p467 = scmp.ne.s32.totalorder %s452, %s466
      %p468 = scmp.eq.s32.totalorder %s38, 0
      %p469 = por %p467, %p468
      %s470 = ssub.s32 %s32, %s39
      %p471 = scmp.eq.s32.totalorder %s470, 0
      %s473 = sadd.s32 %s472, 1
      %s474 = scalar_select %p471, %s472, %s473
      %p477 = pneg %p471
      %p478 = scmp.eq.s32.totalorder %s32, 3
      %p479 = por %p477, %p478
      %p480 = scmp.ne.s32.totalorder %s472, %s475
      %p481 = scmp.eq.s32.totalorder %s32, 0
      %p482 = por %p480, %p481
      %p483 = scmp.ne.s32.totalorder %s472, %s475
      %p484 = scmp.eq.s32.totalorder %s37, 3
      %p485 = por %p483, %p484
      %p486 = scmp.ne.s32.totalorder %s475, %s476
      %p487 = scmp.eq.s32.totalorder %s37, 0
      %p488 = por %p486, %p487
      %p489 = scmp.ne.s32.totalorder %s475, %s476
      %p490 = scmp.eq.s32.totalorder %s38, 3
      %p491 = por %p489, %p490
      %p493 = scmp.ne.s32.totalorder %s476, %s492
      %p494 = scmp.eq.s32.totalorder %s38, 0
      %p495 = por %p493, %p494
      %p496 = scmp.le.s32.totalorder 1, %s32
      %p497 = scmp.lt.s32.totalorder %s32, 5
      %p498 = pnand %p496, %p497
      %p499 = pneg %p498
      // Predicated region
      $region9: #{tpu_custom_call.1} parent=5 // pred_check
        _
      $region10: #{tpu_custom_call.1} parent=5 // pred_check_branch
        %501 = sbr.rel (%p498) target = $region12
      $region11: #{tpu_custom_call.1} parent=5 // pred_region
        %s502 = ssub.s32 %s32, 1
        // Predicated region
        $region13: #{tpu_custom_call.1} parent=11 // pred_check
          %p503 = pneg %p105
        $region14: #{tpu_custom_call.1} parent=11 // pred_check_branch
          %505 = sbr.rel (%p503) target = $region16
        $region15: #{tpu_custom_call.1} parent=11 // pred_region
          %507 = vsyncadd [#allocation4], 0
          %s508 = sshll.u32 %s2, 4
          %s509 = int_to_ptr.hbm [resolvable:$true] %s508
          %s510 = sshll.u32 [#allocation3], 4
          %s511 = int_to_ptr.vmem [resolvable:$true] %s510
          %516 = dma.hbm_to_vmem [thread:$0]  %s509, 512, %s511, [#allocation4], 128, 128, 8
        $region16: #{tpu_custom_call.1} parent=11 // pred_fallthru
          _
        // Predicated region
        $region17: #{tpu_custom_call.1} parent=11 // pred_check
          %p517 = pneg %p126
        $region18: #{tpu_custom_call.1} parent=11 // pred_check_branch
          %519 = sbr.rel (%p517) target = $region20
        $region19: #{tpu_custom_call.1} parent=11 // pred_region
          %521 = vsyncadd [#allocation7], 0
          %s522 = sshll.u32 %s3, 4
          %s523 = int_to_ptr.hbm [resolvable:$true] %s522
          %s524 = sshll.u32 [#allocation6], 4
          %s525 = int_to_ptr.vmem [resolvable:$true] %s524
          %530 = dma.hbm_to_vmem [thread:$0]  %s523, 512, %s525, [#allocation7], 128, 128, 8
        $region20: #{tpu_custom_call.1} parent=11 // pred_fallthru
          _
        // Predicated region
        $region21: #{tpu_custom_call.1} parent=11 // pred_check
          %p531 = pneg %p147
        $region22: #{tpu_custom_call.1} parent=11 // pred_check_branch
          %533 = sbr.rel (%p531) target = $region24
        $region23: #{tpu_custom_call.1} parent=11 // pred_region
          %535 = vsyncadd [#allocation7], 0
          %s536 = sshll.u32 %s4, 4
          %s537 = int_to_ptr.hbm [resolvable:$true] %s536
          %s538 = sshll.u32 [#allocation8], 4
          %s539 = int_to_ptr.vmem [resolvable:$true] %s538
          %544 = dma.hbm_to_vmem [thread:$0]  %s537, 512, %s539, [#allocation7], 128, 128, 8
        $region24: #{tpu_custom_call.1} parent=11 // pred_fallthru
          _
        // Predicated region
        $region25: #{tpu_custom_call.1} parent=11 // pred_check
          %p545 = pneg %p168
        $region26: #{tpu_custom_call.1} parent=11 // pred_check_branch
          %547 = sbr.rel (%p545) target = $region28
        $region27: #{tpu_custom_call.1} parent=11 // pred_region
          _
        $region28: #{tpu_custom_call.1} parent=11 // pred_fallthru
          _
        // Predicated region
        $region29: #{tpu_custom_call.1} parent=11 // pred_check
          %p548 = pneg %p189
        $region30: #{tpu_custom_call.1} parent=11 // pred_check_branch
          %550 = sbr.rel (%p548) target = $region32
        $region31: #{tpu_custom_call.1} parent=11 // pred_region
          _
        $region32: #{tpu_custom_call.1} parent=11 // pred_fallthru
          _
        // Predicated region
        $region33: #{tpu_custom_call.1} parent=11 // pred_check
          %p551 = pneg %p210
        $region34: #{tpu_custom_call.1} parent=11 // pred_check_branch
          %553 = sbr.rel (%p551) target = $region36
        $region35: #{tpu_custom_call.1} parent=11 // pred_region
          _
        $region36: #{tpu_custom_call.1} parent=11 // pred_fallthru
          _
        // Predicated region
        $region37: #{tpu_custom_call.1} parent=11 // pred_check
          %p554 = pneg %p231
        $region38: #{tpu_custom_call.1} parent=11 // pred_check_branch
          %556 = sbr.rel (%p554) target = $region40
        $region39: #{tpu_custom_call.1} parent=11 // pred_region
          %558 = vsyncadd [#allocation10], 0
          %s559 = sshll.u32 %s8, 4
          %s560 = int_to_ptr.hbm [resolvable:$true] %s559
          %s561 = sshll.u32 [#allocation9], 4
          %s562 = int_to_ptr.vmem [resolvable:$true] %s561
          %567 = dma.hbm_to_vmem [thread:$0]  %s560, 512, %s562, [#allocation10], 128, 128, 8
        $region40: #{tpu_custom_call.1} parent=11 // pred_fallthru
          _
        // Predicated region
        $region41: #{tpu_custom_call.1} parent=11 // pred_check
          %p568 = pneg %p252
        $region42: #{tpu_custom_call.1} parent=11 // pred_check_branch
          %570 = sbr.rel (%p568) target = $region44
        $region43: #{tpu_custom_call.1} parent=11 // pred_region
          _
        $region44: #{tpu_custom_call.1} parent=11 // pred_fallthru
          _
        // Predicated region
        $region45: #{tpu_custom_call.1} parent=11 // pred_check
          %p571 = pneg %p273
        $region46: #{tpu_custom_call.1} parent=11 // pred_check_branch
          %573 = sbr.rel (%p571) target = $region48
        $region47: #{tpu_custom_call.1} parent=11 // pred_region
          %575 = vsyncadd [#allocation10], 0
          %s576 = sshll.u32 %s10, 4
          %s577 = int_to_ptr.hbm [resolvable:$true] %s576
          %s578 = sshll.u32 [#allocation11], 4
          %s579 = int_to_ptr.vmem [resolvable:$true] %s578
          %584 = dma.hbm_to_vmem [thread:$0]  %s577, 512, %s579, [#allocation10], 128, 128, 8
        $region48: #{tpu_custom_call.1} parent=11 // pred_fallthru
          _
        // Predicated region
        $region49: #{tpu_custom_call.1} parent=11 // pred_check
          %p585 = pneg %p294
        $region50: #{tpu_custom_call.1} parent=11 // pred_check_branch
          %587 = sbr.rel (%p585) target = $region52
        $region51: #{tpu_custom_call.1} parent=11 // pred_region
          _
        $region52: #{tpu_custom_call.1} parent=11 // pred_fallthru
          _
        // Predicated region
        $region53: #{tpu_custom_call.1} parent=11 // pred_check
          %p588 = pneg %p315
        $region54: #{tpu_custom_call.1} parent=11 // pred_check_branch
          %590 = sbr.rel (%p588) target = $region56
        $region55: #{tpu_custom_call.1} parent=11 // pred_region
          _
        $region56: #{tpu_custom_call.1} parent=11 // pred_fallthru
          _
        // Predicated region
        $region57: #{tpu_custom_call.1} parent=11 // pred_check
          %p591 = pneg %p336
        $region58: #{tpu_custom_call.1} parent=11 // pred_check_branch
          %593 = sbr.rel (%p591) target = $region60
        $region59: #{tpu_custom_call.1} parent=11 // pred_region
          _
        $region60: #{tpu_custom_call.1} parent=11 // pred_fallthru
          _
        // Predicated region
        $region61: #{tpu_custom_call.1} parent=11 // pred_check
          %p594 = pneg %p357
        $region62: #{tpu_custom_call.1} parent=11 // pred_check_branch
          %596 = sbr.rel (%p594) target = $region64
        $region63: #{tpu_custom_call.1} parent=11 // pred_region
          _
        $region64: #{tpu_custom_call.1} parent=11 // pred_fallthru
          _
        // Predicated region
        $region65: #{tpu_custom_call.1} parent=11 // pred_check
          %p597 = pneg %p378
        $region66: #{tpu_custom_call.1} parent=11 // pred_check_branch
          %599 = sbr.rel (%p597) target = $region68
        $region67: #{tpu_custom_call.1} parent=11 // pred_region
          _
        $region68: #{tpu_custom_call.1} parent=11 // pred_fallthru
          _
        // Predicated region
        $region69: #{tpu_custom_call.1} parent=11 // pred_check
          %p600 = pneg %p399
        $region70: #{tpu_custom_call.1} parent=11 // pred_check_branch
          %602 = sbr.rel (%p600) target = $region72
        $region71: #{tpu_custom_call.1} parent=11 // pred_region
          _
        $region72: #{tpu_custom_call.1} parent=11 // pred_fallthru
          _
        // Predicated region
        $region73: #{tpu_custom_call.1} parent=11 // pred_check
          %p603 = pneg %p420
        $region74: #{tpu_custom_call.1} parent=11 // pred_check_branch
          %605 = sbr.rel (%p603) target = $region76
        $region75: #{tpu_custom_call.1} parent=11 // pred_region
          _
        $region76: #{tpu_custom_call.1} parent=11 // pred_fallthru
          _
        // Predicated region
        $region77: #{tpu_custom_call.1} parent=11 // pred_check
          %p606 = pneg %p441
        $region78: #{tpu_custom_call.1} parent=11 // pred_check_branch
          %608 = sbr.rel (%p606) target = $region80
        $region79: #{tpu_custom_call.1} parent=11 // pred_region
          _
        $region80: #{tpu_custom_call.1} parent=11 // pred_fallthru
          _
        // Predicated region
        $region81: #{tpu_custom_call.1} parent=11 // pred_check
          %p609 = pneg %p462
        $region82: #{tpu_custom_call.1} parent=11 // pred_check_branch
          %611 = sbr.rel (%p609) target = $region84
        $region83: #{tpu_custom_call.1} parent=11 // pred_region
          _
        $region84: #{tpu_custom_call.1} parent=11 // pred_fallthru
          _
      $region12: #{tpu_custom_call.1} parent=5 // pred_fallthru
        _
      %p612 = scmp.lt.s32.totalorder %s32, 4
      // Predicated region
      $region85: #{tpu_custom_call.1} parent=5 // pred_check
        %p613 = pneg %p612
      $region86: #{tpu_custom_call.1} parent=5 // pred_check_branch
        %615 = sbr.rel (%p613) target = $region88
      $region87: #{tpu_custom_call.1} parent=5 // pred_region
        // Predicated region
        $region89: #{tpu_custom_call.1} parent=87 // pred_check
          %p616 = pneg %p52
        $region90: #{tpu_custom_call.1} parent=87 // pred_check_branch
          %618 = sbr.rel (%p616) target = $region92
        $region91: #{tpu_custom_call.1} parent=87 // pred_region
          %p619 = scmp.lt.s32.totalorder %s32, 3
          %s620 = scalar_select %p619, %s32, 3
          %s621 = smul.addr %s620, 8
          %s622 = scalar_lea.vmem %s0, %s621
        $region92: #{tpu_custom_call.1} parent=87 // pred_fallthru
          _
        // Predicated region
        $region93: #{tpu_custom_call.1} parent=87 // pred_check
          %p623 = pneg %p78
        $region94: #{tpu_custom_call.1} parent=87 // pred_check_branch
          %625 = sbr.rel (%p623) target = $region96
        $region95: #{tpu_custom_call.1} parent=87 // pred_region
          %p626 = scmp.lt.s32.totalorder %s32, 3
          %s627 = scalar_select %p626, %s32, 3
          %s628 = smul.addr %s627, 2
          %s629 = smul.addr %s628, 8
          %s630 = scalar_lea.vmem %s1, %s629
        $region96: #{tpu_custom_call.1} parent=87 // pred_fallthru
          _
      $region88: #{tpu_custom_call.1} parent=5 // pred_fallthru
        _
      %p631 = scmp.le.s32.totalorder 1, %s32
      %p632 = scmp.lt.s32.totalorder %s32, 5
      %p633 = pnand %p631, %p632
      %p634 = pneg %p633
      // Predicated region
      $region97: #{tpu_custom_call.1} parent=5 // pred_check
        _
      $region98: #{tpu_custom_call.1} parent=5 // pred_check_branch
        %636 = sbr.rel (%p633) target = $region100
      $region99: #{tpu_custom_call.1} parent=5 // pred_region
        %s637 = ssub.s32 %s32, 1
        // Predicated region
        $region101: #{tpu_custom_call.1} parent=99 // pred_check
          %p638 = pneg %p105
        $region102: #{tpu_custom_call.1} parent=99 // pred_check_branch
          %640 = sbr.rel (%p638) target = $region104
        $region103: #{tpu_custom_call.1} parent=99 // pred_region
          %642 = dma.done [#allocation4], 512
        $region104: #{tpu_custom_call.1} parent=99 // pred_fallthru
          _
        // Predicated region
        $region105: #{tpu_custom_call.1} parent=99 // pred_check
          %p643 = pneg %p126
        $region106: #{tpu_custom_call.1} parent=99 // pred_check_branch
          %645 = sbr.rel (%p643) target = $region108
        $region107: #{tpu_custom_call.1} parent=99 // pred_region
          %647 = dma.done [#allocation7], 512
        $region108: #{tpu_custom_call.1} parent=99 // pred_fallthru
          _
        // Predicated region
        $region109: #{tpu_custom_call.1} parent=99 // pred_check
          %p648 = pneg %p147
        $region110: #{tpu_custom_call.1} parent=99 // pred_check_branch
          %650 = sbr.rel (%p648) target = $region112
        $region111: #{tpu_custom_call.1} parent=99 // pred_region
          %652 = dma.done [#allocation7], 512
        $region112: #{tpu_custom_call.1} parent=99 // pred_fallthru
          _
        // Predicated region
        $region113: #{tpu_custom_call.1} parent=99 // pred_check
          %p653 = pneg %p231
        $region114: #{tpu_custom_call.1} parent=99 // pred_check_branch
          %655 = sbr.rel (%p653) target = $region116
        $region115: #{tpu_custom_call.1} parent=99 // pred_region
          %657 = dma.done [#allocation10], 512
        $region116: #{tpu_custom_call.1} parent=99 // pred_fallthru
          _
        // Predicated region
        $region117: #{tpu_custom_call.1} parent=99 // pred_check
          %p658 = pneg %p273
        $region118: #{tpu_custom_call.1} parent=99 // pred_check_branch
          %660 = sbr.rel (%p658) target = $region120
        $region119: #{tpu_custom_call.1} parent=99 // pred_region
          %662 = dma.done [#allocation10], 512
        $region120: #{tpu_custom_call.1} parent=99 // pred_fallthru
          _
        %p663 = scmp.lt.s32.totalorder %s37, 3
        %s664 = scalar_select %p663, %s37, 3
        %s665 = smul.addr %s664, 8
        %s666 = scalar_lea.vmem %s0, %s665
        %p667 = pneg %p58
        %p668 = pneg %p55
        %p669 = scmp.lt.s32.totalorder %s37, 3
        %s670 = scalar_select %p669, %s37, 3
        %s671 = smul.addr %s670, 2
        %s672 = smul.addr %s671, 8
        %s673 = scalar_lea.vmem %s1, %s672
        %p674 = pneg %p84
        %p675 = pneg %p81
        %p676 = pneg %p105
        %p677 = pneg %p102
        %p678 = pneg %p126
        %p679 = pneg %p123
        %p680 = pneg %p147
        %p681 = pneg %p144
        %p682 = pneg %p168
        %p683 = pneg %p165
        %p684 = pneg %p189
        %p685 = pneg %p186
        %p686 = pneg %p210
        %p687 = pneg %p207
        %p688 = pneg %p231
        %p689 = pneg %p228
        %p690 = pneg %p252
        %p691 = pneg %p249
        %p692 = pneg %p273
        %p693 = pneg %p270
        %p694 = pneg %p294
        %p695 = pneg %p291
        %p696 = pneg %p315
        %p697 = pneg %p312
        %p698 = pneg %p336
        %p699 = pneg %p333
        %p700 = pneg %p357
        %p701 = pneg %p354
        %p702 = pneg %p378
        %p703 = pneg %p375
        %p704 = pneg %p399
        %p705 = pneg %p396
        %p706 = pneg %p420
        %p707 = pneg %p417
        %p708 = pneg %p441
        %p709 = pneg %p438
        %p710 = pneg %p462
        %p711 = pneg %p459
        %p712 = pneg %p488
        %p713 = pneg %p485
        %s714 = sand.u32 %s475, 1
        %s715 = scalar_lea.sflag [#allocation5], %s714
        %s716 = sand.u32 %s475, 1
        %s717 = smul.addr %s716, 8
        %s718 = scalar_lea.vmem [#allocation12], %s717
        %p719 = scmp.lt.s32.totalorder %s37, 3
        %s720 = scalar_select %p719, %s37, 3
        %s721 = smul.addr %s720, 8
        %s722 = scalar_lea.vmem %s0, %s721
        %p723 = scmp.lt.s32.totalorder %s37, 3
        %s724 = scalar_select %p723, %s37, 3
        %s725 = smul.addr %s724, 2
        %s726 = smul.addr %s725, 8
        %s727 = scalar_lea.vmem %s1, %s726
        %v728 = vld [vmem:[%s722] sm:$0xff]
        %v729 = vadd.f32 %v728, %v728
        %v730 = vld [vmem:[%s14] sm:$0x1]
        %v731 = vld [vmem:[%s15] sm:$0x1]
        %vm732 = vcmask 261120
        %v733 = vsel %vm732, %v729, 0.0
        %734 = vadd.xlane.f32.xlu0 %v733
        %v735 = vpop.xlane.xlu0 %734
        %v736 = vrcp.pop 32.0
        %v737 = vmul.f32 32.0, %v736
        %v738 = vsub.f32 1.0, %v737
        %v739 = vmul.f32 %v736, %v738
        %v740 = vadd.f32 %v736, %v739
        %vm741 = vweird.f32 %v736
        %v742 = vsel %vm741, %v736, %v740
        %v743 = vmul.f32 %v735, %v742
        %v744 = vsub.f32 %v729, %v743
        %v745 = vmul.f32 %v744, %v744
        %v746 = vsel %vm732, %v745, 0.0
        %747 = vadd.xlane.f32.xlu0 %v746
        %v748 = vpop.xlane.xlu0 %747
        %v749 = vmul.f32 %v748, %v742
        %v750 = vadd.f32 %v749, 1e-05
        %v751 = vrsqrt.pop %v750
        %v752 = vmul.f32 %v751, %v750
        %v753 = vmul.f32 %v752, %v751
        %v754 = vmul.f32 0.5, %v753
        %v755 = vsub.f32 1.5, %v754
        %v756 = vmul.f32 %v751, %v755
        %vm757 = vweird.f32 %v750
        %vm758 = vweird.f32 %v751
        %vm759 = vmor %vm757, %vm758
        %v760 = vsel %vm759, %v751, %v756
        %v761 = vmul.f32 %v744, %v760
        %v763 = vperm.slane %v730, 0
        %v765 = vmul.f32 %v761, %v763
        %v767 = vperm.slane %v731, 0
        %v769 = vadd.f32 %v765, %v767
        %v770 = vld [vmem:[%s727] sm:$0xff]
        %v771 = vld [vmem:[%s727 + $0x8] sm:$0xff]
        %v772 = vld [vmem:[#allocation3] sm:$0xff]
        %v773 = vld [vmem:[#allocation3 + $0x8] sm:$0xff]
        %v774 = vld [vmem:[#allocation3 + $0x10] sm:$0xff]
        %v775 = vld [vmem:[#allocation3 + $0x18] sm:$0xff]
        %v776 = vld [vmem:[%s5] sm:$0x1]
        %v778 = vperm.slane %v776, 0
        %v781 = vsel %vm732, %v769, 0
        %783 = vmatpush.msra.mxu0 0.0
        %784 = vmatpush.msra.mxu0 0.0
        %785 = vmatpush.msra.mxu0 0.0
        %786 = vmatpush.msra.mxu0 0.0
        %787 = vmatpush.msra.mxu0 0.0
        %788 = vmatpush.msra.mxu0 0.0
        %789 = vmatpush.msra.mxu0 0.0
        %790 = vmatpush.msra.mxu0 0.0
        %791 = vmatpush.msra.mxu0 0.0
        %792 = vmatpush.msra.mxu0 0.0
        %793 = vmatpush.msra.mxu0 0.0
        %794 = vmatpush.msra.mxu0 0.0
        %795 = vmatpush.msra.mxu0 %v775
        %796 = vmatpush.msra.mxu0 %v774
        %797 = vmatpush.msra.mxu0 %v773
        %798 = vmatpush.msra.mxu0 %v772
        %799 = vmatmul.f32.gmra.mxu0 %v781
        %v800 = vpop.f32.mrf.mxu0
        %v801 = vadd.f32 %v778, %v800
        %802 = vdwg.mxu0
        %v803 = vld [vmem:[#allocation6] sm:$0xff]
        %v804 = vld [vmem:[#allocation6 + $0x8] sm:$0xff]
        %v805 = vld [vmem:[#allocation6 + $0x10] sm:$0xff]
        %v806 = vld [vmem:[#allocation6 + $0x18] sm:$0xff]
        %v807 = vld [vmem:[%s6] sm:$0x1]
        %v809 = vperm.slane %v807, 0
        %v812 = vsel %vm732, %v770, 0
        %v815 = vsel %vm732, %v771, 0
        %817 = vmatpush.msra.mxu0 0.0
        %818 = vmatpush.msra.mxu0 0.0
        %819 = vmatpush.msra.mxu0 0.0
        %820 = vmatpush.msra.mxu0 0.0
        %821 = vmatpush.msra.mxu0 0.0
        %822 = vmatpush.msra.mxu0 0.0
        %823 = vmatpush.msra.mxu0 0.0
        %824 = vmatpush.msra.mxu0 0.0
        %825 = vmatpush.msra.mxu0 0.0
        %826 = vmatpush.msra.mxu0 0.0
        %827 = vmatpush.msra.mxu0 0.0
        %828 = vmatpush.msra.mxu0 0.0
        %829 = vmatpush.msra.mxu0 %v806
        %830 = vmatpush.msra.mxu0 %v805
        %831 = vmatpush.msra.mxu0 %v804
        %832 = vmatpush.msra.mxu0 %v803
        %833 = vmatmul.f32.gmra.mxu0 %v812
        %v834 = vpop.f32.mrf.mxu0
        %v835 = vadd.f32 %v809, %v834
        %836 = vmatmul.f32.gmra.mxu0 %v815
        %v837 = vpop.f32.mrf.mxu0
        %v838 = vadd.f32 %v809, %v837
        %839 = vdwg.mxu0
        %v840 = vld [vmem:[#allocation8] sm:$0xff]
        %v841 = vld [vmem:[#allocation8 + $0x8] sm:$0xff]
        %v842 = vld [vmem:[#allocation8 + $0x10] sm:$0xff]
        %v843 = vld [vmem:[#allocation8 + $0x18] sm:$0xff]
        %v844 = vld [vmem:[%s7] sm:$0x1]
        %v846 = vperm.slane %v844, 0
        %848 = vmatpush.msra.mxu0 0.0
        %849 = vmatpush.msra.mxu0 0.0
        %850 = vmatpush.msra.mxu0 0.0
        %851 = vmatpush.msra.mxu0 0.0
        %852 = vmatpush.msra.mxu0 0.0
        %853 = vmatpush.msra.mxu0 0.0
        %854 = vmatpush.msra.mxu0 0.0
        %855 = vmatpush.msra.mxu0 0.0
        %856 = vmatpush.msra.mxu0 0.0
        %857 = vmatpush.msra.mxu0 0.0
        %858 = vmatpush.msra.mxu0 0.0
        %859 = vmatpush.msra.mxu0 0.0
        %860 = vmatpush.msra.mxu0 %v843
        %861 = vmatpush.msra.mxu0 %v842
        %862 = vmatpush.msra.mxu0 %v841
        %863 = vmatpush.msra.mxu0 %v840
        %864 = vmatmul.f32.gmra.mxu0 %v812
        %v865 = vpop.f32.mrf.mxu0
        %v866 = vadd.f32 %v846, %v865
        %867 = vmatmul.f32.gmra.mxu0 %v815
        %v868 = vpop.f32.mrf.mxu0
        %v869 = vadd.f32 %v846, %v868
        %870 = vdwg.mxu0
        %vm871 = vcmask 64512
        %v873 = vsel %vm871, %v801, 0
        %v876 = vsel %vm871, %v835, 0
        %v879 = vsel %vm871, %v838, 0
        %881 = vmatpush.xpose.msra.mxu0 0.0
        %882 = vmatpush.xpose.msra.mxu0 0.0
        %883 = vmatpush.xpose.msra.mxu0 0.0
        %884 = vmatpush.xpose.msra.mxu0 0.0
        %885 = vmatpush.xpose.msra.mxu0 0.0
        %886 = vmatpush.xpose.msra.mxu0 0.0
        %887 = vmatpush.xpose.msra.mxu0 0.0
        %888 = vmatpush.xpose.msra.mxu0 0.0
        %889 = vmatpush.xpose.msra.mxu0 0.0
        %890 = vmatpush.xpose.msra.mxu0 0.0
        %891 = vmatpush.xpose.msra.mxu0 0.0
        %892 = vmatpush.xpose.msra.mxu0 0.0
        %893 = vmatpush.xpose.msra.mxu0 0.0
        %894 = vmatpush.xpose.msra.mxu0 0.0
        %895 = vmatpush.xpose.msra.mxu0 %v879
        %896 = vmatpush.xpose.msra.mxu0 %v876
        %897 = vmatmul.f32.gmra.mxu0 %v873
        %v898 = vpop.f32.mrf.mxu0
        %v899 = vadd.f32 0.0, %v898
        %900 = vdwg.mxu0
        %vm901 = vcmask 130048
        %v902 = vsel %vm901, %v899, -inf
        %903 = vmax.xlane.f32.xlu0 %v902
        %v904 = vpop.xlane.xlu0 %903
        %v905 = vsub.f32 %v899, %v904
        %v906 = vmul.f32 %v905, 1.442695
        %v907 = vpow.pop %v906
        %v908 = vsel %vm901, %v907, 0.0
        %909 = vadd.xlane.f32.xlu0 %v908
        %v910 = vpop.xlane.xlu0 %909
        %v911 = vrcp.pop %v910
        %v912 = vmul.f32 %v910, %v911
        %v913 = vsub.f32 1.0, %v912
        %v914 = vmul.f32 %v911, %v913
        %v915 = vadd.f32 %v911, %v914
        %vm916 = vweird.f32 %v910
        %vm917 = vweird.f32 %v911
        %vm918 = vmor %vm916, %vm917
        %v919 = vsel %vm918, %v911, %v915
        %v920 = vand.u32 2147483647, %v910
        %vm921 = vcmp.eq.f32.partialorder %v920, 8.507059e+37
        %v922 = vand.u32 %v910, 2147483648
        %v923 = vor.u32 1.1754944e-38, %v922
        %v924 = vsel %vm921, %v923, %v919
        %v925 = vmul.f32 %v907, %v924
        %v927 = vsel %vm901, %v925, 0
        %929 = vmatpush.msra.mxu0 0.0
        %930 = vmatpush.msra.mxu0 0.0
        %931 = vmatpush.msra.mxu0 0.0
        %932 = vmatpush.msra.mxu0 0.0
        %933 = vmatpush.msra.mxu0 0.0
        %934 = vmatpush.msra.mxu0 0.0
        %935 = vmatpush.msra.mxu0 0.0
        %936 = vmatpush.msra.mxu0 0.0
        %937 = vmatpush.msra.mxu0 0.0
        %938 = vmatpush.msra.mxu0 0.0
        %939 = vmatpush.msra.mxu0 0.0
        %940 = vmatpush.msra.mxu0 0.0
        %941 = vmatpush.msra.mxu0 0.0
        %942 = vmatpush.msra.mxu0 0.0
        %943 = vmatpush.msra.mxu0 %v869
        %944 = vmatpush.msra.mxu0 %v866
        %945 = vmatmul.f32.gmra.mxu0 %v927
        %v946 = vpop.f32.mrf.mxu0
        %v947 = vadd.f32 0.0, %v946
        %948 = vdwg.mxu0
        %949 = vst.msk [vmem:[#allocation2] sm:$0xff] %vm871, %v947
        %950 = vrot.lane.b32.xlu0 %v801, 120
        %v951 = vpop.permute.xlu0 %950
        %952 = vrot.lane.b32.xlu0 %v835, 120
        %v953 = vpop.permute.xlu0 %952
        %954 = vrot.lane.b32.xlu0 %v838, 120
        %v955 = vpop.permute.xlu0 %954
        %v956 = vsel %vm871, %v951, 0
        %v958 = vsel %vm871, %v953, 0
        %v960 = vsel %vm871, %v955, 0
        %962 = vmatpush.xpose.msra.mxu0 0.0
        %963 = vmatpush.xpose.msra.mxu0 0.0
        %964 = vmatpush.xpose.msra.mxu0 0.0
        %965 = vmatpush.xpose.msra.mxu0 0.0
        %966 = vmatpush.xpose.msra.mxu0 0.0
        %967 = vmatpush.xpose.msra.mxu0 0.0
        %968 = vmatpush.xpose.msra.mxu0 0.0
        %969 = vmatpush.xpose.msra.mxu0 0.0
        %970 = vmatpush.xpose.msra.mxu0 0.0
        %971 = vmatpush.xpose.msra.mxu0 0.0
        %972 = vmatpush.xpose.msra.mxu0 0.0
        %973 = vmatpush.xpose.msra.mxu0 0.0
        %974 = vmatpush.xpose.msra.mxu0 0.0
        %975 = vmatpush.xpose.msra.mxu0 0.0
        %976 = vmatpush.xpose.msra.mxu0 %v960
        %977 = vmatpush.xpose.msra.mxu0 %v958
        %978 = vmatmul.f32.gmra.mxu0 %v956
        %v979 = vpop.f32.mrf.mxu0
        %v980 = vadd.f32 0.0, %v979
        %981 = vdwg.mxu0
        %v982 = vsel %vm901, %v980, -inf
        %983 = vmax.xlane.f32.xlu0 %v982
        %v984 = vpop.xlane.xlu0 %983
        %v985 = vsub.f32 %v980, %v984
        %v986 = vmul.f32 %v985, 1.442695
        %v987 = vpow.pop %v986
        %v988 = vsel %vm901, %v987, 0.0
        %989 = vadd.xlane.f32.xlu0 %v988
        %v990 = vpop.xlane.xlu0 %989
        %v991 = vrcp.pop %v990
        %v992 = vmul.f32 %v990, %v991
        %v993 = vsub.f32 1.0, %v992
        %v994 = vmul.f32 %v991, %v993
        %v995 = vadd.f32 %v991, %v994
        %vm996 = vweird.f32 %v990
        %vm997 = vweird.f32 %v991
        %vm998 = vmor %vm996, %vm997
        %v999 = vsel %vm998, %v991, %v995
        %v1000 = vand.u32 2147483647, %v990
        %vm1001 = vcmp.eq.f32.partialorder %v1000, 8.507059e+37
        %v1002 = vand.u32 %v990, 2147483648
        %v1003 = vor.u32 1.1754944e-38, %v1002
        %v1004 = vsel %vm1001, %v1003, %v999
        %v1005 = vmul.f32 %v987, %v1004
        %1008 = vrot.lane.b32.xlu0 %v866, 120
        %v1009 = vpop.permute.xlu0 %1008
        %1010 = vrot.lane.b32.xlu0 %v869, 120
        %v1011 = vpop.permute.xlu0 %1010
        %v1015 = vsel %vm901, %v1005, 0
        %1017 = vmatpush.msra.mxu0 0.0
        %1018 = vmatpush.msra.mxu0 0.0
        %1019 = vmatpush.msra.mxu0 0.0
        %1020 = vmatpush.msra.mxu0 0.0
        %1021 = vmatpush.msra.mxu0 0.0
        %1022 = vmatpush.msra.mxu0 0.0
        %1023 = vmatpush.msra.mxu0 0.0
        %1024 = vmatpush.msra.mxu0 0.0
        %1025 = vmatpush.msra.mxu0 0.0
        %1026 = vmatpush.msra.mxu0 0.0
        %1027 = vmatpush.msra.mxu0 0.0
        %1028 = vmatpush.msra.mxu0 0.0
        %1029 = vmatpush.msra.mxu0 0.0
        %1030 = vmatpush.msra.mxu0 0.0
        %1031 = vmatpush.msra.mxu0 %v1011
        %1032 = vmatpush.msra.mxu0 %v1009
        %1033 = vmatmul.f32.gmra.mxu0 %v1015
        %v1034 = vpop.f32.mrf.mxu0
        %v1035 = vadd.f32 0.0, %v1034
        %1036 = vdwg.mxu0
        %s1037 = scalar_lea.vmem [#allocation2], 8
        %1038 = vst.msk [vmem:[%s1037] sm:$0xff] %vm871, %v1035
        %1039 = vrot.lane.b32.xlu0 %v801, 112
        %v1040 = vpop.permute.xlu0 %1039
        %1041 = vrot.lane.b32.xlu0 %v835, 112
        %v1042 = vpop.permute.xlu0 %1041
        %1043 = vrot.lane.b32.xlu0 %v838, 112
        %v1044 = vpop.permute.xlu0 %1043
        %v1045 = vsel %vm871, %v1040, 0
        %v1047 = vsel %vm871, %v1042, 0
        %v1049 = vsel %vm871, %v1044, 0
        %1051 = vmatpush.xpose.msra.mxu0 0.0
        %1052 = vmatpush.xpose.msra.mxu0 0.0
        %1053 = vmatpush.xpose.msra.mxu0 0.0
        %1054 = vmatpush.xpose.msra.mxu0 0.0
        %1055 = vmatpush.xpose.msra.mxu0 0.0
        %1056 = vmatpush.xpose.msra.mxu0 0.0
        %1057 = vmatpush.xpose.msra.mxu0 0.0
        %1058 = vmatpush.xpose.msra.mxu0 0.0
        %1059 = vmatpush.xpose.msra.mxu0 0.0
        %1060 = vmatpush.xpose.msra.mxu0 0.0
        %1061 = vmatpush.xpose.msra.mxu0 0.0
        %1062 = vmatpush.xpose.msra.mxu0 0.0
        %1063 = vmatpush.xpose.msra.mxu0 0.0
        %1064 = vmatpush.xpose.msra.mxu0 0.0
        %1065 = vmatpush.xpose.msra.mxu0 %v1049
        %1066 = vmatpush.xpose.msra.mxu0 %v1047
        %1067 = vmatmul.f32.gmra.mxu0 %v1045
        %v1068 = vpop.f32.mrf.mxu0
        %v1069 = vadd.f32 0.0, %v1068
        %1070 = vdwg.mxu0
        %v1071 = vsel %vm901, %v1069, -inf
        %1072 = vmax.xlane.f32.xlu0 %v1071
        %v1073 = vpop.xlane.xlu0 %1072
        %v1074 = vsub.f32 %v1069, %v1073
        %v1075 = vmul.f32 %v1074, 1.442695
        %v1076 = vpow.pop %v1075
        %v1077 = vsel %vm901, %v1076, 0.0
        %1078 = vadd.xlane.f32.xlu0 %v1077
        %v1079 = vpop.xlane.xlu0 %1078
        %v1080 = vrcp.pop %v1079
        %v1081 = vmul.f32 %v1079, %v1080
        %v1082 = vsub.f32 1.0, %v1081
        %v1083 = vmul.f32 %v1080, %v1082
        %v1084 = vadd.f32 %v1080, %v1083
        %vm1085 = vweird.f32 %v1079
        %vm1086 = vweird.f32 %v1080
        %vm1087 = vmor %vm1085, %vm1086
        %v1088 = vsel %vm1087, %v1080, %v1084
        %v1089 = vand.u32 2147483647, %v1079
        %vm1090 = vcmp.eq.f32.partialorder %v1089, 8.507059e+37
        %v1091 = vand.u32 %v1079, 2147483648
        %v1092 = vor.u32 1.1754944e-38, %v1091
        %v1093 = vsel %vm1090, %v1092, %v1088
        %v1094 = vmul.f32 %v1076, %v1093
        %1095 = vrot.lane.b32.xlu0 %v866, 112
        %v1096 = vpop.permute.xlu0 %1095
        %1097 = vrot.lane.b32.xlu0 %v869, 112
        %v1098 = vpop.permute.xlu0 %1097
        %v1102 = vsel %vm901, %v1094, 0
        %1104 = vmatpush.msra.mxu0 0.0
        %1105 = vmatpush.msra.mxu0 0.0
        %1106 = vmatpush.msra.mxu0 0.0
        %1107 = vmatpush.msra.mxu0 0.0
        %1108 = vmatpush.msra.mxu0 0.0
        %1109 = vmatpush.msra.mxu0 0.0
        %1110 = vmatpush.msra.mxu0 0.0
        %1111 = vmatpush.msra.mxu0 0.0
        %1112 = vmatpush.msra.mxu0 0.0
        %1113 = vmatpush.msra.mxu0 0.0
        %1114 = vmatpush.msra.mxu0 0.0
        %1115 = vmatpush.msra.mxu0 0.0
        %1116 = vmatpush.msra.mxu0 0.0
        %1117 = vmatpush.msra.mxu0 0.0
        %1118 = vmatpush.msra.mxu0 %v1098
        %1119 = vmatpush.msra.mxu0 %v1096
        %1120 = vmatmul.f32.gmra.mxu0 %v1102
        %v1121 = vpop.f32.mrf.mxu0
        %v1122 = vadd.f32 0.0, %v1121
        %1123 = vdwg.mxu0
        %s1124 = scalar_lea.vmem [#allocation2], 16
        %1125 = vst.msk [vmem:[%s1124] sm:$0xff] %vm871, %v1122
        %1126 = vrot.lane.b32.xlu0 %v801, 104
        %v1127 = vpop.permute.xlu0 %1126
        %1128 = vrot.lane.b32.xlu0 %v835, 104
        %v1129 = vpop.permute.xlu0 %1128
        %1130 = vrot.lane.b32.xlu0 %v838, 104
        %v1131 = vpop.permute.xlu0 %1130
        %v1132 = vsel %vm871, %v1127, 0
        %v1134 = vsel %vm871, %v1129, 0
        %v1136 = vsel %vm871, %v1131, 0
        %1138 = vmatpush.xpose.msra.mxu0 0.0
        %1139 = vmatpush.xpose.msra.mxu0 0.0
        %1140 = vmatpush.xpose.msra.mxu0 0.0
        %1141 = vmatpush.xpose.msra.mxu0 0.0
        %1142 = vmatpush.xpose.msra.mxu0 0.0
        %1143 = vmatpush.xpose.msra.mxu0 0.0
        %1144 = vmatpush.xpose.msra.mxu0 0.0
        %1145 = vmatpush.xpose.msra.mxu0 0.0
        %1146 = vmatpush.xpose.msra.mxu0 0.0
        %1147 = vmatpush.xpose.msra.mxu0 0.0
        %1148 = vmatpush.xpose.msra.mxu0 0.0
        %1149 = vmatpush.xpose.msra.mxu0 0.0
        %1150 = vmatpush.xpose.msra.mxu0 0.0
        %1151 = vmatpush.xpose.msra.mxu0 0.0
        %1152 = vmatpush.xpose.msra.mxu0 %v1136
        %1153 = vmatpush.xpose.msra.mxu0 %v1134
        %1154 = vmatmul.f32.gmra.mxu0 %v1132
        %v1155 = vpop.f32.mrf.mxu0
        %v1156 = vadd.f32 0.0, %v1155
        %1157 = vdwg.mxu0
        %v1158 = vsel %vm901, %v1156, -inf
        %1159 = vmax.xlane.f32.xlu0 %v1158
        %v1160 = vpop.xlane.xlu0 %1159
        %v1161 = vsub.f32 %v1156, %v1160
        %v1162 = vmul.f32 %v1161, 1.442695
        %v1163 = vpow.pop %v1162
        %v1164 = vsel %vm901, %v1163, 0.0
        %1165 = vadd.xlane.f32.xlu0 %v1164
        %v1166 = vpop.xlane.xlu0 %1165
        %v1167 = vrcp.pop %v1166
        %v1168 = vmul.f32 %v1166, %v1167
        %v1169 = vsub.f32 1.0, %v1168
        %v1170 = vmul.f32 %v1167, %v1169
        %v1171 = vadd.f32 %v1167, %v1170
        %vm1172 = vweird.f32 %v1166
        %vm1173 = vweird.f32 %v1167
        %vm1174 = vmor %vm1172, %vm1173
        %v1175 = vsel %vm1174, %v1167, %v1171
        %v1176 = vand.u32 2147483647, %v1166
        %vm1177 = vcmp.eq.f32.partialorder %v1176, 8.507059e+37
        %v1178 = vand.u32 %v1166, 2147483648
        %v1179 = vor.u32 1.1754944e-38, %v1178
        %v1180 = vsel %vm1177, %v1179, %v1175
        %v1181 = vmul.f32 %v1163, %v1180
        %1182 = vrot.lane.b32.xlu0 %v866, 104
        %v1183 = vpop.permute.xlu0 %1182
        %1184 = vrot.lane.b32.xlu0 %v869, 104
        %v1185 = vpop.permute.xlu0 %1184
        %v1189 = vsel %vm901, %v1181, 0
        %1191 = vmatpush.msra.mxu0 0.0
        %1192 = vmatpush.msra.mxu0 0.0
        %1193 = vmatpush.msra.mxu0 0.0
        %1194 = vmatpush.msra.mxu0 0.0
        %1195 = vmatpush.msra.mxu0 0.0
        %1196 = vmatpush.msra.mxu0 0.0
        %1197 = vmatpush.msra.mxu0 0.0
        %1198 = vmatpush.msra.mxu0 0.0
        %1199 = vmatpush.msra.mxu0 0.0
        %1200 = vmatpush.msra.mxu0 0.0
        %1201 = vmatpush.msra.mxu0 0.0
        %1202 = vmatpush.msra.mxu0 0.0
        %1203 = vmatpush.msra.mxu0 0.0
        %1204 = vmatpush.msra.mxu0 0.0
        %1205 = vmatpush.msra.mxu0 %v1185
        %1206 = vmatpush.msra.mxu0 %v1183
        %1207 = vmatmul.f32.gmra.mxu0 %v1189
        %v1208 = vpop.f32.mrf.mxu0
        %v1209 = vadd.f32 0.0, %v1208
        %1210 = vdwg.mxu0
        %s1211 = scalar_lea.vmem [#allocation2], 24
        %1212 = vst.msk [vmem:[%s1211] sm:$0xff] %vm871, %v1209
        %v1213 = vld [vmem:[#allocation2] sm:$0xff]
        %v1214 = vld [vmem:[#allocation2 + $0x8] sm:$0xff]
        %v1215 = vld [vmem:[#allocation2 + $0x10] sm:$0xff]
        %v1216 = vld [vmem:[#allocation2 + $0x18] sm:$0xff]
        %v1217 = vld [vmem:[#allocation9] sm:$0xff]
        %v1218 = vld [vmem:[#allocation9 + $0x8] sm:$0xff]
        %v1219 = vld [vmem:[#allocation9 + $0x10] sm:$0xff]
        %v1220 = vld [vmem:[#allocation9 + $0x18] sm:$0xff]
        %v1222 = vsel %vm871, %v1213, 0
        %1224 = vmatpush.msra.mxu0 0.0
        %1225 = vmatpush.msra.mxu0 0.0
        %1226 = vmatpush.msra.mxu0 0.0
        %1227 = vmatpush.msra.mxu0 0.0
        %1228 = vmatpush.msra.mxu0 0.0
        %1229 = vmatpush.msra.mxu0 0.0
        %1230 = vmatpush.msra.mxu0 0.0
        %1231 = vmatpush.msra.mxu0 0.0
        %1232 = vmatpush.msra.mxu0 0.0
        %1233 = vmatpush.msra.mxu0 0.0
        %1234 = vmatpush.msra.mxu0 0.0
        %1235 = vmatpush.msra.mxu0 0.0
        %1236 = vmatpush.msra.mxu0 0.0
        %1237 = vmatpush.msra.mxu0 0.0
        %1238 = vmatpush.msra.mxu0 0.0
        %1239 = vmatpush.msra.mxu0 %v1217
        %1240 = vmatmul.f32.gmra.mxu0 %v1222
        %v1241 = vpop.f32.mrf.mxu0
        %v1242 = vadd.f32 0.0, %v1241
        %1243 = vdwg.mxu0
        %v1245 = vsel %vm871, %v1214, 0
        %1247 = vmatpush.msra.mxu0 0.0
        %1248 = vmatpush.msra.mxu0 0.0
        %1249 = vmatpush.msra.mxu0 0.0
        %1250 = vmatpush.msra.mxu0 0.0
        %1251 = vmatpush.msra.mxu0 0.0
        %1252 = vmatpush.msra.mxu0 0.0
        %1253 = vmatpush.msra.mxu0 0.0
        %1254 = vmatpush.msra.mxu0 0.0
        %1255 = vmatpush.msra.mxu0 0.0
        %1256 = vmatpush.msra.mxu0 0.0
        %1257 = vmatpush.msra.mxu0 0.0
        %1258 = vmatpush.msra.mxu0 0.0
        %1259 = vmatpush.msra.mxu0 0.0
        %1260 = vmatpush.msra.mxu0 0.0
        %1261 = vmatpush.msra.mxu0 0.0
        %1262 = vmatpush.msra.mxu0 %v1218
        %1263 = vmatmul.f32.gmra.mxu0 %v1245
        %v1264 = vpop.f32.mrf.mxu0
        %v1265 = vadd.f32 0.0, %v1264
        %1266 = vdwg.mxu0
        %v1268 = vsel %vm871, %v1215, 0
        %1270 = vmatpush.msra.mxu0 0.0
        %1271 = vmatpush.msra.mxu0 0.0
        %1272 = vmatpush.msra.mxu0 0.0
        %1273 = vmatpush.msra.mxu0 0.0
        %1274 = vmatpush.msra.mxu0 0.0
        %1275 = vmatpush.msra.mxu0 0.0
        %1276 = vmatpush.msra.mxu0 0.0
        %1277 = vmatpush.msra.mxu0 0.0
        %1278 = vmatpush.msra.mxu0 0.0
        %1279 = vmatpush.msra.mxu0 0.0
        %1280 = vmatpush.msra.mxu0 0.0
        %1281 = vmatpush.msra.mxu0 0.0
        %1282 = vmatpush.msra.mxu0 0.0
        %1283 = vmatpush.msra.mxu0 0.0
        %1284 = vmatpush.msra.mxu0 0.0
        %1285 = vmatpush.msra.mxu0 %v1219
        %1286 = vmatmul.f32.gmra.mxu0 %v1268
        %v1287 = vpop.f32.mrf.mxu0
        %v1288 = vadd.f32 0.0, %v1287
        %1289 = vdwg.mxu0
        %v1291 = vsel %vm871, %v1216, 0
        %1293 = vmatpush.msra.mxu0 0.0
        %1294 = vmatpush.msra.mxu0 0.0
        %1295 = vmatpush.msra.mxu0 0.0
        %1296 = vmatpush.msra.mxu0 0.0
        %1297 = vmatpush.msra.mxu0 0.0
        %1298 = vmatpush.msra.mxu0 0.0
        %1299 = vmatpush.msra.mxu0 0.0
        %1300 = vmatpush.msra.mxu0 0.0
        %1301 = vmatpush.msra.mxu0 0.0
        %1302 = vmatpush.msra.mxu0 0.0
        %1303 = vmatpush.msra.mxu0 0.0
        %1304 = vmatpush.msra.mxu0 0.0
        %1305 = vmatpush.msra.mxu0 0.0
        %1306 = vmatpush.msra.mxu0 0.0
        %1307 = vmatpush.msra.mxu0 0.0
        %1308 = vmatpush.msra.mxu0 %v1220
        %1309 = vmatmul.f32.gmra.mxu0 %v1291
        %v1310 = vpop.f32.mrf.mxu0
        %v1311 = vadd.f32 0.0, %v1310
        %1312 = vdwg.mxu0
        %v1313 = vsel %vm732, %v1242, 0.0
        %v1314 = vsel %vm732, %v1265, 0.0
        %v1315 = vadd.f32 %v1313, %v1314
        %v1316 = vsel %vm732, %v1288, 0.0
        %v1317 = vadd.f32 %v1315, %v1316
        %v1318 = vsel %vm732, %v1311, 0.0
        %v1319 = vadd.f32 %v1317, %v1318
        %v1320 = vld [vmem:[%s9] sm:$0x1]
        %v1322 = vperm.slane %v1320, 0
        %v1324 = vadd.f32 %v1319, %v1322
        %v1325 = vadd.f32 %v769, %v1324
        %v1326 = vld [vmem:[%s16] sm:$0x1]
        %v1327 = vld [vmem:[%s17] sm:$0x1]
        %v1328 = vsel %vm732, %v1325, 0.0
        %1329 = vadd.xlane.f32.xlu0 %v1328
        %v1330 = vpop.xlane.xlu0 %1329
        %v1331 = vmul.f32 %v1330, %v742
        %v1332 = vsub.f32 %v1325, %v1331
        %v1333 = vmul.f32 %v1332, %v1332
        %v1334 = vsel %vm732, %v1333, 0.0
        %1335 = vadd.xlane.f32.xlu0 %v1334
        %v1336 = vpop.xlane.xlu0 %1335
        %v1337 = vmul.f32 %v1336, %v742
        %v1338 = vadd.f32 %v1337, 1e-05
        %v1339 = vrsqrt.pop %v1338
        %v1340 = vmul.f32 %v1339, %v1338
        %v1341 = vmul.f32 %v1340, %v1339
        %v1342 = vmul.f32 0.5, %v1341
        %v1343 = vsub.f32 1.5, %v1342
        %v1344 = vmul.f32 %v1339, %v1343
        %vm1345 = vweird.f32 %v1338
        %vm1346 = vweird.f32 %v1339
        %vm1347 = vmor %vm1345, %vm1346
        %v1348 = vsel %vm1347, %v1339, %v1344
        %v1349 = vmul.f32 %v1332, %v1348
        %v1351 = vperm.slane %v1326, 0
        %v1353 = vmul.f32 %v1349, %v1351
        %v1355 = vperm.slane %v1327, 0
        %v1357 = vadd.f32 %v1353, %v1355
        %v1358 = vld [vmem:[#allocation11] sm:$0xff]
        %v1359 = vld [vmem:[#allocation11 + $0x8] sm:$0xff]
        %v1360 = vld [vmem:[#allocation11 + $0x10] sm:$0xff]
        %v1361 = vld [vmem:[#allocation11 + $0x18] sm:$0xff]
        %v1362 = vld [vmem:[%s11] sm:$0x1]
        %v1364 = vperm.slane %v1362, 0
        %v1367 = vsel %vm732, %v1357, 0
        %1369 = vmatpush.msra.mxu0 0.0
        %1370 = vmatpush.msra.mxu0 0.0
        %1371 = vmatpush.msra.mxu0 0.0
        %1372 = vmatpush.msra.mxu0 0.0
        %1373 = vmatpush.msra.mxu0 0.0
        %1374 = vmatpush.msra.mxu0 0.0
        %1375 = vmatpush.msra.mxu0 0.0
        %1376 = vmatpush.msra.mxu0 0.0
        %1377 = vmatpush.msra.mxu0 0.0
        %1378 = vmatpush.msra.mxu0 0.0
        %1379 = vmatpush.msra.mxu0 0.0
        %1380 = vmatpush.msra.mxu0 0.0
        %1381 = vmatpush.msra.mxu0 %v1361
        %1382 = vmatpush.msra.mxu0 %v1360
        %1383 = vmatpush.msra.mxu0 %v1359
        %1384 = vmatpush.msra.mxu0 %v1358
        %1385 = vmatmul.f32.gmra.mxu0 %v1367
        %v1386 = vpop.f32.mrf.mxu0
        %v1387 = vadd.f32 %v1364, %v1386
        %1388 = vdwg.mxu0
        %v1389 = vmax.f32 %v1387, 0.0
        %v1390 = vld [vmem:[%s12] sm:$0xff]
        %v1391 = vld [vmem:[%s12 + $0x8] sm:$0xff]
        %v1392 = vld [vmem:[%s12 + $0x10] sm:$0xff]
        %v1393 = vld [vmem:[%s12 + $0x18] sm:$0xff]
        %v1394 = vld [vmem:[%s12 + $0x20] sm:$0xff]
        %v1395 = vld [vmem:[%s12 + $0x28] sm:$0xff]
        %v1396 = vld [vmem:[%s12 + $0x30] sm:$0xff]
        %v1397 = vld [vmem:[%s12 + $0x38] sm:$0xff]
        %v1398 = vld [vmem:[%s13] sm:$0x1]
        %v1400 = vperm.slane %v1398, 0
        %vm1402 = vcmask 523264
        %v1404 = vsel %vm1402, %v1389, 0
        %1406 = vmatpush.msra.mxu0 0.0
        %1407 = vmatpush.msra.mxu0 0.0
        %1408 = vmatpush.msra.mxu0 0.0
        %1409 = vmatpush.msra.mxu0 0.0
        %1410 = vmatpush.msra.mxu0 0.0
        %1411 = vmatpush.msra.mxu0 0.0
        %1412 = vmatpush.msra.mxu0 0.0
        %1413 = vmatpush.msra.mxu0 0.0
        %1414 = vmatpush.msra.mxu0 %v1397
        %1415 = vmatpush.msra.mxu0 %v1396
        %1416 = vmatpush.msra.mxu0 %v1395
        %1417 = vmatpush.msra.mxu0 %v1394
        %1418 = vmatpush.msra.mxu0 %v1393
        %1419 = vmatpush.msra.mxu0 %v1392
        %1420 = vmatpush.msra.mxu0 %v1391
        %1421 = vmatpush.msra.mxu0 %v1390
        %1422 = vmatmul.f32.gmra.mxu0 %v1404
        %v1423 = vpop.f32.mrf.mxu0
        %v1424 = vadd.f32 %v1400, %v1423
        %1425 = vdwg.mxu0
        %v1426 = vadd.f32 %v1357, %v1424
        %v1427 = vld [vmem:[%s18] sm:$0x1]
        %v1428 = vld [vmem:[%s19] sm:$0x1]
        %v1429 = vsel %vm732, %v1426, 0.0
        %1430 = vadd.xlane.f32.xlu0 %v1429
        %v1431 = vpop.xlane.xlu0 %1430
        %v1432 = vmul.f32 %v1431, %v742
        %v1433 = vsub.f32 %v1426, %v1432
        %v1434 = vmul.f32 %v1433, %v1433
        %v1435 = vsel %vm732, %v1434, 0.0
        %1436 = vadd.xlane.f32.xlu0 %v1435
        %v1437 = vpop.xlane.xlu0 %1436
        %v1438 = vmul.f32 %v1437, %v742
        %v1439 = vadd.f32 %v1438, 1e-05
        %v1440 = vrsqrt.pop %v1439
        %v1441 = vmul.f32 %v1440, %v1439
        %v1442 = vmul.f32 %v1441, %v1440
        %v1443 = vmul.f32 0.5, %v1442
        %v1444 = vsub.f32 1.5, %v1443
        %v1445 = vmul.f32 %v1440, %v1444
        %vm1446 = vweird.f32 %v1439
        %vm1447 = vweird.f32 %v1440
        %vm1448 = vmor %vm1446, %vm1447
        %v1449 = vsel %vm1448, %v1440, %v1445
        %v1450 = vmul.f32 %v1433, %v1449
        %v1452 = vperm.slane %v1427, 0
        %v1454 = vmul.f32 %v1450, %v1452
        %v1456 = vperm.slane %v1428, 0
        %v1458 = vadd.f32 %v1454, %v1456
        %1459 = vst.msk [vmem:[%s718] sm:$0xff] %vm732, %v1458
        %s1460 = sand.u32 %s475, 1
        %s1461 = scalar_lea.sflag [#allocation5], %s1460
        %s1462 = sand.u32 %s475, 1
        %s1463 = smul.addr %s1462, 8
        %s1464 = scalar_lea.vmem [#allocation12], %s1463
        // Predicated region
        $region121: #{tpu_custom_call.1} parent=99 // pred_check
          %p1465 = pneg %p485
        $region122: #{tpu_custom_call.1} parent=99 // pred_check_branch
          %1467 = sbr.rel (%p1465) target = $region124
        $region123: #{tpu_custom_call.1} parent=99 // pred_region
          %1469 = vsyncadd %s1461, 0
          %s1470 = smul.addr %s37, 8
          %s1471 = scalar_lea.hbm %s20, %s1470
          %s1473 = sshll.u32 %s1464, 4
          %s1474 = int_to_ptr.vmem [resolvable:$true] %s1473
          %s1475 = sshll.u32 %s1471, 4
          %s1476 = int_to_ptr.hbm [resolvable:$true] %s1475
          %1478 = dma.vmem_to_hbm [thread:$0]  %s1474, 128, %s1476, %s1461
        $region124: #{tpu_custom_call.1} parent=99 // pred_fallthru
          _
      $region100: #{tpu_custom_call.1} parent=5 // pred_fallthru
        _
      %p1479 = scmp.le.s32.totalorder 2, %s32
      // Predicated region
      $region125: #{tpu_custom_call.1} parent=5 // pred_check
        %p1480 = pneg %p1479
      $region126: #{tpu_custom_call.1} parent=5 // pred_check_branch
        %1482 = sbr.rel (%p1480) target = $region128
      $region127: #{tpu_custom_call.1} parent=5 // pred_region
        %s1483 = ssub.s32 %s32, 2
        // Predicated region
        $region129: #{tpu_custom_call.1} parent=127 // pred_check
          %p1484 = pneg %p491
        $region130: #{tpu_custom_call.1} parent=127 // pred_check_branch
          %1486 = sbr.rel (%p1484) target = $region132
        $region131: #{tpu_custom_call.1} parent=127 // pred_region
          %s1487 = sand.u32 %s476, 1
          %s1488 = scalar_lea.sflag [#allocation5], %s1487
          %s1489 = sand.u32 %s476, 1
          %s1490 = smul.addr %s1489, 8
          %s1491 = scalar_lea.vmem [#allocation12], %s1490
          %1493 = dma.done %s1488, 128
        $region132: #{tpu_custom_call.1} parent=127 // pred_fallthru
          _
      $region128: #{tpu_custom_call.1} parent=5 // pred_fallthru
        _
    $region6: #{tpu_custom_call.1} parent=1 // loop_footer
      %s36 = sadd.s32 1, %s32
    $region7: #{tpu_custom_call.1} parent=1 // loop_footer_branch
      %31 = sbr.rel target = $region3
    $region8: #{tpu_custom_call.1} parent=1 // loop_exit
      _
    %1494 = vsyncpa [#allocation4], 1
    %s1495 = scalar_lea.sflag [#allocation4], 1
    %1496 = vsyncpa %s1495, 1
    %1497 = vsyncpa [#allocation7], 1
    %1498 = vsyncpa [#allocation10], 1
    %1499 = vsyncpa [#allocation5], 1
    %s1500 = scalar_lea.sflag [#allocation5], 1
    %1501 = vsyncpa %s1500, 1

</llo_original>
